<compile_context>
chip_gen: v5e
topology: v5e:2x2
jax: 0.10.0
libtpu: 0.0.40
codegen_flags: <defaults>
</compile_context>

<pallas_src>
import functools

import jax
import jax.numpy as jnp
from jax import lax
from jax.experimental import pallas as pl
from jax.experimental.pallas import tpu as pltpu


# ---------------------------------------------------------------------------
# Fused Pallas kernel: whole Convnet forward for a block of B images
# ---------------------------------------------------------------------------
def _convnet_kernel(x_ref, w1_ref, w2_ref, w3_ref, w4_ref, b_ref, out_ref,
                    p1, p2, p3, p4, *, B, H, W, C):
    # x_ref:   (B, H, W*C)        input block, channels fused into lanes (w, c)
    # wK_ref:  (3, Wk*C, Wk*C)    banded, BN-folded conv weights (one per dy)
    # b_ref:   (4, W*C)           lane-tiled folded biases (row k for block k)
    # out_ref: (B, H//16, (W//16)*C)
    # pK:      (B, Hk+2, Wk*C)    VMEM scratch, rows 0 / Hk+1 are the zero pad

    bvals = b_ref[...]                                    # (4, W*C)

    def load_padded(pad_ref, val, Hk, WkC):
        # Zero only the 1-row top/bottom borders (the W-direction padding is
        # implicit in the banded weights).  Done every step so the kernel is
        # correct even when the batch grid is split across TensorCores.
        zrow = jnp.zeros((B, 1, WkC), jnp.float32)
        pad_ref[:, 0:1, :] = zrow
        pad_ref[:, Hk + 1:Hk + 2, :] = zrow
        pad_ref[:, 1:1 + Hk, :] = val

    def conv_pool(pad_ref, w_ref, k, Hk, Wk):
        WkC = Wk * C
        Wn = Wk // 2

        # 3x3 conv == 3 accumulating banded matmuls (one per kernel row dy).
        # M = B*Hk, K = N = Wk*C -> lane-dense on both MXU input and output.
        acc = None
        for dy in range(3):
            slab = pad_ref[:, dy:dy + Hk, :].reshape(B * Hk, WkC)
            part = jnp.dot(slab, w_ref[dy], preferred_element_type=jnp.float32)
            acc = part if acc is None else acc + part

        # Folded BN bias + ReLU (scale already folded into the weights).
        y = jnp.maximum(acc + bvals[k:k + 1, :WkC], 0.0)   # (B*Hk, Wk*C)

        # MaxPool2d(2): pool adjacent C-wide lane groups (W pairs) ...
        y = y.reshape(B * Hk, Wn, 2 * C)
        y = jnp.maximum(y[:, :, :C], y[:, :, C:])          # (B*Hk, Wn, C)
        # ... then adjacent rows (H pairs).
        y = y.reshape(B, Hk // 2, 2, Wn * C)
        y = jnp.maximum(y[:, :, 0, :], y[:, :, 1, :])      # (B, Hk//2, Wn*C)
        return y

    load_padded(p1, x_ref[...], H, W * C)
    a = conv_pool(p1, w1_ref, 0, H, W)
    load_padded(p2, a, H // 2, (W // 2) * C)
    a = conv_pool(p2, w2_ref, 1, H // 2, W // 2)
    load_padded(p3, a, H // 4, (W // 4) * C)
    a = conv_pool(p3, w3_ref, 2, H // 4, W // 4)
    load_padded(p4, a, H // 8, (W // 8) * C)
    a = conv_pool(p4, w4_ref, 3, H // 8, W // 8)

    out_ref[...] = a.astype(out_ref.dtype)                 # (B, H//16, (W//16)*C)


# ---------------------------------------------------------------------------
# Wrapper-side weight preparation
# ---------------------------------------------------------------------------
def _fold_banded(p, c, Wk):
    """Fold BN scale into the HWIO conv weights, zero-pad cin/cout to `c`, and
    build the 3 banded matmul matrices (one per kernel row dy), shape (Wk*c, Wk*c):
        A_dy[pw*c + ci, w*c + co] = K[dy, pw - w + 1, ci, co]   (0 if |pw - w| > 1)
    so that  out_row = sum_dy  x_pad_row(h+dy) @ A_dy  implements the 3x3 SAME
    conv on a (w, c)-fused lane layout, with W-direction zero padding built in.
    """
    w = (p["w"] * p["scale"]).astype(jnp.float32)          # scale over cout
    cin, cout = w.shape[2], w.shape[3]
    w = jnp.pad(w, ((0, 0), (0, 0), (0, c - cin), (0, c - cout)))
    bands = []
    for dy in range(3):
        A = jnp.zeros((Wk * c, Wk * c), jnp.float32)
        for dx in range(3):
            shift = jnp.eye(Wk, Wk, k=1 - dx, dtype=jnp.float32)
            A = A + jnp.kron(shift, w[dy, dx])
        bands.append(A)
    band = jnp.stack(bands)                                # (3, Wk*c, Wk*c)
    bias = jnp.pad(p["bias"].astype(jnp.float32), (0, c - cout))
    bias_tiled = jnp.tile(bias, Wk)                        # (Wk*c,) in (w, c) order
    return band, bias_tiled


def convnet_forward_pallas(x_nchw, params, batch_block=32):
    N, Cin, H, W = x_nchw.shape
    assert H % 16 == 0 and W % 16 == 0, "spatial dims must survive 4 maxpool(2) stages"

    couts = [int(p["w"].shape[3]) for p in params]
    C = max([8, Cin] + couts)
    C = (C + 7) // 8 * 8                                   # common (padded) channel count

    # Images per grid step.  Amortizes per-step pipeline overhead; cap keeps
    # per-step VMEM small (use roughly half of a v6e-tuned value on v7x).
    B = max(1, min(batch_block, N))
    Npad = -(-N // B) * B

    # NCHW -> (Npad, H, W*C): channels zero-padded to C, fused into the lane dim.
    x = jnp.transpose(x_nchw, (0, 2, 3, 1)).astype(jnp.float32)
    x = jnp.pad(x, ((0, Npad - N), (0, 0), (0, 0), (0, C - Cin)))
    x = x.reshape(Npad, H, W * C)

    Ws = [W, W // 2, W // 4, W // 8]
    folded = [_fold_banded(p, C, wk) for p, wk in zip(params, Ws)]
    bands = [f[0] for f in folded]
    b_all = jnp.stack([jnp.pad(f[1], (0, W * C - f[1].shape[0])) for f in folded])

    Hf, Wf = H // 16, W // 16
    kern = functools.partial(_convnet_kernel, B=B, H=H, W=W, C=C)

    out = pl.pallas_call(
        kern,
        out_shape=jax.ShapeDtypeStruct((Npad, Hf, Wf * C), jnp.float32),
        grid_spec=pltpu.PrefetchScalarGridSpec(
            num_scalar_prefetch=0,
            grid=(Npad // B,),
            in_specs=[
                pl.BlockSpec((B, H, W * C), lambda i: (i, 0, 0)),
                pl.BlockSpec(bands[0].shape, lambda i: (0, 0, 0)),
                pl.BlockSpec(bands[1].shape, lambda i: (0, 0, 0)),
                pl.BlockSpec(bands[2].shape, lambda i: (0, 0, 0)),
                pl.BlockSpec(bands[3].shape, lambda i: (0, 0, 0)),
                pl.BlockSpec(b_all.shape, lambda i: (0, 0)),
            ],
            out_specs=pl.BlockSpec((B, Hf, Wf * C), lambda i: (i, 0, 0)),
            scratch_shapes=[
                pltpu.VMEM((B, H + 2, W * C), jnp.float32),
                pltpu.VMEM((B, H // 2 + 2, (W // 2) * C), jnp.float32),
                pltpu.VMEM((B, H // 4 + 2, (W // 4) * C), jnp.float32),
                pltpu.VMEM((B, H // 8 + 2, (W // 8) * C), jnp.float32),
            ]),
        compiler_params=pltpu.CompilerParams(
            dimension_semantics=("parallel",)),
    )(x, bands[0], bands[1], bands[2], bands[3], b_all)

    # Drop batch/channel padding, restore torch's NCHW flatten order.
    out = out[:N].reshape(N, Hf, Wf, C)[..., :couts[-1]]
    out = jnp.transpose(out, (0, 3, 1, 2))                 # NHWC -> NCHW
    return out.reshape(N, -1)                              # == torch x.view(N, -1)


# ---------------------------------------------------------------------------
# Parameter construction (deterministic, synthetic) + BN folding
# ---------------------------------------------------------------------------
def make_block_params(key, cin, cout, eps=1e-5):
    kw, kb, kg, kbe, km, kv = jax.random.split(key, 6)
    w = 0.1 * jax.random.normal(kw, (3, 3, cin, cout), jnp.float32)   # HWIO
    conv_b = 0.1 * jax.random.normal(kb, (cout,), jnp.float32)
    gamma = 1.0 + 0.1 * jax.random.normal(kg, (cout,), jnp.float32)
    beta = 0.1 * jax.random.normal(kbe, (cout,), jnp.float32)
    run_mean = 0.1 * jax.random.normal(km, (cout,), jnp.float32)
    run_var = jax.random.uniform(kv, (cout,), jnp.float32, 0.5, 1.5)
    # BatchNorm (eval mode) folded with conv bias:
    #   y = gamma * (conv + b - mean) / sqrt(var + eps) + beta
    scale = gamma / jnp.sqrt(run_var + eps)
    bias = beta + (conv_b - run_mean) * scale
    return {"w": w, "scale": scale, "bias": bias}


# ---------------------------------------------------------------------------
# Pure-JAX reference (unfused, unfolded-into-weights) for correctness check
# ---------------------------------------------------------------------------
def convnet_forward_ref(x_nchw, params):
    x = jnp.transpose(x_nchw, (0, 2, 3, 1))
    for p in params:
        y = lax.conv_general_dilated(
            x, p["w"], window_strides=(1, 1), padding="SAME",
            dimension_numbers=("NHWC", "HWIO", "NHWC"))
        y = y * p["scale"] + p["bias"]
        y = jnp.maximum(y, 0.0)
        y = lax.reduce_window(y, -jnp.inf, lax.max,
                              (1, 2, 2, 1), (1, 2, 2, 1), "VALID")
        x = y
    x = jnp.transpose(x, (0, 3, 1, 2))
    return x.reshape(x.shape[0], -1)


if __name__ == "__main__":
    # Small shapes: batch=2, in_channels=3, hid=out channels=8, spatial=16x16.
    # Spatial halves each block: 16 -> 8 -> 4 -> 2 -> 1, so output is (2, 8).
    N, CIN, HID, COUT, HW = 2, 3, 8, 8, 16

    root = jax.random.PRNGKey(0)
    kx, k1, k2, k3, k4 = jax.random.split(root, 5)

    x = jax.random.normal(kx, (N, CIN, HW, HW), jnp.float32)
    params = [
        make_block_params(k1, CIN, HID),
        make_block_params(k2, HID, HID),
        make_block_params(k3, HID, HID),
        make_block_params(k4, HID, COUT),
    ]

    out = jax.block_until_ready(convnet_forward_pallas(x, params))
    ref = jax.block_until_ready(convnet_forward_ref(x, params))

    assert out.shape == (N, COUT * 1 * 1), f"unexpected output shape {out.shape}"
    if not jnp.allclose(out, ref, rtol=2e-4, atol=2e-4):
        raise AssertionError("Pallas Convnet output does not match JAX reference")

    print("KERNEL_OK")
</pallas_src>

<mosaic_0001>
module attributes {stable_mosaic.version = 11 : i64} {
  func.func @_convnet_kernel(%arg0: i32, %arg1: memref<2x16x128xf32, #tpu.memory_space<vmem>>, %arg2: memref<3x128x128xf32, #tpu.memory_space<vmem>>, %arg3: memref<3x64x64xf32, #tpu.memory_space<vmem>>, %arg4: memref<3x32x32xf32, #tpu.memory_space<vmem>>, %arg5: memref<3x16x16xf32, #tpu.memory_space<vmem>>, %arg6: memref<4x128xf32, #tpu.memory_space<vmem>>, %arg7: memref<2x1x8xf32, #tpu.memory_space<vmem>>, %arg8: memref<2x18x128xf32, #tpu.memory_space<vmem>>, %arg9: memref<2x10x64xf32, #tpu.memory_space<vmem>>, %arg10: memref<2x6x32xf32, #tpu.memory_space<vmem>>, %arg11: memref<2x4x16xf32, #tpu.memory_space<vmem>>) attributes {dimension_semantics = [#tpu.dimension_semantics<parallel>], iteration_bounds = array<i64: 1>, scalar_prefetch = 0 : i64, scratch_operands = 4 : i64, tpu.core_type = #tpu.core_type<tc>, window_params = [{transform_indices = @transform_0, window_bounds = array<i64: 2, 16, 128>}, {pipeline_mode = #tpu.pipeline_mode<synchronous>, transform_indices = @transform_1, window_bounds = array<i64: 3, 128, 128>}, {pipeline_mode = #tpu.pipeline_mode<synchronous>, transform_indices = @transform_2, window_bounds = array<i64: 3, 64, 64>}, {pipeline_mode = #tpu.pipeline_mode<synchronous>, transform_indices = @transform_3, window_bounds = array<i64: 3, 32, 32>}, {pipeline_mode = #tpu.pipeline_mode<synchronous>, transform_indices = @transform_4, window_bounds = array<i64: 3, 16, 16>}, {pipeline_mode = #tpu.pipeline_mode<synchronous>, transform_indices = @transform_5, window_bounds = array<i64: 4, 128>}, {transform_indices = @transform_6, window_bounds = array<i64: 2, 1, 8>}]} {
    %c0 = arith.constant 0 : index
    %c0_0 = arith.constant 0 : index
    %0 = vector.load %arg6[%c0, %c0_0] : memref<4x128xf32, #tpu.memory_space<vmem>>, vector<4x128xf32>
    %c0_1 = arith.constant 0 : index
    %c0_2 = arith.constant 0 : index
    %c0_3 = arith.constant 0 : index
    %1 = vector.load %arg1[%c0_1, %c0_2, %c0_3] : memref<2x16x128xf32, #tpu.memory_space<vmem>>, vector<2x16x128xf32>
    %cst = arith.constant 0.000000e+00 : f32
    %2 = vector.broadcast %cst : f32 to vector<2x1x128xf32>
    %c0_4 = arith.constant 0 : index
    %c0_5 = arith.constant 0 : index
    %c0_6 = arith.constant 0 : index
    %3 = vector.load %arg8[%c0_4, %c0_5, %c0_6] : memref<2x18x128xf32, #tpu.memory_space<vmem>>, vector<2x1x128xf32>
    tpu.vector_store %arg8[%c0_4, %c0_5, %c0_6], %2 {strides = array<i32>} : memref<2x18x128xf32, #tpu.memory_space<vmem>>, vector<2x1x128xf32>,
    %c0_7 = arith.constant 0 : index
    %c17 = arith.constant 17 : index
    %c0_8 = arith.constant 0 : index
    %4 = vector.load %arg8[%c0_7, %c17, %c0_8] : memref<2x18x128xf32, #tpu.memory_space<vmem>>, vector<2x1x128xf32>
    tpu.vector_store %arg8[%c0_7, %c17, %c0_8], %2 {strides = array<i32>} : memref<2x18x128xf32, #tpu.memory_space<vmem>>, vector<2x1x128xf32>,
    %c0_9 = arith.constant 0 : index
    %c1 = arith.constant 1 : index
    %c0_10 = arith.constant 0 : index
    %5 = vector.load %arg8[%c0_9, %c1, %c0_10] : memref<2x18x128xf32, #tpu.memory_space<vmem>>, vector<2x16x128xf32>
    tpu.vector_store %arg8[%c0_9, %c1, %c0_10], %1 {strides = array<i32>} : memref<2x18x128xf32, #tpu.memory_space<vmem>>, vector<2x16x128xf32>,
    %c0_11 = arith.constant 0 : index
    %c0_12 = arith.constant 0 : index
    %c0_13 = arith.constant 0 : index
    %6 = vector.load %arg8[%c0_11, %c0_12, %c0_13] : memref<2x18x128xf32, #tpu.memory_space<vmem>>, vector<2x16x128xf32>
    %7 = vector.shape_cast %6 : vector<2x16x128xf32> to vector<32x128xf32>
    %c0_14 = arith.constant 0 : index
    %c0_15 = arith.constant 0 : index
    %c0_16 = arith.constant 0 : index
    %8 = vector.load %arg2[%c0_14, %c0_15, %c0_16] : memref<3x128x128xf32, #tpu.memory_space<vmem>>, vector<1x128x128xf32>
    %9 = vector.shape_cast %8 : vector<1x128x128xf32> to vector<128x128xf32>
    %cst_17 = arith.constant dense<0.000000e+00> : vector<32x128xf32>
    %10 = tpu.matmul %7, %9, %cst_17 {dimension_numbers = #tpu.dot_dimension_numbers<[1], [0], [0], [1], [0, 0, 1, 1], [], []>} : vector<32x128xf32>, vector<128x128xf32>, vector<32x128xf32> -> vector<32x128xf32>
    %c0_18 = arith.constant 0 : index
    %c1_19 = arith.constant 1 : index
    %c0_20 = arith.constant 0 : index
    %11 = vector.load %arg8[%c0_18, %c1_19, %c0_20] : memref<2x18x128xf32, #tpu.memory_space<vmem>>, vector<2x16x128xf32>
    %12 = vector.shape_cast %11 : vector<2x16x128xf32> to vector<32x128xf32>
    %c1_21 = arith.constant 1 : index
    %c0_22 = arith.constant 0 : index
    %c0_23 = arith.constant 0 : index
    %13 = vector.load %arg2[%c1_21, %c0_22, %c0_23] : memref<3x128x128xf32, #tpu.memory_space<vmem>>, vector<1x128x128xf32>
    %14 = vector.shape_cast %13 : vector<1x128x128xf32> to vector<128x128xf32>
    %cst_24 = arith.constant dense<0.000000e+00> : vector<32x128xf32>
    %15 = tpu.matmul %12, %14, %cst_24 {dimension_numbers = #tpu.dot_dimension_numbers<[1], [0], [0], [1], [0, 0, 1, 1], [], []>} : vector<32x128xf32>, vector<128x128xf32>, vector<32x128xf32> -> vector<32x128xf32>
    %16 = arith.addf %10, %15 : vector<32x128xf32>
    %c0_25 = arith.constant 0 : index
    %c2 = arith.constant 2 : index
    %c0_26 = arith.constant 0 : index
    %17 = vector.load %arg8[%c0_25, %c2, %c0_26] : memref<2x18x128xf32, #tpu.memory_space<vmem>>, vector<2x16x128xf32>
    %18 = vector.shape_cast %17 : vector<2x16x128xf32> to vector<32x128xf32>
    %c2_27 = arith.constant 2 : index
    %c0_28 = arith.constant 0 : index
    %c0_29 = arith.constant 0 : index
    %19 = vector.load %arg2[%c2_27, %c0_28, %c0_29] : memref<3x128x128xf32, #tpu.memory_space<vmem>>, vector<1x128x128xf32>
    %20 = vector.shape_cast %19 : vector<1x128x128xf32> to vector<128x128xf32>
    %cst_30 = arith.constant dense<0.000000e+00> : vector<32x128xf32>
    %21 = tpu.matmul %18, %20, %cst_30 {dimension_numbers = #tpu.dot_dimension_numbers<[1], [0], [0], [1], [0, 0, 1, 1], [], []>} : vector<32x128xf32>, vector<128x128xf32>, vector<32x128xf32> -> vector<32x128xf32>
    %22 = arith.addf %16, %21 : vector<32x128xf32>
    %23 = vector.extract_strided_slice %0 {offsets = [0, 0], sizes = [1, 128], strides = [1, 1]} : vector<4x128xf32> to vector<1x128xf32>
    %24 = vector.broadcast %23 : vector<1x128xf32> to vector<32x128xf32>
    %25 = arith.addf %22, %24 : vector<32x128xf32>
    %cst_31 = arith.constant 0.000000e+00 : f32
    %26 = vector.broadcast %cst_31 : f32 to vector<32x128xf32>
    %27 = arith.maximumf %25, %26 : vector<32x128xf32>
    %28 = vector.shape_cast %27 : vector<32x128xf32> to vector<32x8x16xf32>
    %29 = vector.extract_strided_slice %28 {offsets = [0, 0, 0], sizes = [32, 8, 8], strides = [1, 1, 1]} : vector<32x8x16xf32> to vector<32x8x8xf32>
    %30 = vector.extract_strided_slice %28 {offsets = [0, 0, 8], sizes = [32, 8, 8], strides = [1, 1, 1]} : vector<32x8x16xf32> to vector<32x8x8xf32>
    %31 = arith.maximumf %29, %30 : vector<32x8x8xf32>
    %32 = vector.shape_cast %31 : vector<32x8x8xf32> to vector<2x8x2x64xf32>
    %33 = vector.extract_strided_slice %32 {offsets = [0, 0, 0, 0], sizes = [2, 8, 1, 64], strides = [1, 1, 1, 1]} : vector<2x8x2x64xf32> to vector<2x8x1x64xf32>
    %34 = vector.shape_cast %33 : vector<2x8x1x64xf32> to vector<2x8x64xf32>
    %35 = vector.extract_strided_slice %32 {offsets = [0, 0, 1, 0], sizes = [2, 8, 1, 64], strides = [1, 1, 1, 1]} : vector<2x8x2x64xf32> to vector<2x8x1x64xf32>
    %36 = vector.shape_cast %35 : vector<2x8x1x64xf32> to vector<2x8x64xf32>
    %37 = arith.maximumf %34, %36 : vector<2x8x64xf32>
    %cst_32 = arith.constant 0.000000e+00 : f32
    %38 = vector.broadcast %cst_32 : f32 to vector<2x1x64xf32>
    %c0_33 = arith.constant 0 : index
    %c0_34 = arith.constant 0 : index
    %c0_35 = arith.constant 0 : index
    %39 = vector.load %arg9[%c0_33, %c0_34, %c0_35] : memref<2x10x64xf32, #tpu.memory_space<vmem>>, vector<2x1x64xf32>
    tpu.vector_store %arg9[%c0_33, %c0_34, %c0_35], %38 {strides = array<i32>} : memref<2x10x64xf32, #tpu.memory_space<vmem>>, vector<2x1x64xf32>,
    %c0_36 = arith.constant 0 : index
    %c9 = arith.constant 9 : index
    %c0_37 = arith.constant 0 : index
    %40 = vector.load %arg9[%c0_36, %c9, %c0_37] : memref<2x10x64xf32, #tpu.memory_space<vmem>>, vector<2x1x64xf32>
    tpu.vector_store %arg9[%c0_36, %c9, %c0_37], %38 {strides = array<i32>} : memref<2x10x64xf32, #tpu.memory_space<vmem>>, vector<2x1x64xf32>,
    %c0_38 = arith.constant 0 : index
    %c1_39 = arith.constant 1 : index
    %c0_40 = arith.constant 0 : index
    %41 = vector.load %arg9[%c0_38, %c1_39, %c0_40] : memref<2x10x64xf32, #tpu.memory_space<vmem>>, vector<2x8x64xf32>
    tpu.vector_store %arg9[%c0_38, %c1_39, %c0_40], %37 {strides = array<i32>} : memref<2x10x64xf32, #tpu.memory_space<vmem>>, vector<2x8x64xf32>,
    %c0_41 = arith.constant 0 : index
    %c0_42 = arith.constant 0 : index
    %c0_43 = arith.constant 0 : index
    %42 = vector.load %arg9[%c0_41, %c0_42, %c0_43] : memref<2x10x64xf32, #tpu.memory_space<vmem>>, vector<2x8x64xf32>
    %43 = vector.shape_cast %42 : vector<2x8x64xf32> to vector<16x64xf32>
    %c0_44 = arith.constant 0 : index
    %c0_45 = arith.constant 0 : index
    %c0_46 = arith.constant 0 : index
    %44 = vector.load %arg3[%c0_44, %c0_45, %c0_46] : memref<3x64x64xf32, #tpu.memory_space<vmem>>, vector<1x64x64xf32>
    %45 = vector.shape_cast %44 : vector<1x64x64xf32> to vector<64x64xf32>
    %cst_47 = arith.constant dense<0.000000e+00> : vector<16x64xf32>
    %46 = tpu.matmul %43, %45, %cst_47 {dimension_numbers = #tpu.dot_dimension_numbers<[1], [0], [0], [1], [0, 0, 1, 1], [], []>} : vector<16x64xf32>, vector<64x64xf32>, vector<16x64xf32> -> vector<16x64xf32>
    %c0_48 = arith.constant 0 : index
    %c1_49 = arith.constant 1 : index
    %c0_50 = arith.constant 0 : index
    %47 = vector.load %arg9[%c0_48, %c1_49, %c0_50] : memref<2x10x64xf32, #tpu.memory_space<vmem>>, vector<2x8x64xf32>
    %48 = vector.shape_cast %47 : vector<2x8x64xf32> to vector<16x64xf32>
    %c1_51 = arith.constant 1 : index
    %c0_52 = arith.constant 0 : index
    %c0_53 = arith.constant 0 : index
    %49 = vector.load %arg3[%c1_51, %c0_52, %c0_53] : memref<3x64x64xf32, #tpu.memory_space<vmem>>, vector<1x64x64xf32>
    %50 = vector.shape_cast %49 : vector<1x64x64xf32> to vector<64x64xf32>
    %cst_54 = arith.constant dense<0.000000e+00> : vector<16x64xf32>
    %51 = tpu.matmul %48, %50, %cst_54 {dimension_numbers = #tpu.dot_dimension_numbers<[1], [0], [0], [1], [0, 0, 1, 1], [], []>} : vector<16x64xf32>, vector<64x64xf32>, vector<16x64xf32> -> vector<16x64xf32>
    %52 = arith.addf %46, %51 : vector<16x64xf32>
    %c0_55 = arith.constant 0 : index
    %c2_56 = arith.constant 2 : index
    %c0_57 = arith.constant 0 : index
    %53 = vector.load %arg9[%c0_55, %c2_56, %c0_57] : memref<2x10x64xf32, #tpu.memory_space<vmem>>, vector<2x8x64xf32>
    %54 = vector.shape_cast %53 : vector<2x8x64xf32> to vector<16x64xf32>
    %c2_58 = arith.constant 2 : index
    %c0_59 = arith.constant 0 : index
    %c0_60 = arith.constant 0 : index
    %55 = vector.load %arg3[%c2_58, %c0_59, %c0_60] : memref<3x64x64xf32, #tpu.memory_space<vmem>>, vector<1x64x64xf32>
    %56 = vector.shape_cast %55 : vector<1x64x64xf32> to vector<64x64xf32>
    %cst_61 = arith.constant dense<0.000000e+00> : vector<16x64xf32>
    %57 = tpu.matmul %54, %56, %cst_61 {dimension_numbers = #tpu.dot_dimension_numbers<[1], [0], [0], [1], [0, 0, 1, 1], [], []>} : vector<16x64xf32>, vector<64x64xf32>, vector<16x64xf32> -> vector<16x64xf32>
    %58 = arith.addf %52, %57 : vector<16x64xf32>
    %59 = vector.extract_strided_slice %0 {offsets = [1, 0], sizes = [1, 64], strides = [1, 1]} : vector<4x128xf32> to vector<1x64xf32>
    %60 = vector.broadcast %59 : vector<1x64xf32> to vector<16x64xf32>
    %61 = arith.addf %58, %60 : vector<16x64xf32>
    %cst_62 = arith.constant 0.000000e+00 : f32
    %62 = vector.broadcast %cst_62 : f32 to vector<16x64xf32>
    %63 = arith.maximumf %61, %62 : vector<16x64xf32>
    %64 = vector.shape_cast %63 : vector<16x64xf32> to vector<16x4x16xf32>
    %65 = vector.extract_strided_slice %64 {offsets = [0, 0, 0], sizes = [16, 4, 8], strides = [1, 1, 1]} : vector<16x4x16xf32> to vector<16x4x8xf32>
    %66 = vector.extract_strided_slice %64 {offsets = [0, 0, 8], sizes = [16, 4, 8], strides = [1, 1, 1]} : vector<16x4x16xf32> to vector<16x4x8xf32>
    %67 = arith.maximumf %65, %66 : vector<16x4x8xf32>
    %68 = vector.shape_cast %67 : vector<16x4x8xf32> to vector<2x4x2x32xf32>
    %69 = vector.extract_strided_slice %68 {offsets = [0, 0, 0, 0], sizes = [2, 4, 1, 32], strides = [1, 1, 1, 1]} : vector<2x4x2x32xf32> to vector<2x4x1x32xf32>
    %70 = vector.shape_cast %69 : vector<2x4x1x32xf32> to vector<2x4x32xf32>
    %71 = vector.extract_strided_slice %68 {offsets = [0, 0, 1, 0], sizes = [2, 4, 1, 32], strides = [1, 1, 1, 1]} : vector<2x4x2x32xf32> to vector<2x4x1x32xf32>
    %72 = vector.shape_cast %71 : vector<2x4x1x32xf32> to vector<2x4x32xf32>
    %73 = arith.maximumf %70, %72 : vector<2x4x32xf32>
    %cst_63 = arith.constant 0.000000e+00 : f32
    %74 = vector.broadcast %cst_63 : f32 to vector<2x1x32xf32>
    %c0_64 = arith.constant 0 : index
    %c0_65 = arith.constant 0 : index
    %c0_66 = arith.constant 0 : index
    %75 = vector.load %arg10[%c0_64, %c0_65, %c0_66] : memref<2x6x32xf32, #tpu.memory_space<vmem>>, vector<2x1x32xf32>
    tpu.vector_store %arg10[%c0_64, %c0_65, %c0_66], %74 {strides = array<i32>} : memref<2x6x32xf32, #tpu.memory_space<vmem>>, vector<2x1x32xf32>,
    %c0_67 = arith.constant 0 : index
    %c5 = arith.constant 5 : index
    %c0_68 = arith.constant 0 : index
    %76 = vector.load %arg10[%c0_67, %c5, %c0_68] : memref<2x6x32xf32, #tpu.memory_space<vmem>>, vector<2x1x32xf32>
    tpu.vector_store %arg10[%c0_67, %c5, %c0_68], %74 {strides = array<i32>} : memref<2x6x32xf32, #tpu.memory_space<vmem>>, vector<2x1x32xf32>,
    %c0_69 = arith.constant 0 : index
    %c1_70 = arith.constant 1 : index
    %c0_71 = arith.constant 0 : index
    %77 = vector.load %arg10[%c0_69, %c1_70, %c0_71] : memref<2x6x32xf32, #tpu.memory_space<vmem>>, vector<2x4x32xf32>
    tpu.vector_store %arg10[%c0_69, %c1_70, %c0_71], %73 {strides = array<i32>} : memref<2x6x32xf32, #tpu.memory_space<vmem>>, vector<2x4x32xf32>,
    %c0_72 = arith.constant 0 : index
    %c0_73 = arith.constant 0 : index
    %c0_74 = arith.constant 0 : index
    %78 = vector.load %arg10[%c0_72, %c0_73, %c0_74] : memref<2x6x32xf32, #tpu.memory_space<vmem>>, vector<2x4x32xf32>
    %79 = vector.shape_cast %78 : vector<2x4x32xf32> to vector<8x32xf32>
    %c0_75 = arith.constant 0 : index
    %c0_76 = arith.constant 0 : index
    %c0_77 = arith.constant 0 : index
    %80 = vector.load %arg4[%c0_75, %c0_76, %c0_77] : memref<3x32x32xf32, #tpu.memory_space<vmem>>, vector<1x32x32xf32>
    %81 = vector.shape_cast %80 : vector<1x32x32xf32> to vector<32x32xf32>
    %cst_78 = arith.constant dense<0.000000e+00> : vector<8x32xf32>
    %82 = tpu.matmul %79, %81, %cst_78 {dimension_numbers = #tpu.dot_dimension_numbers<[1], [0], [0], [1], [0, 0, 1, 1], [], []>} : vector<8x32xf32>, vector<32x32xf32>, vector<8x32xf32> -> vector<8x32xf32>
    %c0_79 = arith.constant 0 : index
    %c1_80 = arith.constant 1 : index
    %c0_81 = arith.constant 0 : index
    %83 = vector.load %arg10[%c0_79, %c1_80, %c0_81] : memref<2x6x32xf32, #tpu.memory_space<vmem>>, vector<2x4x32xf32>
    %84 = vector.shape_cast %83 : vector<2x4x32xf32> to vector<8x32xf32>
    %c1_82 = arith.constant 1 : index
    %c0_83 = arith.constant 0 : index
    %c0_84 = arith.constant 0 : index
    %85 = vector.load %arg4[%c1_82, %c0_83, %c0_84] : memref<3x32x32xf32, #tpu.memory_space<vmem>>, vector<1x32x32xf32>
    %86 = vector.shape_cast %85 : vector<1x32x32xf32> to vector<32x32xf32>
    %cst_85 = arith.constant dense<0.000000e+00> : vector<8x32xf32>
    %87 = tpu.matmul %84, %86, %cst_85 {dimension_numbers = #tpu.dot_dimension_numbers<[1], [0], [0], [1], [0, 0, 1, 1], [], []>} : vector<8x32xf32>, vector<32x32xf32>, vector<8x32xf32> -> vector<8x32xf32>
    %88 = arith.addf %82, %87 : vector<8x32xf32>
    %c0_86 = arith.constant 0 : index
    %c2_87 = arith.constant 2 : index
    %c0_88 = arith.constant 0 : index
    %89 = vector.load %arg10[%c0_86, %c2_87, %c0_88] : memref<2x6x32xf32, #tpu.memory_space<vmem>>, vector<2x4x32xf32>
    %90 = vector.shape_cast %89 : vector<2x4x32xf32> to vector<8x32xf32>
    %c2_89 = arith.constant 2 : index
    %c0_90 = arith.constant 0 : index
    %c0_91 = arith.constant 0 : index
    %91 = vector.load %arg4[%c2_89, %c0_90, %c0_91] : memref<3x32x32xf32, #tpu.memory_space<vmem>>, vector<1x32x32xf32>
    %92 = vector.shape_cast %91 : vector<1x32x32xf32> to vector<32x32xf32>
    %cst_92 = arith.constant dense<0.000000e+00> : vector<8x32xf32>
    %93 = tpu.matmul %90, %92, %cst_92 {dimension_numbers = #tpu.dot_dimension_numbers<[1], [0], [0], [1], [0, 0, 1, 1], [], []>} : vector<8x32xf32>, vector<32x32xf32>, vector<8x32xf32> -> vector<8x32xf32>
    %94 = arith.addf %88, %93 : vector<8x32xf32>
    %95 = vector.extract_strided_slice %0 {offsets = [2, 0], sizes = [1, 32], strides = [1, 1]} : vector<4x128xf32> to vector<1x32xf32>
    %96 = vector.broadcast %95 : vector<1x32xf32> to vector<8x32xf32>
    %97 = arith.addf %94, %96 : vector<8x32xf32>
    %cst_93 = arith.constant 0.000000e+00 : f32
    %98 = vector.broadcast %cst_93 : f32 to vector<8x32xf32>
    %99 = arith.maximumf %97, %98 : vector<8x32xf32>
    %100 = vector.shape_cast %99 : vector<8x32xf32> to vector<8x2x16xf32>
    %101 = vector.extract_strided_slice %100 {offsets = [0, 0, 0], sizes = [8, 2, 8], strides = [1, 1, 1]} : vector<8x2x16xf32> to vector<8x2x8xf32>
    %102 = vector.extract_strided_slice %100 {offsets = [0, 0, 8], sizes = [8, 2, 8], strides = [1, 1, 1]} : vector<8x2x16xf32> to vector<8x2x8xf32>
    %103 = arith.maximumf %101, %102 : vector<8x2x8xf32>
    %104 = vector.shape_cast %103 : vector<8x2x8xf32> to vector<2x2x2x16xf32>
    %105 = vector.extract_strided_slice %104 {offsets = [0, 0, 0, 0], sizes = [2, 2, 1, 16], strides = [1, 1, 1, 1]} : vector<2x2x2x16xf32> to vector<2x2x1x16xf32>
    %106 = vector.shape_cast %105 : vector<2x2x1x16xf32> to vector<2x2x16xf32>
    %107 = vector.extract_strided_slice %104 {offsets = [0, 0, 1, 0], sizes = [2, 2, 1, 16], strides = [1, 1, 1, 1]} : vector<2x2x2x16xf32> to vector<2x2x1x16xf32>
    %108 = vector.shape_cast %107 : vector<2x2x1x16xf32> to vector<2x2x16xf32>
    %109 = arith.maximumf %106, %108 : vector<2x2x16xf32>
    %cst_94 = arith.constant 0.000000e+00 : f32
    %110 = vector.broadcast %cst_94 : f32 to vector<2x1x16xf32>
    %c0_95 = arith.constant 0 : index
    %c0_96 = arith.constant 0 : index
    %c0_97 = arith.constant 0 : index
    %111 = vector.load %arg11[%c0_95, %c0_96, %c0_97] : memref<2x4x16xf32, #tpu.memory_space<vmem>>, vector<2x1x16xf32>
    tpu.vector_store %arg11[%c0_95, %c0_96, %c0_97], %110 {strides = array<i32>} : memref<2x4x16xf32, #tpu.memory_space<vmem>>, vector<2x1x16xf32>,
    %c0_98 = arith.constant 0 : index
    %c3 = arith.constant 3 : index
    %c0_99 = arith.constant 0 : index
    %112 = vector.load %arg11[%c0_98, %c3, %c0_99] : memref<2x4x16xf32, #tpu.memory_space<vmem>>, vector<2x1x16xf32>
    tpu.vector_store %arg11[%c0_98, %c3, %c0_99], %110 {strides = array<i32>} : memref<2x4x16xf32, #tpu.memory_space<vmem>>, vector<2x1x16xf32>,
    %c0_100 = arith.constant 0 : index
    %c1_101 = arith.constant 1 : index
    %c0_102 = arith.constant 0 : index
    %113 = vector.load %arg11[%c0_100, %c1_101, %c0_102] : memref<2x4x16xf32, #tpu.memory_space<vmem>>, vector<2x2x16xf32>
    tpu.vector_store %arg11[%c0_100, %c1_101, %c0_102], %109 {strides = array<i32>} : memref<2x4x16xf32, #tpu.memory_space<vmem>>, vector<2x2x16xf32>,
    %c0_103 = arith.constant 0 : index
    %c0_104 = arith.constant 0 : index
    %c0_105 = arith.constant 0 : index
    %114 = vector.load %arg11[%c0_103, %c0_104, %c0_105] : memref<2x4x16xf32, #tpu.memory_space<vmem>>, vector<2x2x16xf32>
    %115 = vector.shape_cast %114 : vector<2x2x16xf32> to vector<4x16xf32>
    %c0_106 = arith.constant 0 : index
    %c0_107 = arith.constant 0 : index
    %c0_108 = arith.constant 0 : index
    %116 = vector.load %arg5[%c0_106, %c0_107, %c0_108] : memref<3x16x16xf32, #tpu.memory_space<vmem>>, vector<1x16x16xf32>
    %117 = vector.shape_cast %116 : vector<1x16x16xf32> to vector<16x16xf32>
    %cst_109 = arith.constant dense<0.000000e+00> : vector<4x16xf32>
    %118 = tpu.matmul %115, %117, %cst_109 {dimension_numbers = #tpu.dot_dimension_numbers<[1], [0], [0], [1], [0, 0, 1, 1], [], []>} : vector<4x16xf32>, vector<16x16xf32>, vector<4x16xf32> -> vector<4x16xf32>
    %c0_110 = arith.constant 0 : index
    %c1_111 = arith.constant 1 : index
    %c0_112 = arith.constant 0 : index
    %119 = vector.load %arg11[%c0_110, %c1_111, %c0_112] : memref<2x4x16xf32, #tpu.memory_space<vmem>>, vector<2x2x16xf32>
    %120 = vector.shape_cast %119 : vector<2x2x16xf32> to vector<4x16xf32>
    %c1_113 = arith.constant 1 : index
    %c0_114 = arith.constant 0 : index
    %c0_115 = arith.constant 0 : index
    %121 = vector.load %arg5[%c1_113, %c0_114, %c0_115] : memref<3x16x16xf32, #tpu.memory_space<vmem>>, vector<1x16x16xf32>
    %122 = vector.shape_cast %121 : vector<1x16x16xf32> to vector<16x16xf32>
    %cst_116 = arith.constant dense<0.000000e+00> : vector<4x16xf32>
    %123 = tpu.matmul %120, %122, %cst_116 {dimension_numbers = #tpu.dot_dimension_numbers<[1], [0], [0], [1], [0, 0, 1, 1], [], []>} : vector<4x16xf32>, vector<16x16xf32>, vector<4x16xf32> -> vector<4x16xf32>
    %124 = arith.addf %118, %123 : vector<4x16xf32>
    %c0_117 = arith.constant 0 : index
    %c2_118 = arith.constant 2 : index
    %c0_119 = arith.constant 0 : index
    %125 = vector.load %arg11[%c0_117, %c2_118, %c0_119] : memref<2x4x16xf32, #tpu.memory_space<vmem>>, vector<2x2x16xf32>
    %126 = vector.shape_cast %125 : vector<2x2x16xf32> to vector<4x16xf32>
    %c2_120 = arith.constant 2 : index
    %c0_121 = arith.constant 0 : index
    %c0_122 = arith.constant 0 : index
    %127 = vector.load %arg5[%c2_120, %c0_121, %c0_122] : memref<3x16x16xf32, #tpu.memory_space<vmem>>, vector<1x16x16xf32>
    %128 = vector.shape_cast %127 : vector<1x16x16xf32> to vector<16x16xf32>
    %cst_123 = arith.constant dense<0.000000e+00> : vector<4x16xf32>
    %129 = tpu.matmul %126, %128, %cst_123 {dimension_numbers = #tpu.dot_dimension_numbers<[1], [0], [0], [1], [0, 0, 1, 1], [], []>} : vector<4x16xf32>, vector<16x16xf32>, vector<4x16xf32> -> vector<4x16xf32>
    %130 = arith.addf %124, %129 : vector<4x16xf32>
    %131 = vector.extract_strided_slice %0 {offsets = [3, 0], sizes = [1, 16], strides = [1, 1]} : vector<4x128xf32> to vector<1x16xf32>
    %132 = vector.broadcast %131 : vector<1x16xf32> to vector<4x16xf32>
    %133 = arith.addf %130, %132 : vector<4x16xf32>
    %cst_124 = arith.constant 0.000000e+00 : f32
    %134 = vector.broadcast %cst_124 : f32 to vector<4x16xf32>
    %135 = arith.maximumf %133, %134 : vector<4x16xf32>
    %136 = vector.shape_cast %135 : vector<4x16xf32> to vector<4x1x16xf32>
    %137 = vector.extract_strided_slice %136 {offsets = [0, 0, 0], sizes = [4, 1, 8], strides = [1, 1, 1]} : vector<4x1x16xf32> to vector<4x1x8xf32>
    %138 = vector.extract_strided_slice %136 {offsets = [0, 0, 8], sizes = [4, 1, 8], strides = [1, 1, 1]} : vector<4x1x16xf32> to vector<4x1x8xf32>
    %139 = arith.maximumf %137, %138 : vector<4x1x8xf32>
    %140 = vector.shape_cast %139 : vector<4x1x8xf32> to vector<2x1x2x8xf32>
    %141 = vector.extract_strided_slice %140 {offsets = [0, 0, 0, 0], sizes = [2, 1, 1, 8], strides = [1, 1, 1, 1]} : vector<2x1x2x8xf32> to vector<2x1x1x8xf32>
    %142 = vector.shape_cast %141 : vector<2x1x1x8xf32> to vector<2x1x8xf32>
    %143 = vector.extract_strided_slice %140 {offsets = [0, 0, 1, 0], sizes = [2, 1, 1, 8], strides = [1, 1, 1, 1]} : vector<2x1x2x8xf32> to vector<2x1x1x8xf32>
    %144 = vector.shape_cast %143 : vector<2x1x1x8xf32> to vector<2x1x8xf32>
    %145 = arith.maximumf %142, %144 : vector<2x1x8xf32>
    %c0_125 = arith.constant 0 : index
    %c0_126 = arith.constant 0 : index
    %c0_127 = arith.constant 0 : index
    %146 = vector.load %arg7[%c0_125, %c0_126, %c0_127] : memref<2x1x8xf32, #tpu.memory_space<vmem>>, vector<2x1x8xf32>
    tpu.vector_store %arg7[%c0_125, %c0_126, %c0_127], %145 {strides = array<i32>} : memref<2x1x8xf32, #tpu.memory_space<vmem>>, vector<2x1x8xf32>,
    return
  }
  func.func @transform_0(%arg0: i32) -> (i32, i32, i32) {
    %c0_i32 = arith.constant 0 : i32
    %c0_i32_0 = arith.constant 0 : i32
    %c0_i32_1 = arith.constant 0 : i32
    return %arg0, %c0_i32, %c0_i32_0 : i32, i32, i32
  }
  func.func @transform_1(%arg0: i32) -> (i32, i32, i32) {
    %c0_i32 = arith.constant 0 : i32
    %c0_i32_0 = arith.constant 0 : i32
    %c0_i32_1 = arith.constant 0 : i32
    %c0_i32_2 = arith.constant 0 : i32
    return %c0_i32, %c0_i32_0, %c0_i32_1 : i32, i32, i32
  }
  func.func @transform_2(%arg0: i32) -> (i32, i32, i32) {
    %c0_i32 = arith.constant 0 : i32
    %c0_i32_0 = arith.constant 0 : i32
    %c0_i32_1 = arith.constant 0 : i32
    %c0_i32_2 = arith.constant 0 : i32
    return %c0_i32, %c0_i32_0, %c0_i32_1 : i32, i32, i32
  }
  func.func @transform_3(%arg0: i32) -> (i32, i32, i32) {
    %c0_i32 = arith.constant 0 : i32
    %c0_i32_0 = arith.constant 0 : i32
    %c0_i32_1 = arith.constant 0 : i32
    %c0_i32_2 = arith.constant 0 : i32
    return %c0_i32, %c0_i32_0, %c0_i32_1 : i32, i32, i32
  }
  func.func @transform_4(%arg0: i32) -> (i32, i32, i32) {
    %c0_i32 = arith.constant 0 : i32
    %c0_i32_0 = arith.constant 0 : i32
    %c0_i32_1 = arith.constant 0 : i32
    %c0_i32_2 = arith.constant 0 : i32
    return %c0_i32, %c0_i32_0, %c0_i32_1 : i32, i32, i32
  }
  func.func @transform_5(%arg0: i32) -> (i32, i32) {
    %c0_i32 = arith.constant 0 : i32
    %c0_i32_0 = arith.constant 0 : i32
    %c0_i32_1 = arith.constant 0 : i32
    return %c0_i32, %c0_i32_0 : i32, i32
  }
  func.func @transform_6(%arg0: i32) -> (i32, i32, i32) {
    %c0_i32 = arith.constant 0 : i32
    %c0_i32_0 = arith.constant 0 : i32
    %c0_i32_1 = arith.constant 0 : i32
    return %arg0, %c0_i32, %c0_i32_0 : i32, i32, i32
  }
}

</mosaic_0001>

<llo_original>
// kernel: tpu_custom_call.1
$region0: #{tpu_custom_call.1}
  #allocation0 [shape = 'u32[]', space=smem, size = 0x4, offset = 0x4, fixed_abs, tag = 'smem constant byte address 0x4 - core index']
  #allocation1 [shape = 'u32[72,128]{1,0:T(1,128)}', space=vmem, size = 0x9000, scoped, tag = 'internal scratch']
  #allocation2 [shape = 'f32[2,18,128]{2,1,0:T(8,128)}', space=vmem, size = 0x6000, scoped, tag = 'scratch operand']
  #allocation3 [shape = 'f32[2,10,64]{2,1,0:T(8,128)}', space=vmem, size = 0x4000, scoped, tag = 'scratch operand']
  #allocation4 [shape = 'f32[2,6,32]{2,1,0:T(8,128)}', space=vmem, size = 0x2000, scoped, tag = 'scratch operand']
  #allocation5 [shape = 'f32[2,4,16]{2,1,0:T(4,128)}', space=vmem, size = 0x1000, scoped, tag = 'scratch operand']
  %s0 = inlined_call_operand.hbm [shape: f32[2,16,128], index: 0, kind: input, shape index: {}]
  %s1 = inlined_call_operand.hbm [shape: f32[3,128,128], index: 1, kind: input, shape index: {}]
  %s2 = inlined_call_operand.hbm [shape: f32[3,64,64], index: 2, kind: input, shape index: {}]
  %s3 = inlined_call_operand.hbm [shape: f32[3,32,32], index: 3, kind: input, shape index: {}]
  %s4 = inlined_call_operand.hbm [shape: f32[3,16,16], index: 4, kind: input, shape index: {}]
  %s5 = inlined_call_operand.vmem [shape: f32[4,128], index: 5, kind: input, shape index: {}]
  %s6 = inlined_call_operand.hbm [shape: f32[2,1,8], index: 6, kind: output, shape index: {}]
  %s7 = sld [smem:[#allocation0]]
  $region54: #{tpu_custom_call.1} parent=0
    _
  %s9 = ssub.s32 1, %s7
  %s10 = scalar_select 0, %s9, %s7
  $region1: #{tpu_custom_call.1} parent=0
    #allocation6 [shape = 'u8[16384]{0}', space=vmem, size = 0x4000, scoped, tag = 'input window, operand 0, single buffered']
    #allocation7 [shape = 's32[1]{0}', space=sflag, size = 0x4, scoped, tag = 'scoped memory for tpu_custom_call.1']
    #allocation8 [shape = 's32[1]{0}', space=sflag, size = 0x4, scoped, tag = 'scoped memory for tpu_custom_call.1']
    #allocation9 [shape = 'u8[196608]{0}', space=vmem, size = 0x30000, scoped, tag = 'input window, operand 1, single buffered']
    #allocation10 [shape = 's32[1]{0}', space=sflag, size = 0x4, scoped, tag = 'scoped memory for tpu_custom_call.1']
    #allocation11 [shape = 'u8[98304]{0}', space=vmem, size = 0x18000, scoped, tag = 'input window, operand 2, single buffered']
    #allocation12 [shape = 'u8[49152]{0}', space=vmem, size = 0xc000, scoped, tag = 'input window, operand 3, single buffered']
    #allocation13 [shape = 's32[1]{0}', space=sflag, size = 0x4, scoped, tag = 'scoped memory for tpu_custom_call.1']
    #allocation14 [shape = 'u8[24576]{0}', space=vmem, size = 0x6000, scoped, tag = 'input window, operand 4, single buffered']
    #allocation15 [shape = 'u8[1024]{0}', space=vmem, size = 0x400, scoped, tag = 'output window, operand 0, single buffered']
    %11 = vsyncpa [#allocation7], 0
    %12 = vsyncpa [#allocation10], 0
    %13 = vsyncpa [#allocation13], 0
    %14 = vsyncpa [#allocation8], 0
    // Predicated region
    $region2: #{tpu_custom_call.1} parent=1 // pred_check
      _
    $region3: #{tpu_custom_call.1} parent=1 // pred_check_branch
      %16 = sbr.rel (0) target = $region5
    $region4: #{tpu_custom_call.1} parent=1 // pred_region
      %18 = vsyncadd [#allocation7], 0
      %s19 = sshll.u32 %s0, 4
      %s20 = int_to_ptr.hbm [resolvable:$true] %s19
      %s21 = sshll.u32 [#allocation6], 4
      %s22 = int_to_ptr.vmem [resolvable:$true] %s21
      %27 = dma.hbm_to_vmem [thread:$0]  %s20, 512, %s22, [#allocation7], 128, 128, 8
    $region5: #{tpu_custom_call.1} parent=1 // pred_fallthru
      _
    // Predicated region
    $region6: #{tpu_custom_call.1} parent=1 // pred_check
      _
    $region7: #{tpu_custom_call.1} parent=1 // pred_check_branch
      %29 = sbr.rel (0) target = $region9
    $region8: #{tpu_custom_call.1} parent=1 // pred_region
      %31 = vsyncadd [#allocation10], 0
      %s32 = sshll.u32 %s1, 4
      %s33 = int_to_ptr.hbm [resolvable:$true] %s32
      %s34 = sshll.u32 [#allocation9], 4
      %s35 = int_to_ptr.vmem [resolvable:$true] %s34
      %40 = dma.hbm_to_vmem [thread:$0]  %s33, 6144, %s35, [#allocation10], 128, 128, 8
    $region9: #{tpu_custom_call.1} parent=1 // pred_fallthru
      _
    // Predicated region
    $region10: #{tpu_custom_call.1} parent=1 // pred_check
      _
    $region11: #{tpu_custom_call.1} parent=1 // pred_check_branch
      %42 = sbr.rel (0) target = $region13
    $region12: #{tpu_custom_call.1} parent=1 // pred_region
      %44 = vsyncadd [#allocation10], 0
      %s45 = sshll.u32 %s2, 4
      %s46 = int_to_ptr.hbm [resolvable:$true] %s45
      %s47 = sshll.u32 [#allocation11], 4
      %s48 = int_to_ptr.vmem [resolvable:$true] %s47
      %53 = dma.hbm_to_vmem [thread:$0]  %s46, 3072, %s48, [#allocation10], 128, 128, 8
    $region13: #{tpu_custom_call.1} parent=1 // pred_fallthru
      _
    // Predicated region
    $region14: #{tpu_custom_call.1} parent=1 // pred_check
      _
    $region15: #{tpu_custom_call.1} parent=1 // pred_check_branch
      %55 = sbr.rel (0) target = $region17
    $region16: #{tpu_custom_call.1} parent=1 // pred_region
      %57 = vsyncadd [#allocation13], 0
      %s58 = sshll.u32 %s3, 4
      %s59 = int_to_ptr.hbm [resolvable:$true] %s58
      %s60 = sshll.u32 [#allocation12], 4
      %s61 = int_to_ptr.vmem [resolvable:$true] %s60
      %66 = dma.hbm_to_vmem [thread:$0]  %s59, 1536, %s61, [#allocation13], 128, 128, 8
    $region17: #{tpu_custom_call.1} parent=1 // pred_fallthru
      _
    // Predicated region
    $region18: #{tpu_custom_call.1} parent=1 // pred_check
      _
    $region19: #{tpu_custom_call.1} parent=1 // pred_check_branch
      %68 = sbr.rel (0) target = $region21
    $region20: #{tpu_custom_call.1} parent=1 // pred_region
      %70 = vsyncadd [#allocation13], 0
      %s71 = sshll.u32 %s4, 4
      %s72 = int_to_ptr.hbm [resolvable:$true] %s71
      %s73 = sshll.u32 [#allocation14], 4
      %s74 = int_to_ptr.vmem [resolvable:$true] %s73
      %79 = dma.hbm_to_vmem [thread:$0]  %s72, 768, %s74, [#allocation13], 128, 128, 8
    $region21: #{tpu_custom_call.1} parent=1 // pred_fallthru
      _
    // Predicated region
    $region22: #{tpu_custom_call.1} parent=1 // pred_check
      _
    $region23: #{tpu_custom_call.1} parent=1 // pred_check_branch
      %81 = sbr.rel (0) target = $region25
    $region24: #{tpu_custom_call.1} parent=1 // pred_region
      _
    $region25: #{tpu_custom_call.1} parent=1 // pred_fallthru
      _
    // Predicated region
    $region26: #{tpu_custom_call.1} parent=1 // pred_check
      _
    $region27: #{tpu_custom_call.1} parent=1 // pred_check_branch
      %83 = sbr.rel (0) target = $region29
    $region28: #{tpu_custom_call.1} parent=1 // pred_region
      %85 = dma.done [#allocation7], 512
    $region29: #{tpu_custom_call.1} parent=1 // pred_fallthru
      _
    // Predicated region
    $region30: #{tpu_custom_call.1} parent=1 // pred_check
      _
    $region31: #{tpu_custom_call.1} parent=1 // pred_check_branch
      %87 = sbr.rel (0) target = $region33
    $region32: #{tpu_custom_call.1} parent=1 // pred_region
      %89 = dma.done [#allocation10], 6144
    $region33: #{tpu_custom_call.1} parent=1 // pred_fallthru
      _
    // Predicated region
    $region34: #{tpu_custom_call.1} parent=1 // pred_check
      _
    $region35: #{tpu_custom_call.1} parent=1 // pred_check_branch
      %91 = sbr.rel (0) target = $region37
    $region36: #{tpu_custom_call.1} parent=1 // pred_region
      %93 = dma.done [#allocation10], 3072
    $region37: #{tpu_custom_call.1} parent=1 // pred_fallthru
      _
    // Predicated region
    $region38: #{tpu_custom_call.1} parent=1 // pred_check
      _
    $region39: #{tpu_custom_call.1} parent=1 // pred_check_branch
      %95 = sbr.rel (0) target = $region41
    $region40: #{tpu_custom_call.1} parent=1 // pred_region
      %97 = dma.done [#allocation13], 1536
    $region41: #{tpu_custom_call.1} parent=1 // pred_fallthru
      _
    // Predicated region
    $region42: #{tpu_custom_call.1} parent=1 // pred_check
      _
    $region43: #{tpu_custom_call.1} parent=1 // pred_check_branch
      %99 = sbr.rel (0) target = $region45
    $region44: #{tpu_custom_call.1} parent=1 // pred_region
      %101 = dma.done [#allocation13], 768
    $region45: #{tpu_custom_call.1} parent=1 // pred_fallthru
      _
    %v102 = vld [vmem:[%s5] sm:$0xf]
    %v103 = vld [vmem:[#allocation6] sm:$0xff]
    %v104 = vld [vmem:[#allocation6 + $0x8] sm:$0xff]
    %v105 = vld [vmem:[#allocation6 + $0x10] sm:$0xff]
    %v106 = vld [vmem:[#allocation6 + $0x18] sm:$0xff]
    %107 = vst [vmem:[#allocation2] sm:$0x1] 0.0
    %108 = vst [vmem:[#allocation2 + $0x18] sm:$0x1] 0.0
    %109 = vst [vmem:[#allocation2 + $0x11] sm:$0x1] 0.0
    %110 = vst [vmem:[#allocation2 + $0x29] sm:$0x1] 0.0
    %111 = vst [vmem:[#allocation2 + $0x1] sm:$0xff] %v103
    %112 = vst [vmem:[#allocation2 + $0x9] sm:$0xff] %v104
    %113 = vst [vmem:[#allocation2 + $0x19] sm:$0xff] %v105
    %114 = vst [vmem:[#allocation2 + $0x21] sm:$0xff] %v106
    %v115 = vld [vmem:[#allocation2] sm:$0xff]
    %v116 = vld [vmem:[#allocation2 + $0x8] sm:$0xff]
    %v117 = vld [vmem:[#allocation2 + $0x18] sm:$0xff]
    %v118 = vld [vmem:[#allocation2 + $0x20] sm:$0xff]
    %v119 = vld [vmem:[#allocation9] sm:$0xff]
    %v120 = vld [vmem:[#allocation9 + $0x8] sm:$0xff]
    %v121 = vld [vmem:[#allocation9 + $0x10] sm:$0xff]
    %v122 = vld [vmem:[#allocation9 + $0x18] sm:$0xff]
    %v123 = vld [vmem:[#allocation9 + $0x20] sm:$0xff]
    %v124 = vld [vmem:[#allocation9 + $0x28] sm:$0xff]
    %v125 = vld [vmem:[#allocation9 + $0x30] sm:$0xff]
    %v126 = vld [vmem:[#allocation9 + $0x38] sm:$0xff]
    %v127 = vld [vmem:[#allocation9 + $0x40] sm:$0xff]
    %v128 = vld [vmem:[#allocation9 + $0x48] sm:$0xff]
    %v129 = vld [vmem:[#allocation9 + $0x50] sm:$0xff]
    %v130 = vld [vmem:[#allocation9 + $0x58] sm:$0xff]
    %v131 = vld [vmem:[#allocation9 + $0x60] sm:$0xff]
    %v132 = vld [vmem:[#allocation9 + $0x68] sm:$0xff]
    %v133 = vld [vmem:[#allocation9 + $0x70] sm:$0xff]
    %v134 = vld [vmem:[#allocation9 + $0x78] sm:$0xff]
    %v135 = vld [vmem:[#allocation2 + $0x1] sm:$0xff]
    %v136 = vld [vmem:[#allocation2 + $0x9] sm:$0xff]
    %v137 = vld [vmem:[#allocation2 + $0x19] sm:$0xff]
    %v138 = vld [vmem:[#allocation2 + $0x21] sm:$0xff]
    %s139 = scalar_lea.vmem [#allocation9], 128
    %v140 = vld [vmem:[%s139] sm:$0xff]
    %v141 = vld [vmem:[%s139 + $0x8] sm:$0xff]
    %v142 = vld [vmem:[%s139 + $0x10] sm:$0xff]
    %v143 = vld [vmem:[%s139 + $0x18] sm:$0xff]
    %v144 = vld [vmem:[%s139 + $0x20] sm:$0xff]
    %v145 = vld [vmem:[%s139 + $0x28] sm:$0xff]
    %v146 = vld [vmem:[%s139 + $0x30] sm:$0xff]
    %v147 = vld [vmem:[%s139 + $0x38] sm:$0xff]
    %v148 = vld [vmem:[%s139 + $0x40] sm:$0xff]
    %v149 = vld [vmem:[%s139 + $0x48] sm:$0xff]
    %v150 = vld [vmem:[%s139 + $0x50] sm:$0xff]
    %v151 = vld [vmem:[%s139 + $0x58] sm:$0xff]
    %v152 = vld [vmem:[%s139 + $0x60] sm:$0xff]
    %v153 = vld [vmem:[%s139 + $0x68] sm:$0xff]
    %v154 = vld [vmem:[%s139 + $0x70] sm:$0xff]
    %v155 = vld [vmem:[%s139 + $0x78] sm:$0xff]
    %156 = vmatpush.msra.mxu0 %v155
    %157 = vmatpush.msra.mxu0 %v154
    %158 = vmatpush.msra.mxu0 %v153
    %159 = vmatpush.msra.mxu0 %v152
    %160 = vmatpush.msra.mxu0 %v151
    %161 = vmatpush.msra.mxu0 %v150
    %162 = vmatpush.msra.mxu0 %v149
    %163 = vmatpush.msra.mxu0 %v148
    %164 = vmatpush.msra.mxu0 %v147
    %165 = vmatpush.msra.mxu0 %v146
    %166 = vmatpush.msra.mxu0 %v145
    %167 = vmatpush.msra.mxu0 %v144
    %168 = vmatpush.msra.mxu0 %v143
    %169 = vmatpush.msra.mxu0 %v142
    %170 = vmatpush.msra.mxu0 %v141
    %171 = vmatpush.msra.mxu0 %v140
    %172 = vmatmul.f32.gmra.mxu0 %v135
    %v173 = vpop.f32.mrf.mxu0
    %v174 = vadd.f32 0.0, %v173
    %175 = vmatmul.f32.gmra.mxu0 %v136
    %v176 = vpop.f32.mrf.mxu0
    %v177 = vadd.f32 0.0, %v176
    %178 = vmatmul.f32.gmra.mxu0 %v137
    %v179 = vpop.f32.mrf.mxu0
    %v180 = vadd.f32 0.0, %v179
    %181 = vmatmul.f32.gmra.mxu0 %v138
    %v182 = vpop.f32.mrf.mxu0
    %v183 = vadd.f32 0.0, %v182
    %184 = vdwg.mxu0
    %185 = vmatpush.msra.mxu0 %v134
    %186 = vmatpush.msra.mxu0 %v133
    %187 = vmatpush.msra.mxu0 %v132
    %188 = vmatpush.msra.mxu0 %v131
    %189 = vmatpush.msra.mxu0 %v130
    %190 = vmatpush.msra.mxu0 %v129
    %191 = vmatpush.msra.mxu0 %v128
    %192 = vmatpush.msra.mxu0 %v127
    %193 = vmatpush.msra.mxu0 %v126
    %194 = vmatpush.msra.mxu0 %v125
    %195 = vmatpush.msra.mxu0 %v124
    %196 = vmatpush.msra.mxu0 %v123
    %197 = vmatpush.msra.mxu0 %v122
    %198 = vmatpush.msra.mxu0 %v121
    %199 = vmatpush.msra.mxu0 %v120
    %200 = vmatpush.msra.mxu0 %v119
    %201 = vmatmul.f32.gmra.mxu0 %v115
    %v202 = vpop.f32.mrf.mxu0
    %v203 = vadd.f32 %v174, %v202
    %204 = vmatmul.f32.gmra.mxu0 %v116
    %v205 = vpop.f32.mrf.mxu0
    %v206 = vadd.f32 %v177, %v205
    %207 = vmatmul.f32.gmra.mxu0 %v117
    %v208 = vpop.f32.mrf.mxu0
    %v209 = vadd.f32 %v180, %v208
    %210 = vmatmul.f32.gmra.mxu0 %v118
    %v211 = vpop.f32.mrf.mxu0
    %v212 = vadd.f32 %v183, %v211
    %213 = vdwg.mxu0
    %v214 = vld [vmem:[#allocation2 + $0x2] sm:$0xff]
    %v215 = vld [vmem:[#allocation2 + $0xa] sm:$0xff]
    %v216 = vld [vmem:[#allocation2 + $0x1a] sm:$0xff]
    %v217 = vld [vmem:[#allocation2 + $0x22] sm:$0xff]
    %s218 = scalar_lea.vmem [#allocation9], 256
    %v219 = vld [vmem:[%s218] sm:$0xff]
    %v220 = vld [vmem:[%s218 + $0x8] sm:$0xff]
    %v221 = vld [vmem:[%s218 + $0x10] sm:$0xff]
    %v222 = vld [vmem:[%s218 + $0x18] sm:$0xff]
    %v223 = vld [vmem:[%s218 + $0x20] sm:$0xff]
    %v224 = vld [vmem:[%s218 + $0x28] sm:$0xff]
    %v225 = vld [vmem:[%s218 + $0x30] sm:$0xff]
    %v226 = vld [vmem:[%s218 + $0x38] sm:$0xff]
    %v227 = vld [vmem:[%s218 + $0x40] sm:$0xff]
    %v228 = vld [vmem:[%s218 + $0x48] sm:$0xff]
    %v229 = vld [vmem:[%s218 + $0x50] sm:$0xff]
    %v230 = vld [vmem:[%s218 + $0x58] sm:$0xff]
    %v231 = vld [vmem:[%s218 + $0x60] sm:$0xff]
    %v232 = vld [vmem:[%s218 + $0x68] sm:$0xff]
    %v233 = vld [vmem:[%s218 + $0x70] sm:$0xff]
    %v234 = vld [vmem:[%s218 + $0x78] sm:$0xff]
    %235 = vmatpush.msra.mxu0 %v234
    %236 = vmatpush.msra.mxu0 %v233
    %237 = vmatpush.msra.mxu0 %v232
    %238 = vmatpush.msra.mxu0 %v231
    %239 = vmatpush.msra.mxu0 %v230
    %240 = vmatpush.msra.mxu0 %v229
    %241 = vmatpush.msra.mxu0 %v228
    %242 = vmatpush.msra.mxu0 %v227
    %243 = vmatpush.msra.mxu0 %v226
    %244 = vmatpush.msra.mxu0 %v225
    %245 = vmatpush.msra.mxu0 %v224
    %246 = vmatpush.msra.mxu0 %v223
    %247 = vmatpush.msra.mxu0 %v222
    %248 = vmatpush.msra.mxu0 %v221
    %249 = vmatpush.msra.mxu0 %v220
    %250 = vmatpush.msra.mxu0 %v219
    %251 = vmatmul.f32.gmra.mxu0 %v214
    %v252 = vpop.f32.mrf.mxu0
    %v253 = vadd.f32 0.0, %v252
    %254 = vmatmul.f32.gmra.mxu0 %v215
    %v255 = vpop.f32.mrf.mxu0
    %v256 = vadd.f32 0.0, %v255
    %257 = vmatmul.f32.gmra.mxu0 %v216
    %v258 = vpop.f32.mrf.mxu0
    %v259 = vadd.f32 0.0, %v258
    %260 = vmatmul.f32.gmra.mxu0 %v217
    %v261 = vpop.f32.mrf.mxu0
    %v262 = vadd.f32 0.0, %v261
    %263 = vdwg.mxu0
    %v264 = vadd.f32 %v203, %v253
    %v265 = vadd.f32 %v206, %v256
    %v266 = vadd.f32 %v209, %v259
    %v267 = vadd.f32 %v212, %v262
    %v268 = vperm.slane %v102, 0
    %v269 = vadd.f32 %v264, %v268
    %v270 = vadd.f32 %v265, %v268
    %v271 = vadd.f32 %v266, %v268
    %v272 = vadd.f32 %v267, %v268
    %v273 = vmax.f32 %v269, 0.0
    %v274 = vmax.f32 %v270, 0.0
    %v275 = vmax.f32 %v271, 0.0
    %v276 = vmax.f32 %v272, 0.0
    %281 = vrot.lane.b32.xlu0 %v273, 112
    %v282 = vpop.permute.xlu0 %281
    %283 = vrot.lane.b32.xlu0 %v274, 112
    %v284 = vpop.permute.xlu0 %283
    %285 = vrot.lane.b32.xlu0 %v275, 112
    %v286 = vpop.permute.xlu0 %285
    %287 = vrot.lane.b32.xlu0 %v276, 112
    %v288 = vpop.permute.xlu0 %287
    %293 = vrot.lane.b32.xlu0 %v273, 96
    %v294 = vpop.permute.xlu0 %293
    %295 = vrot.lane.b32.xlu0 %v274, 96
    %v296 = vpop.permute.xlu0 %295
    %297 = vrot.lane.b32.xlu0 %v275, 96
    %v298 = vpop.permute.xlu0 %297
    %299 = vrot.lane.b32.xlu0 %v276, 96
    %v300 = vpop.permute.xlu0 %299
    %305 = vrot.lane.b32.xlu0 %v273, 80
    %v306 = vpop.permute.xlu0 %305
    %307 = vrot.lane.b32.xlu0 %v274, 80
    %v308 = vpop.permute.xlu0 %307
    %309 = vrot.lane.b32.xlu0 %v275, 80
    %v310 = vpop.permute.xlu0 %309
    %311 = vrot.lane.b32.xlu0 %v276, 80
    %v312 = vpop.permute.xlu0 %311
    %317 = vrot.lane.b32.xlu0 %v273, 64
    %v318 = vpop.permute.xlu0 %317
    %319 = vrot.lane.b32.xlu0 %v274, 64
    %v320 = vpop.permute.xlu0 %319
    %321 = vrot.lane.b32.xlu0 %v275, 64
    %v322 = vpop.permute.xlu0 %321
    %323 = vrot.lane.b32.xlu0 %v276, 64
    %v324 = vpop.permute.xlu0 %323
    %329 = vrot.lane.b32.xlu0 %v273, 48
    %v330 = vpop.permute.xlu0 %329
    %331 = vrot.lane.b32.xlu0 %v274, 48
    %v332 = vpop.permute.xlu0 %331
    %333 = vrot.lane.b32.xlu0 %v275, 48
    %v334 = vpop.permute.xlu0 %333
    %335 = vrot.lane.b32.xlu0 %v276, 48
    %v336 = vpop.permute.xlu0 %335
    %341 = vrot.lane.b32.xlu0 %v273, 32
    %v342 = vpop.permute.xlu0 %341
    %343 = vrot.lane.b32.xlu0 %v274, 32
    %v344 = vpop.permute.xlu0 %343
    %345 = vrot.lane.b32.xlu0 %v275, 32
    %v346 = vpop.permute.xlu0 %345
    %347 = vrot.lane.b32.xlu0 %v276, 32
    %v348 = vpop.permute.xlu0 %347
    %353 = vrot.lane.b32.xlu0 %v273, 16
    %v354 = vpop.permute.xlu0 %353
    %355 = vrot.lane.b32.xlu0 %v274, 16
    %v356 = vpop.permute.xlu0 %355
    %357 = vrot.lane.b32.xlu0 %v275, 16
    %v358 = vpop.permute.xlu0 %357
    %359 = vrot.lane.b32.xlu0 %v276, 16
    %v360 = vpop.permute.xlu0 %359
    %v365 = vrot.slane %v294, 4
    %vm366 = vcmask 1047556
    %v367 = vsel %vm366, %v365, %v273
    %v368 = vrot.slane %v273, 4
    %v369 = vsel %vm366, %v294, %v368
    %v371 = vunpack.c.l.s4 1983009808
    %v372 = vunpack.c.0.s8 %v371
    %v373 = vperm.slane %v367, %v372
    %v375 = vunpack.c.l.s4 1983009808
    %v376 = vunpack.c.0.s8 %v375
    %v377 = vperm.slane %v369, %v376
    %v378 = vrot.slane %v306, 4
    %v379 = vsel %vm366, %v378, %v282
    %v380 = vrot.slane %v282, 4
    %v381 = vsel %vm366, %v306, %v380
    %v383 = vunpack.c.l.s4 1983009808
    %v384 = vunpack.c.0.s8 %v383
    %v385 = vperm.slane %v379, %v384
    %v387 = vunpack.c.l.s4 1983009808
    %v388 = vunpack.c.0.s8 %v387
    %v389 = vperm.slane %v381, %v388
    %v390 = vrot.slane %v342, 4
    %v391 = vsel %vm366, %v390, %v318
    %v392 = vrot.slane %v318, 4
    %v393 = vsel %vm366, %v342, %v392
    %v395 = vunpack.c.l.s4 1983009808
    %v396 = vunpack.c.0.s8 %v395
    %v397 = vperm.slane %v391, %v396
    %v399 = vunpack.c.l.s4 1983009808
    %v400 = vunpack.c.0.s8 %v399
    %v401 = vperm.slane %v393, %v400
    %v402 = vrot.slane %v354, 4
    %v403 = vsel %vm366, %v402, %v330
    %v404 = vrot.slane %v330, 4
    %v405 = vsel %vm366, %v354, %v404
    %v407 = vunpack.c.l.s4 1983009808
    %v408 = vunpack.c.0.s8 %v407
    %v409 = vperm.slane %v403, %v408
    %v411 = vunpack.c.l.s4 1983009808
    %v412 = vunpack.c.0.s8 %v411
    %v413 = vperm.slane %v405, %v412
    %v414 = vrot.slane %v385, 4
    %v415 = vsel %vm366, %v414, %v373
    %v416 = vrot.slane %v373, 4
    %v417 = vsel %vm366, %v385, %v416
    %v419 = vunpack.c.l.s4 1934713408
    %v420 = vunpack.c.0.s8 %v419
    %v421 = vperm.slane %v415, %v420
    %v423 = vunpack.c.l.s4 1934713408
    %v424 = vunpack.c.0.s8 %v423
    %v425 = vperm.slane %v417, %v424
    %v426 = vrot.slane %v389, 4
    %v427 = vsel %vm366, %v426, %v377
    %v428 = vrot.slane %v377, 4
    %v429 = vsel %vm366, %v389, %v428
    %v431 = vunpack.c.l.s4 1934713408
    %v432 = vunpack.c.0.s8 %v431
    %v433 = vperm.slane %v427, %v432
    %v435 = vunpack.c.l.s4 1934713408
    %v436 = vunpack.c.0.s8 %v435
    %v437 = vperm.slane %v429, %v436
    %v438 = vrot.slane %v409, 4
    %v439 = vsel %vm366, %v438, %v397
    %v440 = vrot.slane %v397, 4
    %v441 = vsel %vm366, %v409, %v440
    %v443 = vunpack.c.l.s4 1934713408
    %v444 = vunpack.c.0.s8 %v443
    %v445 = vperm.slane %v439, %v444
    %v447 = vunpack.c.l.s4 1934713408
    %v448 = vunpack.c.0.s8 %v447
    %v449 = vperm.slane %v441, %v448
    %v450 = vrot.slane %v413, 4
    %v451 = vsel %vm366, %v450, %v401
    %v452 = vrot.slane %v401, 4
    %v453 = vsel %vm366, %v413, %v452
    %v455 = vunpack.c.l.s4 1934713408
    %v456 = vunpack.c.0.s8 %v455
    %v457 = vperm.slane %v451, %v456
    %v459 = vunpack.c.l.s4 1934713408
    %v460 = vunpack.c.0.s8 %v459
    %v461 = vperm.slane %v453, %v460
    %v462 = vrot.slane %v445, 4
    %v463 = vsel %vm366, %v462, %v421
    %v464 = vrot.slane %v421, 4
    %v465 = vsel %vm366, %v445, %v464
    %v466 = vrot.slane %v449, 4
    %v467 = vsel %vm366, %v466, %v425
    %v468 = vrot.slane %v425, 4
    %v469 = vsel %vm366, %v449, %v468
    %v470 = vrot.slane %v457, 4
    %v471 = vsel %vm366, %v470, %v433
    %v472 = vrot.slane %v433, 4
    %v473 = vsel %vm366, %v457, %v472
    %v474 = vrot.slane %v461, 4
    %v475 = vsel %vm366, %v474, %v437
    %v476 = vrot.slane %v437, 4
    %v477 = vsel %vm366, %v461, %v476
    %v478 = vrot.slane %v296, 4
    %v479 = vsel %vm366, %v478, %v274
    %v480 = vrot.slane %v274, 4
    %v481 = vsel %vm366, %v296, %v480
    %v483 = vunpack.c.l.s4 1983009808
    %v484 = vunpack.c.0.s8 %v483
    %v485 = vperm.slane %v479, %v484
    %v487 = vunpack.c.l.s4 1983009808
    %v488 = vunpack.c.0.s8 %v487
    %v489 = vperm.slane %v481, %v488
    %v490 = vrot.slane %v308, 4
    %v491 = vsel %vm366, %v490, %v284
    %v492 = vrot.slane %v284, 4
    %v493 = vsel %vm366, %v308, %v492
    %v495 = vunpack.c.l.s4 1983009808
    %v496 = vunpack.c.0.s8 %v495
    %v497 = vperm.slane %v491, %v496
    %v499 = vunpack.c.l.s4 1983009808
    %v500 = vunpack.c.0.s8 %v499
    %v501 = vperm.slane %v493, %v500
    %v502 = vrot.slane %v344, 4
    %v503 = vsel %vm366, %v502, %v320
    %v504 = vrot.slane %v320, 4
    %v505 = vsel %vm366, %v344, %v504
    %v507 = vunpack.c.l.s4 1983009808
    %v508 = vunpack.c.0.s8 %v507
    %v509 = vperm.slane %v503, %v508
    %v511 = vunpack.c.l.s4 1983009808
    %v512 = vunpack.c.0.s8 %v511
    %v513 = vperm.slane %v505, %v512
    %v514 = vrot.slane %v356, 4
    %v515 = vsel %vm366, %v514, %v332
    %v516 = vrot.slane %v332, 4
    %v517 = vsel %vm366, %v356, %v516
    %v519 = vunpack.c.l.s4 1983009808
    %v520 = vunpack.c.0.s8 %v519
    %v521 = vperm.slane %v515, %v520
    %v523 = vunpack.c.l.s4 1983009808
    %v524 = vunpack.c.0.s8 %v523
    %v525 = vperm.slane %v517, %v524
    %v526 = vrot.slane %v497, 4
    %v527 = vsel %vm366, %v526, %v485
    %v528 = vrot.slane %v485, 4
    %v529 = vsel %vm366, %v497, %v528
    %v531 = vunpack.c.l.s4 1934713408
    %v532 = vunpack.c.0.s8 %v531
    %v533 = vperm.slane %v527, %v532
    %v535 = vunpack.c.l.s4 1934713408
    %v536 = vunpack.c.0.s8 %v535
    %v537 = vperm.slane %v529, %v536
    %v538 = vrot.slane %v501, 4
    %v539 = vsel %vm366, %v538, %v489
    %v540 = vrot.slane %v489, 4
    %v541 = vsel %vm366, %v501, %v540
    %v543 = vunpack.c.l.s4 1934713408
    %v544 = vunpack.c.0.s8 %v543
    %v545 = vperm.slane %v539, %v544
    %v547 = vunpack.c.l.s4 1934713408
    %v548 = vunpack.c.0.s8 %v547
    %v549 = vperm.slane %v541, %v548
    %v550 = vrot.slane %v521, 4
    %v551 = vsel %vm366, %v550, %v509
    %v552 = vrot.slane %v509, 4
    %v553 = vsel %vm366, %v521, %v552
    %v555 = vunpack.c.l.s4 1934713408
    %v556 = vunpack.c.0.s8 %v555
    %v557 = vperm.slane %v551, %v556
    %v559 = vunpack.c.l.s4 1934713408
    %v560 = vunpack.c.0.s8 %v559
    %v561 = vperm.slane %v553, %v560
    %v562 = vrot.slane %v525, 4
    %v563 = vsel %vm366, %v562, %v513
    %v564 = vrot.slane %v513, 4
    %v565 = vsel %vm366, %v525, %v564
    %v567 = vunpack.c.l.s4 1934713408
    %v568 = vunpack.c.0.s8 %v567
    %v569 = vperm.slane %v563, %v568
    %v571 = vunpack.c.l.s4 1934713408
    %v572 = vunpack.c.0.s8 %v571
    %v573 = vperm.slane %v565, %v572
    %v574 = vrot.slane %v557, 4
    %v575 = vsel %vm366, %v574, %v533
    %v576 = vrot.slane %v533, 4
    %v577 = vsel %vm366, %v557, %v576
    %v578 = vrot.slane %v561, 4
    %v579 = vsel %vm366, %v578, %v537
    %v580 = vrot.slane %v537, 4
    %v581 = vsel %vm366, %v561, %v580
    %v582 = vrot.slane %v569, 4
    %v583 = vsel %vm366, %v582, %v545
    %v584 = vrot.slane %v545, 4
    %v585 = vsel %vm366, %v569, %v584
    %v586 = vrot.slane %v573, 4
    %v587 = vsel %vm366, %v586, %v549
    %v588 = vrot.slane %v549, 4
    %v589 = vsel %vm366, %v573, %v588
    %v590 = vrot.slane %v298, 4
    %v591 = vsel %vm366, %v590, %v275
    %v592 = vrot.slane %v275, 4
    %v593 = vsel %vm366, %v298, %v592
    %v595 = vunpack.c.l.s4 1983009808
    %v596 = vunpack.c.0.s8 %v595
    %v597 = vperm.slane %v591, %v596
    %v599 = vunpack.c.l.s4 1983009808
    %v600 = vunpack.c.0.s8 %v599
    %v601 = vperm.slane %v593, %v600
    %v602 = vrot.slane %v310, 4
    %v603 = vsel %vm366, %v602, %v286
    %v604 = vrot.slane %v286, 4
    %v605 = vsel %vm366, %v310, %v604
    %v607 = vunpack.c.l.s4 1983009808
    %v608 = vunpack.c.0.s8 %v607
    %v609 = vperm.slane %v603, %v608
    %v611 = vunpack.c.l.s4 1983009808
    %v612 = vunpack.c.0.s8 %v611
    %v613 = vperm.slane %v605, %v612
    %v614 = vrot.slane %v346, 4
    %v615 = vsel %vm366, %v614, %v322
    %v616 = vrot.slane %v322, 4
    %v617 = vsel %vm366, %v346, %v616
    %v619 = vunpack.c.l.s4 1983009808
    %v620 = vunpack.c.0.s8 %v619
    %v621 = vperm.slane %v615, %v620
    %v623 = vunpack.c.l.s4 1983009808
    %v624 = vunpack.c.0.s8 %v623
    %v625 = vperm.slane %v617, %v624
    %v626 = vrot.slane %v358, 4
    %v627 = vsel %vm366, %v626, %v334
    %v628 = vrot.slane %v334, 4
    %v629 = vsel %vm366, %v358, %v628
    %v631 = vunpack.c.l.s4 1983009808
    %v632 = vunpack.c.0.s8 %v631
    %v633 = vperm.slane %v627, %v632
    %v635 = vunpack.c.l.s4 1983009808
    %v636 = vunpack.c.0.s8 %v635
    %v637 = vperm.slane %v629, %v636
    %v638 = vrot.slane %v609, 4
    %v639 = vsel %vm366, %v638, %v597
    %v640 = vrot.slane %v597, 4
    %v641 = vsel %vm366, %v609, %v640
    %v643 = vunpack.c.l.s4 1934713408
    %v644 = vunpack.c.0.s8 %v643
    %v645 = vperm.slane %v639, %v644
    %v647 = vunpack.c.l.s4 1934713408
    %v648 = vunpack.c.0.s8 %v647
    %v649 = vperm.slane %v641, %v648
    %v650 = vrot.slane %v613, 4
    %v651 = vsel %vm366, %v650, %v601
    %v652 = vrot.slane %v601, 4
    %v653 = vsel %vm366, %v613, %v652
    %v655 = vunpack.c.l.s4 1934713408
    %v656 = vunpack.c.0.s8 %v655
    %v657 = vperm.slane %v651, %v656
    %v659 = vunpack.c.l.s4 1934713408
    %v660 = vunpack.c.0.s8 %v659
    %v661 = vperm.slane %v653, %v660
    %v662 = vrot.slane %v633, 4
    %v663 = vsel %vm366, %v662, %v621
    %v664 = vrot.slane %v621, 4
    %v665 = vsel %vm366, %v633, %v664
    %v667 = vunpack.c.l.s4 1934713408
    %v668 = vunpack.c.0.s8 %v667
    %v669 = vperm.slane %v663, %v668
    %v671 = vunpack.c.l.s4 1934713408
    %v672 = vunpack.c.0.s8 %v671
    %v673 = vperm.slane %v665, %v672
    %v674 = vrot.slane %v637, 4
    %v675 = vsel %vm366, %v674, %v625
    %v676 = vrot.slane %v625, 4
    %v677 = vsel %vm366, %v637, %v676
    %v679 = vunpack.c.l.s4 1934713408
    %v680 = vunpack.c.0.s8 %v679
    %v681 = vperm.slane %v675, %v680
    %v683 = vunpack.c.l.s4 1934713408
    %v684 = vunpack.c.0.s8 %v683
    %v685 = vperm.slane %v677, %v684
    %v686 = vrot.slane %v669, 4
    %v687 = vsel %vm366, %v686, %v645
    %v688 = vrot.slane %v645, 4
    %v689 = vsel %vm366, %v669, %v688
    %v690 = vrot.slane %v673, 4
    %v691 = vsel %vm366, %v690, %v649
    %v692 = vrot.slane %v649, 4
    %v693 = vsel %vm366, %v673, %v692
    %v694 = vrot.slane %v681, 4
    %v695 = vsel %vm366, %v694, %v657
    %v696 = vrot.slane %v657, 4
    %v697 = vsel %vm366, %v681, %v696
    %v698 = vrot.slane %v685, 4
    %v699 = vsel %vm366, %v698, %v661
    %v700 = vrot.slane %v661, 4
    %v701 = vsel %vm366, %v685, %v700
    %v702 = vrot.slane %v300, 4
    %v703 = vsel %vm366, %v702, %v276
    %v704 = vrot.slane %v276, 4
    %v705 = vsel %vm366, %v300, %v704
    %v707 = vunpack.c.l.s4 1983009808
    %v708 = vunpack.c.0.s8 %v707
    %v709 = vperm.slane %v703, %v708
    %v711 = vunpack.c.l.s4 1983009808
    %v712 = vunpack.c.0.s8 %v711
    %v713 = vperm.slane %v705, %v712
    %v714 = vrot.slane %v312, 4
    %v715 = vsel %vm366, %v714, %v288
    %v716 = vrot.slane %v288, 4
    %v717 = vsel %vm366, %v312, %v716
    %v719 = vunpack.c.l.s4 1983009808
    %v720 = vunpack.c.0.s8 %v719
    %v721 = vperm.slane %v715, %v720
    %v723 = vunpack.c.l.s4 1983009808
    %v724 = vunpack.c.0.s8 %v723
    %v725 = vperm.slane %v717, %v724
    %v726 = vrot.slane %v348, 4
    %v727 = vsel %vm366, %v726, %v324
    %v728 = vrot.slane %v324, 4
    %v729 = vsel %vm366, %v348, %v728
    %v731 = vunpack.c.l.s4 1983009808
    %v732 = vunpack.c.0.s8 %v731
    %v733 = vperm.slane %v727, %v732
    %v735 = vunpack.c.l.s4 1983009808
    %v736 = vunpack.c.0.s8 %v735
    %v737 = vperm.slane %v729, %v736
    %v738 = vrot.slane %v360, 4
    %v739 = vsel %vm366, %v738, %v336
    %v740 = vrot.slane %v336, 4
    %v741 = vsel %vm366, %v360, %v740
    %v743 = vunpack.c.l.s4 1983009808
    %v744 = vunpack.c.0.s8 %v743
    %v745 = vperm.slane %v739, %v744
    %v747 = vunpack.c.l.s4 1983009808
    %v748 = vunpack.c.0.s8 %v747
    %v749 = vperm.slane %v741, %v748
    %v750 = vrot.slane %v721, 4
    %v751 = vsel %vm366, %v750, %v709
    %v752 = vrot.slane %v709, 4
    %v753 = vsel %vm366, %v721, %v752
    %v755 = vunpack.c.l.s4 1934713408
    %v756 = vunpack.c.0.s8 %v755
    %v757 = vperm.slane %v751, %v756
    %v759 = vunpack.c.l.s4 1934713408
    %v760 = vunpack.c.0.s8 %v759
    %v761 = vperm.slane %v753, %v760
    %v762 = vrot.slane %v725, 4
    %v763 = vsel %vm366, %v762, %v713
    %v764 = vrot.slane %v713, 4
    %v765 = vsel %vm366, %v725, %v764
    %v767 = vunpack.c.l.s4 1934713408
    %v768 = vunpack.c.0.s8 %v767
    %v769 = vperm.slane %v763, %v768
    %v771 = vunpack.c.l.s4 1934713408
    %v772 = vunpack.c.0.s8 %v771
    %v773 = vperm.slane %v765, %v772
    %v774 = vrot.slane %v745, 4
    %v775 = vsel %vm366, %v774, %v733
    %v776 = vrot.slane %v733, 4
    %v777 = vsel %vm366, %v745, %v776
    %v779 = vunpack.c.l.s4 1934713408
    %v780 = vunpack.c.0.s8 %v779
    %v781 = vperm.slane %v775, %v780
    %v783 = vunpack.c.l.s4 1934713408
    %v784 = vunpack.c.0.s8 %v783
    %v785 = vperm.slane %v777, %v784
    %v786 = vrot.slane %v749, 4
    %v787 = vsel %vm366, %v786, %v737
    %v788 = vrot.slane %v737, 4
    %v789 = vsel %vm366, %v749, %v788
    %v791 = vunpack.c.l.s4 1934713408
    %v792 = vunpack.c.0.s8 %v791
    %v793 = vperm.slane %v787, %v792
    %v795 = vunpack.c.l.s4 1934713408
    %v796 = vunpack.c.0.s8 %v795
    %v797 = vperm.slane %v789, %v796
    %v798 = vrot.slane %v781, 4
    %v799 = vsel %vm366, %v798, %v757
    %v800 = vrot.slane %v757, 4
    %v801 = vsel %vm366, %v781, %v800
    %v802 = vrot.slane %v785, 4
    %v803 = vsel %vm366, %v802, %v761
    %v804 = vrot.slane %v761, 4
    %v805 = vsel %vm366, %v785, %v804
    %v806 = vrot.slane %v793, 4
    %v807 = vsel %vm366, %v806, %v769
    %v808 = vrot.slane %v769, 4
    %v809 = vsel %vm366, %v793, %v808
    %v810 = vrot.slane %v797, 4
    %v811 = vsel %vm366, %v810, %v773
    %v812 = vrot.slane %v773, 4
    %v813 = vsel %vm366, %v797, %v812
    %846 = vrot.lane.b32.xlu0 %v463, 120
    %v847 = vpop.permute.xlu0 %846
    %848 = vrot.lane.b32.xlu0 %v465, 120
    %v849 = vpop.permute.xlu0 %848
    %850 = vrot.lane.b32.xlu0 %v467, 120
    %v851 = vpop.permute.xlu0 %850
    %852 = vrot.lane.b32.xlu0 %v469, 120
    %v853 = vpop.permute.xlu0 %852
    %854 = vrot.lane.b32.xlu0 %v471, 120
    %v855 = vpop.permute.xlu0 %854
    %856 = vrot.lane.b32.xlu0 %v473, 120
    %v857 = vpop.permute.xlu0 %856
    %858 = vrot.lane.b32.xlu0 %v475, 120
    %v859 = vpop.permute.xlu0 %858
    %860 = vrot.lane.b32.xlu0 %v477, 120
    %v861 = vpop.permute.xlu0 %860
    %862 = vrot.lane.b32.xlu0 %v575, 120
    %v863 = vpop.permute.xlu0 %862
    %864 = vrot.lane.b32.xlu0 %v577, 120
    %v865 = vpop.permute.xlu0 %864
    %866 = vrot.lane.b32.xlu0 %v579, 120
    %v867 = vpop.permute.xlu0 %866
    %868 = vrot.lane.b32.xlu0 %v581, 120
    %v869 = vpop.permute.xlu0 %868
    %870 = vrot.lane.b32.xlu0 %v583, 120
    %v871 = vpop.permute.xlu0 %870
    %872 = vrot.lane.b32.xlu0 %v585, 120
    %v873 = vpop.permute.xlu0 %872
    %874 = vrot.lane.b32.xlu0 %v587, 120
    %v875 = vpop.permute.xlu0 %874
    %876 = vrot.lane.b32.xlu0 %v589, 120
    %v877 = vpop.permute.xlu0 %876
    %878 = vrot.lane.b32.xlu0 %v687, 120
    %v879 = vpop.permute.xlu0 %878
    %880 = vrot.lane.b32.xlu0 %v689, 120
    %v881 = vpop.permute.xlu0 %880
    %882 = vrot.lane.b32.xlu0 %v691, 120
    %v883 = vpop.permute.xlu0 %882
    %884 = vrot.lane.b32.xlu0 %v693, 120
    %v885 = vpop.permute.xlu0 %884
    %886 = vrot.lane.b32.xlu0 %v695, 120
    %v887 = vpop.permute.xlu0 %886
    %888 = vrot.lane.b32.xlu0 %v697, 120
    %v889 = vpop.permute.xlu0 %888
    %890 = vrot.lane.b32.xlu0 %v699, 120
    %v891 = vpop.permute.xlu0 %890
    %892 = vrot.lane.b32.xlu0 %v701, 120
    %v893 = vpop.permute.xlu0 %892
    %894 = vrot.lane.b32.xlu0 %v799, 120
    %v895 = vpop.permute.xlu0 %894
    %896 = vrot.lane.b32.xlu0 %v801, 120
    %v897 = vpop.permute.xlu0 %896
    %898 = vrot.lane.b32.xlu0 %v803, 120
    %v899 = vpop.permute.xlu0 %898
    %900 = vrot.lane.b32.xlu0 %v805, 120
    %v901 = vpop.permute.xlu0 %900
    %902 = vrot.lane.b32.xlu0 %v807, 120
    %v903 = vpop.permute.xlu0 %902
    %904 = vrot.lane.b32.xlu0 %v809, 120
    %v905 = vpop.permute.xlu0 %904
    %906 = vrot.lane.b32.xlu0 %v811, 120
    %v907 = vpop.permute.xlu0 %906
    %908 = vrot.lane.b32.xlu0 %v813, 120
    %v909 = vpop.permute.xlu0 %908
    %v942 = vmax.f32 %v463, %v847
    %v943 = vmax.f32 %v465, %v849
    %v944 = vmax.f32 %v467, %v851
    %v945 = vmax.f32 %v469, %v853
    %v946 = vmax.f32 %v471, %v855
    %v947 = vmax.f32 %v473, %v857
    %v948 = vmax.f32 %v475, %v859
    %v949 = vmax.f32 %v477, %v861
    %v950 = vmax.f32 %v575, %v863
    %v951 = vmax.f32 %v577, %v865
    %v952 = vmax.f32 %v579, %v867
    %v953 = vmax.f32 %v581, %v869
    %v954 = vmax.f32 %v583, %v871
    %v955 = vmax.f32 %v585, %v873
    %v956 = vmax.f32 %v587, %v875
    %v957 = vmax.f32 %v589, %v877
    %v958 = vmax.f32 %v687, %v879
    %v959 = vmax.f32 %v689, %v881
    %v960 = vmax.f32 %v691, %v883
    %v961 = vmax.f32 %v693, %v885
    %v962 = vmax.f32 %v695, %v887
    %v963 = vmax.f32 %v697, %v889
    %v964 = vmax.f32 %v699, %v891
    %v965 = vmax.f32 %v701, %v893
    %v966 = vmax.f32 %v799, %v895
    %v967 = vmax.f32 %v801, %v897
    %v968 = vmax.f32 %v803, %v899
    %v969 = vmax.f32 %v805, %v901
    %v970 = vmax.f32 %v807, %v903
    %v971 = vmax.f32 %v809, %v905
    %v972 = vmax.f32 %v811, %v907
    %v973 = vmax.f32 %v813, %v909
    %v974 = vrot.slane %v942, 4
    %v975 = vsel %vm366, 0.0, %v974
    %v977 = vunpack.c.l.s4 1983009808
    %v978 = vunpack.c.0.s8 %v977
    %v979 = vperm.slane %v942, %v978
    %v981 = vunpack.c.l.s4 1983009808
    %v982 = vunpack.c.0.s8 %v981
    %v983 = vperm.slane %v975, %v982
    %v984 = vrot.slane %v943, 4
    %v985 = vsel %vm366, 0.0, %v984
    %v987 = vunpack.c.l.s4 1983009808
    %v988 = vunpack.c.0.s8 %v987
    %v989 = vperm.slane %v943, %v988
    %v991 = vunpack.c.l.s4 1983009808
    %v992 = vunpack.c.0.s8 %v991
    %v993 = vperm.slane %v985, %v992
    %v994 = vrot.slane %v989, 4
    %v995 = vsel %vm366, %v994, %v979
    %v996 = vrot.slane %v979, 4
    %v997 = vsel %vm366, %v989, %v996
    %v999 = vunpack.c.l.s4 1934713408
    %v1000 = vunpack.c.0.s8 %v999
    %v1001 = vperm.slane %v995, %v1000
    %v1003 = vunpack.c.l.s4 1934713408
    %v1004 = vunpack.c.0.s8 %v1003
    %v1005 = vperm.slane %v997, %v1004
    %v1006 = vrot.slane %v993, 4
    %v1007 = vsel %vm366, %v1006, %v983
    %v1008 = vrot.slane %v983, 4
    %v1009 = vsel %vm366, %v993, %v1008
    %v1011 = vunpack.c.l.s4 1934713408
    %v1012 = vunpack.c.0.s8 %v1011
    %v1013 = vperm.slane %v1007, %v1012
    %v1015 = vunpack.c.l.s4 1934713408
    %v1016 = vunpack.c.0.s8 %v1015
    %v1017 = vperm.slane %v1009, %v1016
    %v1018 = vrot.slane %v1001, 4
    %v1019 = vsel %vm366, 0.0, %v1018
    %v1020 = vrot.slane %v1005, 4
    %v1021 = vsel %vm366, 0.0, %v1020
    %v1022 = vrot.slane %v1013, 4
    %v1023 = vsel %vm366, 0.0, %v1022
    %v1024 = vrot.slane %v1017, 4
    %v1025 = vsel %vm366, 0.0, %v1024
    %v1026 = vrot.slane %v944, 4
    %v1027 = vsel %vm366, 0.0, %v1026
    %v1029 = vunpack.c.l.s4 1983009808
    %v1030 = vunpack.c.0.s8 %v1029
    %v1031 = vperm.slane %v944, %v1030
    %v1033 = vunpack.c.l.s4 1983009808
    %v1034 = vunpack.c.0.s8 %v1033
    %v1035 = vperm.slane %v1027, %v1034
    %v1036 = vrot.slane %v945, 4
    %v1037 = vsel %vm366, 0.0, %v1036
    %v1039 = vunpack.c.l.s4 1983009808
    %v1040 = vunpack.c.0.s8 %v1039
    %v1041 = vperm.slane %v945, %v1040
    %v1043 = vunpack.c.l.s4 1983009808
    %v1044 = vunpack.c.0.s8 %v1043
    %v1045 = vperm.slane %v1037, %v1044
    %v1046 = vrot.slane %v1041, 4
    %v1047 = vsel %vm366, %v1046, %v1031
    %v1048 = vrot.slane %v1031, 4
    %v1049 = vsel %vm366, %v1041, %v1048
    %v1051 = vunpack.c.l.s4 1934713408
    %v1052 = vunpack.c.0.s8 %v1051
    %v1053 = vperm.slane %v1047, %v1052
    %v1055 = vunpack.c.l.s4 1934713408
    %v1056 = vunpack.c.0.s8 %v1055
    %v1057 = vperm.slane %v1049, %v1056
    %v1058 = vrot.slane %v1045, 4
    %v1059 = vsel %vm366, %v1058, %v1035
    %v1060 = vrot.slane %v1035, 4
    %v1061 = vsel %vm366, %v1045, %v1060
    %v1063 = vunpack.c.l.s4 1934713408
    %v1064 = vunpack.c.0.s8 %v1063
    %v1065 = vperm.slane %v1059, %v1064
    %v1067 = vunpack.c.l.s4 1934713408
    %v1068 = vunpack.c.0.s8 %v1067
    %v1069 = vperm.slane %v1061, %v1068
    %v1070 = vrot.slane %v1053, 4
    %v1071 = vsel %vm366, 0.0, %v1070
    %v1072 = vrot.slane %v1057, 4
    %v1073 = vsel %vm366, 0.0, %v1072
    %v1074 = vrot.slane %v1065, 4
    %v1075 = vsel %vm366, 0.0, %v1074
    %v1076 = vrot.slane %v1069, 4
    %v1077 = vsel %vm366, 0.0, %v1076
    %v1078 = vrot.slane %v946, 4
    %v1079 = vsel %vm366, 0.0, %v1078
    %v1081 = vunpack.c.l.s4 1983009808
    %v1082 = vunpack.c.0.s8 %v1081
    %v1083 = vperm.slane %v946, %v1082
    %v1085 = vunpack.c.l.s4 1983009808
    %v1086 = vunpack.c.0.s8 %v1085
    %v1087 = vperm.slane %v1079, %v1086
    %v1088 = vrot.slane %v947, 4
    %v1089 = vsel %vm366, 0.0, %v1088
    %v1091 = vunpack.c.l.s4 1983009808
    %v1092 = vunpack.c.0.s8 %v1091
    %v1093 = vperm.slane %v947, %v1092
    %v1095 = vunpack.c.l.s4 1983009808
    %v1096 = vunpack.c.0.s8 %v1095
    %v1097 = vperm.slane %v1089, %v1096
    %v1098 = vrot.slane %v1093, 4
    %v1099 = vsel %vm366, %v1098, %v1083
    %v1100 = vrot.slane %v1083, 4
    %v1101 = vsel %vm366, %v1093, %v1100
    %v1103 = vunpack.c.l.s4 1934713408
    %v1104 = vunpack.c.0.s8 %v1103
    %v1105 = vperm.slane %v1099, %v1104
    %v1107 = vunpack.c.l.s4 1934713408
    %v1108 = vunpack.c.0.s8 %v1107
    %v1109 = vperm.slane %v1101, %v1108
    %v1110 = vrot.slane %v1097, 4
    %v1111 = vsel %vm366, %v1110, %v1087
    %v1112 = vrot.slane %v1087, 4
    %v1113 = vsel %vm366, %v1097, %v1112
    %v1115 = vunpack.c.l.s4 1934713408
    %v1116 = vunpack.c.0.s8 %v1115
    %v1117 = vperm.slane %v1111, %v1116
    %v1119 = vunpack.c.l.s4 1934713408
    %v1120 = vunpack.c.0.s8 %v1119
    %v1121 = vperm.slane %v1113, %v1120
    %v1122 = vrot.slane %v1105, 4
    %v1123 = vsel %vm366, 0.0, %v1122
    %v1124 = vrot.slane %v1109, 4
    %v1125 = vsel %vm366, 0.0, %v1124
    %v1126 = vrot.slane %v1117, 4
    %v1127 = vsel %vm366, 0.0, %v1126
    %v1128 = vrot.slane %v1121, 4
    %v1129 = vsel %vm366, 0.0, %v1128
    %v1130 = vrot.slane %v948, 4
    %v1131 = vsel %vm366, 0.0, %v1130
    %v1133 = vunpack.c.l.s4 1983009808
    %v1134 = vunpack.c.0.s8 %v1133
    %v1135 = vperm.slane %v948, %v1134
    %v1137 = vunpack.c.l.s4 1983009808
    %v1138 = vunpack.c.0.s8 %v1137
    %v1139 = vperm.slane %v1131, %v1138
    %v1140 = vrot.slane %v949, 4
    %v1141 = vsel %vm366, 0.0, %v1140
    %v1143 = vunpack.c.l.s4 1983009808
    %v1144 = vunpack.c.0.s8 %v1143
    %v1145 = vperm.slane %v949, %v1144
    %v1147 = vunpack.c.l.s4 1983009808
    %v1148 = vunpack.c.0.s8 %v1147
    %v1149 = vperm.slane %v1141, %v1148
    %v1150 = vrot.slane %v1145, 4
    %v1151 = vsel %vm366, %v1150, %v1135
    %v1152 = vrot.slane %v1135, 4
    %v1153 = vsel %vm366, %v1145, %v1152
    %v1155 = vunpack.c.l.s4 1934713408
    %v1156 = vunpack.c.0.s8 %v1155
    %v1157 = vperm.slane %v1151, %v1156
    %v1159 = vunpack.c.l.s4 1934713408
    %v1160 = vunpack.c.0.s8 %v1159
    %v1161 = vperm.slane %v1153, %v1160
    %v1162 = vrot.slane %v1149, 4
    %v1163 = vsel %vm366, %v1162, %v1139
    %v1164 = vrot.slane %v1139, 4
    %v1165 = vsel %vm366, %v1149, %v1164
    %v1167 = vunpack.c.l.s4 1934713408
    %v1168 = vunpack.c.0.s8 %v1167
    %v1169 = vperm.slane %v1163, %v1168
    %v1171 = vunpack.c.l.s4 1934713408
    %v1172 = vunpack.c.0.s8 %v1171
    %v1173 = vperm.slane %v1165, %v1172
    %v1174 = vrot.slane %v1157, 4
    %v1175 = vsel %vm366, 0.0, %v1174
    %v1176 = vrot.slane %v1161, 4
    %v1177 = vsel %vm366, 0.0, %v1176
    %v1178 = vrot.slane %v1169, 4
    %v1179 = vsel %vm366, 0.0, %v1178
    %v1180 = vrot.slane %v1173, 4
    %v1181 = vsel %vm366, 0.0, %v1180
    %v1182 = vrot.slane %v950, 4
    %v1183 = vsel %vm366, 0.0, %v1182
    %v1185 = vunpack.c.l.s4 1983009808
    %v1186 = vunpack.c.0.s8 %v1185
    %v1187 = vperm.slane %v950, %v1186
    %v1189 = vunpack.c.l.s4 1983009808
    %v1190 = vunpack.c.0.s8 %v1189
    %v1191 = vperm.slane %v1183, %v1190
    %v1192 = vrot.slane %v951, 4
    %v1193 = vsel %vm366, 0.0, %v1192
    %v1195 = vunpack.c.l.s4 1983009808
    %v1196 = vunpack.c.0.s8 %v1195
    %v1197 = vperm.slane %v951, %v1196
    %v1199 = vunpack.c.l.s4 1983009808
    %v1200 = vunpack.c.0.s8 %v1199
    %v1201 = vperm.slane %v1193, %v1200
    %v1202 = vrot.slane %v1197, 4
    %v1203 = vsel %vm366, %v1202, %v1187
    %v1204 = vrot.slane %v1187, 4
    %v1205 = vsel %vm366, %v1197, %v1204
    %v1207 = vunpack.c.l.s4 1934713408
    %v1208 = vunpack.c.0.s8 %v1207
    %v1209 = vperm.slane %v1203, %v1208
    %v1211 = vunpack.c.l.s4 1934713408
    %v1212 = vunpack.c.0.s8 %v1211
    %v1213 = vperm.slane %v1205, %v1212
    %v1214 = vrot.slane %v1201, 4
    %v1215 = vsel %vm366, %v1214, %v1191
    %v1216 = vrot.slane %v1191, 4
    %v1217 = vsel %vm366, %v1201, %v1216
    %v1219 = vunpack.c.l.s4 1934713408
    %v1220 = vunpack.c.0.s8 %v1219
    %v1221 = vperm.slane %v1215, %v1220
    %v1223 = vunpack.c.l.s4 1934713408
    %v1224 = vunpack.c.0.s8 %v1223
    %v1225 = vperm.slane %v1217, %v1224
    %v1226 = vrot.slane %v1209, 4
    %v1227 = vsel %vm366, 0.0, %v1226
    %v1228 = vrot.slane %v1213, 4
    %v1229 = vsel %vm366, 0.0, %v1228
    %v1230 = vrot.slane %v1221, 4
    %v1231 = vsel %vm366, 0.0, %v1230
    %v1232 = vrot.slane %v1225, 4
    %v1233 = vsel %vm366, 0.0, %v1232
    %v1234 = vrot.slane %v952, 4
    %v1235 = vsel %vm366, 0.0, %v1234
    %v1237 = vunpack.c.l.s4 1983009808
    %v1238 = vunpack.c.0.s8 %v1237
    %v1239 = vperm.slane %v952, %v1238
    %v1241 = vunpack.c.l.s4 1983009808
    %v1242 = vunpack.c.0.s8 %v1241
    %v1243 = vperm.slane %v1235, %v1242
    %v1244 = vrot.slane %v953, 4
    %v1245 = vsel %vm366, 0.0, %v1244
    %v1247 = vunpack.c.l.s4 1983009808
    %v1248 = vunpack.c.0.s8 %v1247
    %v1249 = vperm.slane %v953, %v1248
    %v1251 = vunpack.c.l.s4 1983009808
    %v1252 = vunpack.c.0.s8 %v1251
    %v1253 = vperm.slane %v1245, %v1252
    %v1254 = vrot.slane %v1249, 4
    %v1255 = vsel %vm366, %v1254, %v1239
    %v1256 = vrot.slane %v1239, 4
    %v1257 = vsel %vm366, %v1249, %v1256
    %v1259 = vunpack.c.l.s4 1934713408
    %v1260 = vunpack.c.0.s8 %v1259
    %v1261 = vperm.slane %v1255, %v1260
    %v1263 = vunpack.c.l.s4 1934713408
    %v1264 = vunpack.c.0.s8 %v1263
    %v1265 = vperm.slane %v1257, %v1264
    %v1266 = vrot.slane %v1253, 4
    %v1267 = vsel %vm366, %v1266, %v1243
    %v1268 = vrot.slane %v1243, 4
    %v1269 = vsel %vm366, %v1253, %v1268
    %v1271 = vunpack.c.l.s4 1934713408
    %v1272 = vunpack.c.0.s8 %v1271
    %v1273 = vperm.slane %v1267, %v1272
    %v1275 = vunpack.c.l.s4 1934713408
    %v1276 = vunpack.c.0.s8 %v1275
    %v1277 = vperm.slane %v1269, %v1276
    %v1278 = vrot.slane %v1261, 4
    %v1279 = vsel %vm366, 0.0, %v1278
    %v1280 = vrot.slane %v1265, 4
    %v1281 = vsel %vm366, 0.0, %v1280
    %v1282 = vrot.slane %v1273, 4
    %v1283 = vsel %vm366, 0.0, %v1282
    %v1284 = vrot.slane %v1277, 4
    %v1285 = vsel %vm366, 0.0, %v1284
    %v1286 = vrot.slane %v954, 4
    %v1287 = vsel %vm366, 0.0, %v1286
    %v1289 = vunpack.c.l.s4 1983009808
    %v1290 = vunpack.c.0.s8 %v1289
    %v1291 = vperm.slane %v954, %v1290
    %v1293 = vunpack.c.l.s4 1983009808
    %v1294 = vunpack.c.0.s8 %v1293
    %v1295 = vperm.slane %v1287, %v1294
    %v1296 = vrot.slane %v955, 4
    %v1297 = vsel %vm366, 0.0, %v1296
    %v1299 = vunpack.c.l.s4 1983009808
    %v1300 = vunpack.c.0.s8 %v1299
    %v1301 = vperm.slane %v955, %v1300
    %v1303 = vunpack.c.l.s4 1983009808
    %v1304 = vunpack.c.0.s8 %v1303
    %v1305 = vperm.slane %v1297, %v1304
    %v1306 = vrot.slane %v1301, 4
    %v1307 = vsel %vm366, %v1306, %v1291
    %v1308 = vrot.slane %v1291, 4
    %v1309 = vsel %vm366, %v1301, %v1308
    %v1311 = vunpack.c.l.s4 1934713408
    %v1312 = vunpack.c.0.s8 %v1311
    %v1313 = vperm.slane %v1307, %v1312
    %v1315 = vunpack.c.l.s4 1934713408
    %v1316 = vunpack.c.0.s8 %v1315
    %v1317 = vperm.slane %v1309, %v1316
    %v1318 = vrot.slane %v1305, 4
    %v1319 = vsel %vm366, %v1318, %v1295
    %v1320 = vrot.slane %v1295, 4
    %v1321 = vsel %vm366, %v1305, %v1320
    %v1323 = vunpack.c.l.s4 1934713408
    %v1324 = vunpack.c.0.s8 %v1323
    %v1325 = vperm.slane %v1319, %v1324
    %v1327 = vunpack.c.l.s4 1934713408
    %v1328 = vunpack.c.0.s8 %v1327
    %v1329 = vperm.slane %v1321, %v1328
    %v1330 = vrot.slane %v1313, 4
    %v1331 = vsel %vm366, 0.0, %v1330
    %v1332 = vrot.slane %v1317, 4
    %v1333 = vsel %vm366, 0.0, %v1332
    %v1334 = vrot.slane %v1325, 4
    %v1335 = vsel %vm366, 0.0, %v1334
    %v1336 = vrot.slane %v1329, 4
    %v1337 = vsel %vm366, 0.0, %v1336
    %v1338 = vrot.slane %v956, 4
    %v1339 = vsel %vm366, 0.0, %v1338
    %v1341 = vunpack.c.l.s4 1983009808
    %v1342 = vunpack.c.0.s8 %v1341
    %v1343 = vperm.slane %v956, %v1342
    %v1345 = vunpack.c.l.s4 1983009808
    %v1346 = vunpack.c.0.s8 %v1345
    %v1347 = vperm.slane %v1339, %v1346
    %v1348 = vrot.slane %v957, 4
    %v1349 = vsel %vm366, 0.0, %v1348
    %v1351 = vunpack.c.l.s4 1983009808
    %v1352 = vunpack.c.0.s8 %v1351
    %v1353 = vperm.slane %v957, %v1352
    %v1355 = vunpack.c.l.s4 1983009808
    %v1356 = vunpack.c.0.s8 %v1355
    %v1357 = vperm.slane %v1349, %v1356
    %v1358 = vrot.slane %v1353, 4
    %v1359 = vsel %vm366, %v1358, %v1343
    %v1360 = vrot.slane %v1343, 4
    %v1361 = vsel %vm366, %v1353, %v1360
    %v1363 = vunpack.c.l.s4 1934713408
    %v1364 = vunpack.c.0.s8 %v1363
    %v1365 = vperm.slane %v1359, %v1364
    %v1367 = vunpack.c.l.s4 1934713408
    %v1368 = vunpack.c.0.s8 %v1367
    %v1369 = vperm.slane %v1361, %v1368
    %v1370 = vrot.slane %v1357, 4
    %v1371 = vsel %vm366, %v1370, %v1347
    %v1372 = vrot.slane %v1347, 4
    %v1373 = vsel %vm366, %v1357, %v1372
    %v1375 = vunpack.c.l.s4 1934713408
    %v1376 = vunpack.c.0.s8 %v1375
    %v1377 = vperm.slane %v1371, %v1376
    %v1379 = vunpack.c.l.s4 1934713408
    %v1380 = vunpack.c.0.s8 %v1379
    %v1381 = vperm.slane %v1373, %v1380
    %v1382 = vrot.slane %v1365, 4
    %v1383 = vsel %vm366, 0.0, %v1382
    %v1384 = vrot.slane %v1369, 4
    %v1385 = vsel %vm366, 0.0, %v1384
    %v1386 = vrot.slane %v1377, 4
    %v1387 = vsel %vm366, 0.0, %v1386
    %v1388 = vrot.slane %v1381, 4
    %v1389 = vsel %vm366, 0.0, %v1388
    %v1390 = vrot.slane %v958, 4
    %v1391 = vsel %vm366, 0.0, %v1390
    %v1393 = vunpack.c.l.s4 1983009808
    %v1394 = vunpack.c.0.s8 %v1393
    %v1395 = vperm.slane %v958, %v1394
    %v1397 = vunpack.c.l.s4 1983009808
    %v1398 = vunpack.c.0.s8 %v1397
    %v1399 = vperm.slane %v1391, %v1398
    %v1400 = vrot.slane %v959, 4
    %v1401 = vsel %vm366, 0.0, %v1400
    %v1403 = vunpack.c.l.s4 1983009808
    %v1404 = vunpack.c.0.s8 %v1403
    %v1405 = vperm.slane %v959, %v1404
    %v1407 = vunpack.c.l.s4 1983009808
    %v1408 = vunpack.c.0.s8 %v1407
    %v1409 = vperm.slane %v1401, %v1408
    %v1410 = vrot.slane %v1405, 4
    %v1411 = vsel %vm366, %v1410, %v1395
    %v1412 = vrot.slane %v1395, 4
    %v1413 = vsel %vm366, %v1405, %v1412
    %v1415 = vunpack.c.l.s4 1934713408
    %v1416 = vunpack.c.0.s8 %v1415
    %v1417 = vperm.slane %v1411, %v1416
    %v1419 = vunpack.c.l.s4 1934713408
    %v1420 = vunpack.c.0.s8 %v1419
    %v1421 = vperm.slane %v1413, %v1420
    %v1422 = vrot.slane %v1409, 4
    %v1423 = vsel %vm366, %v1422, %v1399
    %v1424 = vrot.slane %v1399, 4
    %v1425 = vsel %vm366, %v1409, %v1424
    %v1427 = vunpack.c.l.s4 1934713408
    %v1428 = vunpack.c.0.s8 %v1427
    %v1429 = vperm.slane %v1423, %v1428
    %v1431 = vunpack.c.l.s4 1934713408
    %v1432 = vunpack.c.0.s8 %v1431
    %v1433 = vperm.slane %v1425, %v1432
    %v1434 = vrot.slane %v1417, 4
    %v1435 = vsel %vm366, 0.0, %v1434
    %v1436 = vrot.slane %v1421, 4
    %v1437 = vsel %vm366, 0.0, %v1436
    %v1438 = vrot.slane %v1429, 4
    %v1439 = vsel %vm366, 0.0, %v1438
    %v1440 = vrot.slane %v1433, 4
    %v1441 = vsel %vm366, 0.0, %v1440
    %v1442 = vrot.slane %v960, 4
    %v1443 = vsel %vm366, 0.0, %v1442
    %v1445 = vunpack.c.l.s4 1983009808
    %v1446 = vunpack.c.0.s8 %v1445
    %v1447 = vperm.slane %v960, %v1446
    %v1449 = vunpack.c.l.s4 1983009808
    %v1450 = vunpack.c.0.s8 %v1449
    %v1451 = vperm.slane %v1443, %v1450
    %v1452 = vrot.slane %v961, 4
    %v1453 = vsel %vm366, 0.0, %v1452
    %v1455 = vunpack.c.l.s4 1983009808
    %v1456 = vunpack.c.0.s8 %v1455
    %v1457 = vperm.slane %v961, %v1456
    %v1459 = vunpack.c.l.s4 1983009808
    %v1460 = vunpack.c.0.s8 %v1459
    %v1461 = vperm.slane %v1453, %v1460
    %v1462 = vrot.slane %v1457, 4
    %v1463 = vsel %vm366, %v1462, %v1447
    %v1464 = vrot.slane %v1447, 4
    %v1465 = vsel %vm366, %v1457, %v1464
    %v1467 = vunpack.c.l.s4 1934713408
    %v1468 = vunpack.c.0.s8 %v1467
    %v1469 = vperm.slane %v1463, %v1468
    %v1471 = vunpack.c.l.s4 1934713408
    %v1472 = vunpack.c.0.s8 %v1471
    %v1473 = vperm.slane %v1465, %v1472
    %v1474 = vrot.slane %v1461, 4
    %v1475 = vsel %vm366, %v1474, %v1451
    %v1476 = vrot.slane %v1451, 4
    %v1477 = vsel %vm366, %v1461, %v1476
    %v1479 = vunpack.c.l.s4 1934713408
    %v1480 = vunpack.c.0.s8 %v1479
    %v1481 = vperm.slane %v1475, %v1480
    %v1483 = vunpack.c.l.s4 1934713408
    %v1484 = vunpack.c.0.s8 %v1483
    %v1485 = vperm.slane %v1477, %v1484
    %v1486 = vrot.slane %v1469, 4
    %v1487 = vsel %vm366, 0.0, %v1486
    %v1488 = vrot.slane %v1473, 4
    %v1489 = vsel %vm366, 0.0, %v1488
    %v1490 = vrot.slane %v1481, 4
    %v1491 = vsel %vm366, 0.0, %v1490
    %v1492 = vrot.slane %v1485, 4
    %v1493 = vsel %vm366, 0.0, %v1492
    %v1494 = vrot.slane %v962, 4
    %v1495 = vsel %vm366, 0.0, %v1494
    %v1497 = vunpack.c.l.s4 1983009808
    %v1498 = vunpack.c.0.s8 %v1497
    %v1499 = vperm.slane %v962, %v1498
    %v1501 = vunpack.c.l.s4 1983009808
    %v1502 = vunpack.c.0.s8 %v1501
    %v1503 = vperm.slane %v1495, %v1502
    %v1504 = vrot.slane %v963, 4
    %v1505 = vsel %vm366, 0.0, %v1504
    %v1507 = vunpack.c.l.s4 1983009808
    %v1508 = vunpack.c.0.s8 %v1507
    %v1509 = vperm.slane %v963, %v1508
    %v1511 = vunpack.c.l.s4 1983009808
    %v1512 = vunpack.c.0.s8 %v1511
    %v1513 = vperm.slane %v1505, %v1512
    %v1514 = vrot.slane %v1509, 4
    %v1515 = vsel %vm366, %v1514, %v1499
    %v1516 = vrot.slane %v1499, 4
    %v1517 = vsel %vm366, %v1509, %v1516
    %v1519 = vunpack.c.l.s4 1934713408
    %v1520 = vunpack.c.0.s8 %v1519
    %v1521 = vperm.slane %v1515, %v1520
    %v1523 = vunpack.c.l.s4 1934713408
    %v1524 = vunpack.c.0.s8 %v1523
    %v1525 = vperm.slane %v1517, %v1524
    %v1526 = vrot.slane %v1513, 4
    %v1527 = vsel %vm366, %v1526, %v1503
    %v1528 = vrot.slane %v1503, 4
    %v1529 = vsel %vm366, %v1513, %v1528
    %v1531 = vunpack.c.l.s4 1934713408
    %v1532 = vunpack.c.0.s8 %v1531
    %v1533 = vperm.slane %v1527, %v1532
    %v1535 = vunpack.c.l.s4 1934713408
    %v1536 = vunpack.c.0.s8 %v1535
    %v1537 = vperm.slane %v1529, %v1536
    %v1538 = vrot.slane %v1521, 4
    %v1539 = vsel %vm366, 0.0, %v1538
    %v1540 = vrot.slane %v1525, 4
    %v1541 = vsel %vm366, 0.0, %v1540
    %v1542 = vrot.slane %v1533, 4
    %v1543 = vsel %vm366, 0.0, %v1542
    %v1544 = vrot.slane %v1537, 4
    %v1545 = vsel %vm366, 0.0, %v1544
    %v1546 = vrot.slane %v964, 4
    %v1547 = vsel %vm366, 0.0, %v1546
    %v1549 = vunpack.c.l.s4 1983009808
    %v1550 = vunpack.c.0.s8 %v1549
    %v1551 = vperm.slane %v964, %v1550
    %v1553 = vunpack.c.l.s4 1983009808
    %v1554 = vunpack.c.0.s8 %v1553
    %v1555 = vperm.slane %v1547, %v1554
    %v1556 = vrot.slane %v965, 4
    %v1557 = vsel %vm366, 0.0, %v1556
    %v1559 = vunpack.c.l.s4 1983009808
    %v1560 = vunpack.c.0.s8 %v1559
    %v1561 = vperm.slane %v965, %v1560
    %v1563 = vunpack.c.l.s4 1983009808
    %v1564 = vunpack.c.0.s8 %v1563
    %v1565 = vperm.slane %v1557, %v1564
    %v1566 = vrot.slane %v1561, 4
    %v1567 = vsel %vm366, %v1566, %v1551
    %v1568 = vrot.slane %v1551, 4
    %v1569 = vsel %vm366, %v1561, %v1568
    %v1571 = vunpack.c.l.s4 1934713408
    %v1572 = vunpack.c.0.s8 %v1571
    %v1573 = vperm.slane %v1567, %v1572
    %v1575 = vunpack.c.l.s4 1934713408
    %v1576 = vunpack.c.0.s8 %v1575
    %v1577 = vperm.slane %v1569, %v1576
    %v1578 = vrot.slane %v1565, 4
    %v1579 = vsel %vm366, %v1578, %v1555
    %v1580 = vrot.slane %v1555, 4
    %v1581 = vsel %vm366, %v1565, %v1580
    %v1583 = vunpack.c.l.s4 1934713408
    %v1584 = vunpack.c.0.s8 %v1583
    %v1585 = vperm.slane %v1579, %v1584
    %v1587 = vunpack.c.l.s4 1934713408
    %v1588 = vunpack.c.0.s8 %v1587
    %v1589 = vperm.slane %v1581, %v1588
    %v1590 = vrot.slane %v1573, 4
    %v1591 = vsel %vm366, 0.0, %v1590
    %v1592 = vrot.slane %v1577, 4
    %v1593 = vsel %vm366, 0.0, %v1592
    %v1594 = vrot.slane %v1585, 4
    %v1595 = vsel %vm366, 0.0, %v1594
    %v1596 = vrot.slane %v1589, 4
    %v1597 = vsel %vm366, 0.0, %v1596
    %v1598 = vrot.slane %v966, 4
    %v1599 = vsel %vm366, 0.0, %v1598
    %v1601 = vunpack.c.l.s4 1983009808
    %v1602 = vunpack.c.0.s8 %v1601
    %v1603 = vperm.slane %v966, %v1602
    %v1605 = vunpack.c.l.s4 1983009808
    %v1606 = vunpack.c.0.s8 %v1605
    %v1607 = vperm.slane %v1599, %v1606
    %v1608 = vrot.slane %v967, 4
    %v1609 = vsel %vm366, 0.0, %v1608
    %v1611 = vunpack.c.l.s4 1983009808
    %v1612 = vunpack.c.0.s8 %v1611
    %v1613 = vperm.slane %v967, %v1612
    %v1615 = vunpack.c.l.s4 1983009808
    %v1616 = vunpack.c.0.s8 %v1615
    %v1617 = vperm.slane %v1609, %v1616
    %v1618 = vrot.slane %v1613, 4
    %v1619 = vsel %vm366, %v1618, %v1603
    %v1620 = vrot.slane %v1603, 4
    %v1621 = vsel %vm366, %v1613, %v1620
    %v1623 = vunpack.c.l.s4 1934713408
    %v1624 = vunpack.c.0.s8 %v1623
    %v1625 = vperm.slane %v1619, %v1624
    %v1627 = vunpack.c.l.s4 1934713408
    %v1628 = vunpack.c.0.s8 %v1627
    %v1629 = vperm.slane %v1621, %v1628
    %v1630 = vrot.slane %v1617, 4
    %v1631 = vsel %vm366, %v1630, %v1607
    %v1632 = vrot.slane %v1607, 4
    %v1633 = vsel %vm366, %v1617, %v1632
    %v1635 = vunpack.c.l.s4 1934713408
    %v1636 = vunpack.c.0.s8 %v1635
    %v1637 = vperm.slane %v1631, %v1636
    %v1639 = vunpack.c.l.s4 1934713408
    %v1640 = vunpack.c.0.s8 %v1639
    %v1641 = vperm.slane %v1633, %v1640
    %v1642 = vrot.slane %v1625, 4
    %v1643 = vsel %vm366, 0.0, %v1642
    %v1644 = vrot.slane %v1629, 4
    %v1645 = vsel %vm366, 0.0, %v1644
    %v1646 = vrot.slane %v1637, 4
    %v1647 = vsel %vm366, 0.0, %v1646
    %v1648 = vrot.slane %v1641, 4
    %v1649 = vsel %vm366, 0.0, %v1648
    %v1650 = vrot.slane %v968, 4
    %v1651 = vsel %vm366, 0.0, %v1650
    %v1653 = vunpack.c.l.s4 1983009808
    %v1654 = vunpack.c.0.s8 %v1653
    %v1655 = vperm.slane %v968, %v1654
    %v1657 = vunpack.c.l.s4 1983009808
    %v1658 = vunpack.c.0.s8 %v1657
    %v1659 = vperm.slane %v1651, %v1658
    %v1660 = vrot.slane %v969, 4
    %v1661 = vsel %vm366, 0.0, %v1660
    %v1663 = vunpack.c.l.s4 1983009808
    %v1664 = vunpack.c.0.s8 %v1663
    %v1665 = vperm.slane %v969, %v1664
    %v1667 = vunpack.c.l.s4 1983009808
    %v1668 = vunpack.c.0.s8 %v1667
    %v1669 = vperm.slane %v1661, %v1668
    %v1670 = vrot.slane %v1665, 4
    %v1671 = vsel %vm366, %v1670, %v1655
    %v1672 = vrot.slane %v1655, 4
    %v1673 = vsel %vm366, %v1665, %v1672
    %v1675 = vunpack.c.l.s4 1934713408
    %v1676 = vunpack.c.0.s8 %v1675
    %v1677 = vperm.slane %v1671, %v1676
    %v1679 = vunpack.c.l.s4 1934713408
    %v1680 = vunpack.c.0.s8 %v1679
    %v1681 = vperm.slane %v1673, %v1680
    %v1682 = vrot.slane %v1669, 4
    %v1683 = vsel %vm366, %v1682, %v1659
    %v1684 = vrot.slane %v1659, 4
    %v1685 = vsel %vm366, %v1669, %v1684
    %v1687 = vunpack.c.l.s4 1934713408
    %v1688 = vunpack.c.0.s8 %v1687
    %v1689 = vperm.slane %v1683, %v1688
    %v1691 = vunpack.c.l.s4 1934713408
    %v1692 = vunpack.c.0.s8 %v1691
    %v1693 = vperm.slane %v1685, %v1692
    %v1694 = vrot.slane %v1677, 4
    %v1695 = vsel %vm366, 0.0, %v1694
    %v1696 = vrot.slane %v1681, 4
    %v1697 = vsel %vm366, 0.0, %v1696
    %v1698 = vrot.slane %v1689, 4
    %v1699 = vsel %vm366, 0.0, %v1698
    %v1700 = vrot.slane %v1693, 4
    %v1701 = vsel %vm366, 0.0, %v1700
    %v1702 = vrot.slane %v970, 4
    %v1703 = vsel %vm366, 0.0, %v1702
    %v1705 = vunpack.c.l.s4 1983009808
    %v1706 = vunpack.c.0.s8 %v1705
    %v1707 = vperm.slane %v970, %v1706
    %v1709 = vunpack.c.l.s4 1983009808
    %v1710 = vunpack.c.0.s8 %v1709
    %v1711 = vperm.slane %v1703, %v1710
    %v1712 = vrot.slane %v971, 4
    %v1713 = vsel %vm366, 0.0, %v1712
    %v1715 = vunpack.c.l.s4 1983009808
    %v1716 = vunpack.c.0.s8 %v1715
    %v1717 = vperm.slane %v971, %v1716
    %v1719 = vunpack.c.l.s4 1983009808
    %v1720 = vunpack.c.0.s8 %v1719
    %v1721 = vperm.slane %v1713, %v1720
    %v1722 = vrot.slane %v1717, 4
    %v1723 = vsel %vm366, %v1722, %v1707
    %v1724 = vrot.slane %v1707, 4
    %v1725 = vsel %vm366, %v1717, %v1724
    %v1727 = vunpack.c.l.s4 1934713408
    %v1728 = vunpack.c.0.s8 %v1727
    %v1729 = vperm.slane %v1723, %v1728
    %v1731 = vunpack.c.l.s4 1934713408
    %v1732 = vunpack.c.0.s8 %v1731
    %v1733 = vperm.slane %v1725, %v1732
    %v1734 = vrot.slane %v1721, 4
    %v1735 = vsel %vm366, %v1734, %v1711
    %v1736 = vrot.slane %v1711, 4
    %v1737 = vsel %vm366, %v1721, %v1736
    %v1739 = vunpack.c.l.s4 1934713408
    %v1740 = vunpack.c.0.s8 %v1739
    %v1741 = vperm.slane %v1735, %v1740
    %v1743 = vunpack.c.l.s4 1934713408
    %v1744 = vunpack.c.0.s8 %v1743
    %v1745 = vperm.slane %v1737, %v1744
    %v1746 = vrot.slane %v1729, 4
    %v1747 = vsel %vm366, 0.0, %v1746
    %v1748 = vrot.slane %v1733, 4
    %v1749 = vsel %vm366, 0.0, %v1748
    %v1750 = vrot.slane %v1741, 4
    %v1751 = vsel %vm366, 0.0, %v1750
    %v1752 = vrot.slane %v1745, 4
    %v1753 = vsel %vm366, 0.0, %v1752
    %v1754 = vrot.slane %v972, 4
    %v1755 = vsel %vm366, 0.0, %v1754
    %v1757 = vunpack.c.l.s4 1983009808
    %v1758 = vunpack.c.0.s8 %v1757
    %v1759 = vperm.slane %v972, %v1758
    %v1761 = vunpack.c.l.s4 1983009808
    %v1762 = vunpack.c.0.s8 %v1761
    %v1763 = vperm.slane %v1755, %v1762
    %v1764 = vrot.slane %v973, 4
    %v1765 = vsel %vm366, 0.0, %v1764
    %v1767 = vunpack.c.l.s4 1983009808
    %v1768 = vunpack.c.0.s8 %v1767
    %v1769 = vperm.slane %v973, %v1768
    %v1771 = vunpack.c.l.s4 1983009808
    %v1772 = vunpack.c.0.s8 %v1771
    %v1773 = vperm.slane %v1765, %v1772
    %v1774 = vrot.slane %v1769, 4
    %v1775 = vsel %vm366, %v1774, %v1759
    %v1776 = vrot.slane %v1759, 4
    %v1777 = vsel %vm366, %v1769, %v1776
    %v1779 = vunpack.c.l.s4 1934713408
    %v1780 = vunpack.c.0.s8 %v1779
    %v1781 = vperm.slane %v1775, %v1780
    %v1783 = vunpack.c.l.s4 1934713408
    %v1784 = vunpack.c.0.s8 %v1783
    %v1785 = vperm.slane %v1777, %v1784
    %v1786 = vrot.slane %v1773, 4
    %v1787 = vsel %vm366, %v1786, %v1763
    %v1788 = vrot.slane %v1763, 4
    %v1789 = vsel %vm366, %v1773, %v1788
    %v1791 = vunpack.c.l.s4 1934713408
    %v1792 = vunpack.c.0.s8 %v1791
    %v1793 = vperm.slane %v1787, %v1792
    %v1795 = vunpack.c.l.s4 1934713408
    %v1796 = vunpack.c.0.s8 %v1795
    %v1797 = vperm.slane %v1789, %v1796
    %v1798 = vrot.slane %v1781, 4
    %v1799 = vsel %vm366, 0.0, %v1798
    %v1800 = vrot.slane %v1785, 4
    %v1801 = vsel %vm366, 0.0, %v1800
    %v1802 = vrot.slane %v1793, 4
    %v1803 = vsel %vm366, 0.0, %v1802
    %v1804 = vrot.slane %v1797, 4
    %v1805 = vsel %vm366, 0.0, %v1804
    %1822 = vrot.lane.b32.xlu0 %v1019, 8
    %v1823 = vpop.permute.xlu0 %1822
    %1824 = vrot.lane.b32.xlu0 %v1071, 8
    %v1825 = vpop.permute.xlu0 %1824
    %1826 = vrot.lane.b32.xlu0 %v1123, 8
    %v1827 = vpop.permute.xlu0 %1826
    %1828 = vrot.lane.b32.xlu0 %v1175, 8
    %v1829 = vpop.permute.xlu0 %1828
    %1830 = vrot.lane.b32.xlu0 %v1227, 8
    %v1831 = vpop.permute.xlu0 %1830
    %1832 = vrot.lane.b32.xlu0 %v1279, 8
    %v1833 = vpop.permute.xlu0 %1832
    %1834 = vrot.lane.b32.xlu0 %v1331, 8
    %v1835 = vpop.permute.xlu0 %1834
    %1836 = vrot.lane.b32.xlu0 %v1383, 8
    %v1837 = vpop.permute.xlu0 %1836
    %1838 = vrot.lane.b32.xlu0 %v1435, 8
    %v1839 = vpop.permute.xlu0 %1838
    %1840 = vrot.lane.b32.xlu0 %v1487, 8
    %v1841 = vpop.permute.xlu0 %1840
    %1842 = vrot.lane.b32.xlu0 %v1539, 8
    %v1843 = vpop.permute.xlu0 %1842
    %1844 = vrot.lane.b32.xlu0 %v1591, 8
    %v1845 = vpop.permute.xlu0 %1844
    %1846 = vrot.lane.b32.xlu0 %v1643, 8
    %v1847 = vpop.permute.xlu0 %1846
    %1848 = vrot.lane.b32.xlu0 %v1695, 8
    %v1849 = vpop.permute.xlu0 %1848
    %1850 = vrot.lane.b32.xlu0 %v1747, 8
    %v1851 = vpop.permute.xlu0 %1850
    %1852 = vrot.lane.b32.xlu0 %v1799, 8
    %v1853 = vpop.permute.xlu0 %1852
    %1886 = vrot.lane.b32.xlu0 %v1005, 16
    %v1887 = vpop.permute.xlu0 %1886
    %1888 = vrot.lane.b32.xlu0 %v1057, 16
    %v1889 = vpop.permute.xlu0 %1888
    %1890 = vrot.lane.b32.xlu0 %v1109, 16
    %v1891 = vpop.permute.xlu0 %1890
    %1892 = vrot.lane.b32.xlu0 %v1161, 16
    %v1893 = vpop.permute.xlu0 %1892
    %1894 = vrot.lane.b32.xlu0 %v1213, 16
    %v1895 = vpop.permute.xlu0 %1894
    %1896 = vrot.lane.b32.xlu0 %v1265, 16
    %v1897 = vpop.permute.xlu0 %1896
    %1898 = vrot.lane.b32.xlu0 %v1317, 16
    %v1899 = vpop.permute.xlu0 %1898
    %1900 = vrot.lane.b32.xlu0 %v1369, 16
    %v1901 = vpop.permute.xlu0 %1900
    %1902 = vrot.lane.b32.xlu0 %v1421, 16
    %v1903 = vpop.permute.xlu0 %1902
    %1904 = vrot.lane.b32.xlu0 %v1473, 16
    %v1905 = vpop.permute.xlu0 %1904
    %1906 = vrot.lane.b32.xlu0 %v1525, 16
    %v1907 = vpop.permute.xlu0 %1906
    %1908 = vrot.lane.b32.xlu0 %v1577, 16
    %v1909 = vpop.permute.xlu0 %1908
    %1910 = vrot.lane.b32.xlu0 %v1629, 16
    %v1911 = vpop.permute.xlu0 %1910
    %1912 = vrot.lane.b32.xlu0 %v1681, 16
    %v1913 = vpop.permute.xlu0 %1912
    %1914 = vrot.lane.b32.xlu0 %v1733, 16
    %v1915 = vpop.permute.xlu0 %1914
    %1916 = vrot.lane.b32.xlu0 %v1785, 16
    %v1917 = vpop.permute.xlu0 %1916
    %1950 = vrot.lane.b32.xlu0 %v1021, 24
    %v1951 = vpop.permute.xlu0 %1950
    %1952 = vrot.lane.b32.xlu0 %v1073, 24
    %v1953 = vpop.permute.xlu0 %1952
    %1954 = vrot.lane.b32.xlu0 %v1125, 24
    %v1955 = vpop.permute.xlu0 %1954
    %1956 = vrot.lane.b32.xlu0 %v1177, 24
    %v1957 = vpop.permute.xlu0 %1956
    %1958 = vrot.lane.b32.xlu0 %v1229, 24
    %v1959 = vpop.permute.xlu0 %1958
    %1960 = vrot.lane.b32.xlu0 %v1281, 24
    %v1961 = vpop.permute.xlu0 %1960
    %1962 = vrot.lane.b32.xlu0 %v1333, 24
    %v1963 = vpop.permute.xlu0 %1962
    %1964 = vrot.lane.b32.xlu0 %v1385, 24
    %v1965 = vpop.permute.xlu0 %1964
    %1966 = vrot.lane.b32.xlu0 %v1437, 24
    %v1967 = vpop.permute.xlu0 %1966
    %1968 = vrot.lane.b32.xlu0 %v1489, 24
    %v1969 = vpop.permute.xlu0 %1968
    %1970 = vrot.lane.b32.xlu0 %v1541, 24
    %v1971 = vpop.permute.xlu0 %1970
    %1972 = vrot.lane.b32.xlu0 %v1593, 24
    %v1973 = vpop.permute.xlu0 %1972
    %1974 = vrot.lane.b32.xlu0 %v1645, 24
    %v1975 = vpop.permute.xlu0 %1974
    %1976 = vrot.lane.b32.xlu0 %v1697, 24
    %v1977 = vpop.permute.xlu0 %1976
    %1978 = vrot.lane.b32.xlu0 %v1749, 24
    %v1979 = vpop.permute.xlu0 %1978
    %1980 = vrot.lane.b32.xlu0 %v1801, 24
    %v1981 = vpop.permute.xlu0 %1980
    %2014 = vrot.lane.b32.xlu0 %v1013, 32
    %v2015 = vpop.permute.xlu0 %2014
    %2016 = vrot.lane.b32.xlu0 %v1065, 32
    %v2017 = vpop.permute.xlu0 %2016
    %2018 = vrot.lane.b32.xlu0 %v1117, 32
    %v2019 = vpop.permute.xlu0 %2018
    %2020 = vrot.lane.b32.xlu0 %v1169, 32
    %v2021 = vpop.permute.xlu0 %2020
    %2022 = vrot.lane.b32.xlu0 %v1221, 32
    %v2023 = vpop.permute.xlu0 %2022
    %2024 = vrot.lane.b32.xlu0 %v1273, 32
    %v2025 = vpop.permute.xlu0 %2024
    %2026 = vrot.lane.b32.xlu0 %v1325, 32
    %v2027 = vpop.permute.xlu0 %2026
    %2028 = vrot.lane.b32.xlu0 %v1377, 32
    %v2029 = vpop.permute.xlu0 %2028
    %2030 = vrot.lane.b32.xlu0 %v1429, 32
    %v2031 = vpop.permute.xlu0 %2030
    %2032 = vrot.lane.b32.xlu0 %v1481, 32
    %v2033 = vpop.permute.xlu0 %2032
    %2034 = vrot.lane.b32.xlu0 %v1533, 32
    %v2035 = vpop.permute.xlu0 %2034
    %2036 = vrot.lane.b32.xlu0 %v1585, 32
    %v2037 = vpop.permute.xlu0 %2036
    %2038 = vrot.lane.b32.xlu0 %v1637, 32
    %v2039 = vpop.permute.xlu0 %2038
    %2040 = vrot.lane.b32.xlu0 %v1689, 32
    %v2041 = vpop.permute.xlu0 %2040
    %2042 = vrot.lane.b32.xlu0 %v1741, 32
    %v2043 = vpop.permute.xlu0 %2042
    %2044 = vrot.lane.b32.xlu0 %v1793, 32
    %v2045 = vpop.permute.xlu0 %2044
    %2078 = vrot.lane.b32.xlu0 %v1023, 40
    %v2079 = vpop.permute.xlu0 %2078
    %2080 = vrot.lane.b32.xlu0 %v1075, 40
    %v2081 = vpop.permute.xlu0 %2080
    %2082 = vrot.lane.b32.xlu0 %v1127, 40
    %v2083 = vpop.permute.xlu0 %2082
    %2084 = vrot.lane.b32.xlu0 %v1179, 40
    %v2085 = vpop.permute.xlu0 %2084
    %2086 = vrot.lane.b32.xlu0 %v1231, 40
    %v2087 = vpop.permute.xlu0 %2086
    %2088 = vrot.lane.b32.xlu0 %v1283, 40
    %v2089 = vpop.permute.xlu0 %2088
    %2090 = vrot.lane.b32.xlu0 %v1335, 40
    %v2091 = vpop.permute.xlu0 %2090
    %2092 = vrot.lane.b32.xlu0 %v1387, 40
    %v2093 = vpop.permute.xlu0 %2092
    %2094 = vrot.lane.b32.xlu0 %v1439, 40
    %v2095 = vpop.permute.xlu0 %2094
    %2096 = vrot.lane.b32.xlu0 %v1491, 40
    %v2097 = vpop.permute.xlu0 %2096
    %2098 = vrot.lane.b32.xlu0 %v1543, 40
    %v2099 = vpop.permute.xlu0 %2098
    %2100 = vrot.lane.b32.xlu0 %v1595, 40
    %v2101 = vpop.permute.xlu0 %2100
    %2102 = vrot.lane.b32.xlu0 %v1647, 40
    %v2103 = vpop.permute.xlu0 %2102
    %2104 = vrot.lane.b32.xlu0 %v1699, 40
    %v2105 = vpop.permute.xlu0 %2104
    %2106 = vrot.lane.b32.xlu0 %v1751, 40
    %v2107 = vpop.permute.xlu0 %2106
    %2108 = vrot.lane.b32.xlu0 %v1803, 40
    %v2109 = vpop.permute.xlu0 %2108
    %2142 = vrot.lane.b32.xlu0 %v1017, 48
    %v2143 = vpop.permute.xlu0 %2142
    %2144 = vrot.lane.b32.xlu0 %v1069, 48
    %v2145 = vpop.permute.xlu0 %2144
    %2146 = vrot.lane.b32.xlu0 %v1121, 48
    %v2147 = vpop.permute.xlu0 %2146
    %2148 = vrot.lane.b32.xlu0 %v1173, 48
    %v2149 = vpop.permute.xlu0 %2148
    %2150 = vrot.lane.b32.xlu0 %v1225, 48
    %v2151 = vpop.permute.xlu0 %2150
    %2152 = vrot.lane.b32.xlu0 %v1277, 48
    %v2153 = vpop.permute.xlu0 %2152
    %2154 = vrot.lane.b32.xlu0 %v1329, 48
    %v2155 = vpop.permute.xlu0 %2154
    %2156 = vrot.lane.b32.xlu0 %v1381, 48
    %v2157 = vpop.permute.xlu0 %2156
    %2158 = vrot.lane.b32.xlu0 %v1433, 48
    %v2159 = vpop.permute.xlu0 %2158
    %2160 = vrot.lane.b32.xlu0 %v1485, 48
    %v2161 = vpop.permute.xlu0 %2160
    %2162 = vrot.lane.b32.xlu0 %v1537, 48
    %v2163 = vpop.permute.xlu0 %2162
    %2164 = vrot.lane.b32.xlu0 %v1589, 48
    %v2165 = vpop.permute.xlu0 %2164
    %2166 = vrot.lane.b32.xlu0 %v1641, 48
    %v2167 = vpop.permute.xlu0 %2166
    %2168 = vrot.lane.b32.xlu0 %v1693, 48
    %v2169 = vpop.permute.xlu0 %2168
    %2170 = vrot.lane.b32.xlu0 %v1745, 48
    %v2171 = vpop.permute.xlu0 %2170
    %2172 = vrot.lane.b32.xlu0 %v1797, 48
    %v2173 = vpop.permute.xlu0 %2172
    %2206 = vrot.lane.b32.xlu0 %v1025, 56
    %v2207 = vpop.permute.xlu0 %2206
    %2208 = vrot.lane.b32.xlu0 %v1077, 56
    %v2209 = vpop.permute.xlu0 %2208
    %2210 = vrot.lane.b32.xlu0 %v1129, 56
    %v2211 = vpop.permute.xlu0 %2210
    %2212 = vrot.lane.b32.xlu0 %v1181, 56
    %v2213 = vpop.permute.xlu0 %2212
    %2214 = vrot.lane.b32.xlu0 %v1233, 56
    %v2215 = vpop.permute.xlu0 %2214
    %2216 = vrot.lane.b32.xlu0 %v1285, 56
    %v2217 = vpop.permute.xlu0 %2216
    %2218 = vrot.lane.b32.xlu0 %v1337, 56
    %v2219 = vpop.permute.xlu0 %2218
    %2220 = vrot.lane.b32.xlu0 %v1389, 56
    %v2221 = vpop.permute.xlu0 %2220
    %2222 = vrot.lane.b32.xlu0 %v1441, 56
    %v2223 = vpop.permute.xlu0 %2222
    %2224 = vrot.lane.b32.xlu0 %v1493, 56
    %v2225 = vpop.permute.xlu0 %2224
    %2226 = vrot.lane.b32.xlu0 %v1545, 56
    %v2227 = vpop.permute.xlu0 %2226
    %2228 = vrot.lane.b32.xlu0 %v1597, 56
    %v2229 = vpop.permute.xlu0 %2228
    %2230 = vrot.lane.b32.xlu0 %v1649, 56
    %v2231 = vpop.permute.xlu0 %2230
    %2232 = vrot.lane.b32.xlu0 %v1701, 56
    %v2233 = vpop.permute.xlu0 %2232
    %2234 = vrot.lane.b32.xlu0 %v1753, 56
    %v2235 = vpop.permute.xlu0 %2234
    %2236 = vrot.lane.b32.xlu0 %v1805, 56
    %v2237 = vpop.permute.xlu0 %2236
    %vm2254 = vcmask 64512
    %v2255 = vsel %vm2254, %v1001, %v1823
    %v2256 = vsel %vm2254, %v1053, %v1825
    %v2257 = vsel %vm2254, %v1105, %v1827
    %v2258 = vsel %vm2254, %v1157, %v1829
    %v2259 = vsel %vm2254, %v1209, %v1831
    %v2260 = vsel %vm2254, %v1261, %v1833
    %v2261 = vsel %vm2254, %v1313, %v1835
    %v2262 = vsel %vm2254, %v1365, %v1837
    %v2263 = vsel %vm2254, %v1417, %v1839
    %v2264 = vsel %vm2254, %v1469, %v1841
    %v2265 = vsel %vm2254, %v1521, %v1843
    %v2266 = vsel %vm2254, %v1573, %v1845
    %v2267 = vsel %vm2254, %v1625, %v1847
    %v2268 = vsel %vm2254, %v1677, %v1849
    %v2269 = vsel %vm2254, %v1729, %v1851
    %v2270 = vsel %vm2254, %v1781, %v1853
    %vm2271 = vcmask 130048
    %v2272 = vsel %vm2271, %v2255, %v1887
    %v2273 = vsel %vm2271, %v2256, %v1889
    %v2274 = vsel %vm2271, %v2257, %v1891
    %v2275 = vsel %vm2271, %v2258, %v1893
    %v2276 = vsel %vm2271, %v2259, %v1895
    %v2277 = vsel %vm2271, %v2260, %v1897
    %v2278 = vsel %vm2271, %v2261, %v1899
    %v2279 = vsel %vm2271, %v2262, %v1901
    %v2280 = vsel %vm2271, %v2263, %v1903
    %v2281 = vsel %vm2271, %v2264, %v1905
    %v2282 = vsel %vm2271, %v2265, %v1907
    %v2283 = vsel %vm2271, %v2266, %v1909
    %v2284 = vsel %vm2271, %v2267, %v1911
    %v2285 = vsel %vm2271, %v2268, %v1913
    %v2286 = vsel %vm2271, %v2269, %v1915
    %v2287 = vsel %vm2271, %v2270, %v1917
    %vm2288 = vcmask 195584
    %v2289 = vsel %vm2288, %v2272, %v1951
    %v2290 = vsel %vm2288, %v2273, %v1953
    %v2291 = vsel %vm2288, %v2274, %v1955
    %v2292 = vsel %vm2288, %v2275, %v1957
    %v2293 = vsel %vm2288, %v2276, %v1959
    %v2294 = vsel %vm2288, %v2277, %v1961
    %v2295 = vsel %vm2288, %v2278, %v1963
    %v2296 = vsel %vm2288, %v2279, %v1965
    %v2297 = vsel %vm2288, %v2280, %v1967
    %v2298 = vsel %vm2288, %v2281, %v1969
    %v2299 = vsel %vm2288, %v2282, %v1971
    %v2300 = vsel %vm2288, %v2283, %v1973
    %v2301 = vsel %vm2288, %v2284, %v1975
    %v2302 = vsel %vm2288, %v2285, %v1977
    %v2303 = vsel %vm2288, %v2286, %v1979
    %v2304 = vsel %vm2288, %v2287, %v1981
    %vm2305 = vcmask 261120
    %v2306 = vsel %vm2305, %v2289, %v2015
    %v2307 = vsel %vm2305, %v2290, %v2017
    %v2308 = vsel %vm2305, %v2291, %v2019
    %v2309 = vsel %vm2305, %v2292, %v2021
    %v2310 = vsel %vm2305, %v2293, %v2023
    %v2311 = vsel %vm2305, %v2294, %v2025
    %v2312 = vsel %vm2305, %v2295, %v2027
    %v2313 = vsel %vm2305, %v2296, %v2029
    %v2314 = vsel %vm2305, %v2297, %v2031
    %v2315 = vsel %vm2305, %v2298, %v2033
    %v2316 = vsel %vm2305, %v2299, %v2035
    %v2317 = vsel %vm2305, %v2300, %v2037
    %v2318 = vsel %vm2305, %v2301, %v2039
    %v2319 = vsel %vm2305, %v2302, %v2041
    %v2320 = vsel %vm2305, %v2303, %v2043
    %v2321 = vsel %vm2305, %v2304, %v2045
    %vm2322 = vcmask 326656
    %v2323 = vsel %vm2322, %v2306, %v2079
    %v2324 = vsel %vm2322, %v2307, %v2081
    %v2325 = vsel %vm2322, %v2308, %v2083
    %v2326 = vsel %vm2322, %v2309, %v2085
    %v2327 = vsel %vm2322, %v2310, %v2087
    %v2328 = vsel %vm2322, %v2311, %v2089
    %v2329 = vsel %vm2322, %v2312, %v2091
    %v2330 = vsel %vm2322, %v2313, %v2093
    %v2331 = vsel %vm2322, %v2314, %v2095
    %v2332 = vsel %vm2322, %v2315, %v2097
    %v2333 = vsel %vm2322, %v2316, %v2099
    %v2334 = vsel %vm2322, %v2317, %v2101
    %v2335 = vsel %vm2322, %v2318, %v2103
    %v2336 = vsel %vm2322, %v2319, %v2105
    %v2337 = vsel %vm2322, %v2320, %v2107
    %v2338 = vsel %vm2322, %v2321, %v2109
    %vm2339 = vcmask 392192
    %v2340 = vsel %vm2339, %v2323, %v2143
    %v2341 = vsel %vm2339, %v2324, %v2145
    %v2342 = vsel %vm2339, %v2325, %v2147
    %v2343 = vsel %vm2339, %v2326, %v2149
    %v2344 = vsel %vm2339, %v2327, %v2151
    %v2345 = vsel %vm2339, %v2328, %v2153
    %v2346 = vsel %vm2339, %v2329, %v2155
    %v2347 = vsel %vm2339, %v2330, %v2157
    %v2348 = vsel %vm2339, %v2331, %v2159
    %v2349 = vsel %vm2339, %v2332, %v2161
    %v2350 = vsel %vm2339, %v2333, %v2163
    %v2351 = vsel %vm2339, %v2334, %v2165
    %v2352 = vsel %vm2339, %v2335, %v2167
    %v2353 = vsel %vm2339, %v2336, %v2169
    %v2354 = vsel %vm2339, %v2337, %v2171
    %v2355 = vsel %vm2339, %v2338, %v2173
    %vm2356 = vcmask 457728
    %v2357 = vsel %vm2356, %v2340, %v2207
    %v2358 = vsel %vm2356, %v2341, %v2209
    %v2359 = vsel %vm2356, %v2342, %v2211
    %v2360 = vsel %vm2356, %v2343, %v2213
    %v2361 = vsel %vm2356, %v2344, %v2215
    %v2362 = vsel %vm2356, %v2345, %v2217
    %v2363 = vsel %vm2356, %v2346, %v2219
    %v2364 = vsel %vm2356, %v2347, %v2221
    %v2365 = vsel %vm2356, %v2348, %v2223
    %v2366 = vsel %vm2356, %v2349, %v2225
    %v2367 = vsel %vm2356, %v2350, %v2227
    %v2368 = vsel %vm2356, %v2351, %v2229
    %v2369 = vsel %vm2356, %v2352, %v2231
    %v2370 = vsel %vm2356, %v2353, %v2233
    %v2371 = vsel %vm2356, %v2354, %v2235
    %v2372 = vsel %vm2356, %v2355, %v2237
    %v2389 = vrot.slane %v2357, 1
    %v2390 = vrot.slane %v2358, 1
    %v2391 = vrot.slane %v2359, 1
    %v2392 = vrot.slane %v2360, 1
    %v2393 = vrot.slane %v2361, 1
    %v2394 = vrot.slane %v2362, 1
    %v2395 = vrot.slane %v2363, 1
    %v2396 = vrot.slane %v2364, 1
    %v2397 = vrot.slane %v2365, 1
    %v2398 = vrot.slane %v2366, 1
    %v2399 = vrot.slane %v2367, 1
    %v2400 = vrot.slane %v2368, 1
    %v2401 = vrot.slane %v2369, 1
    %v2402 = vrot.slane %v2370, 1
    %v2403 = vrot.slane %v2371, 1
    %v2404 = vrot.slane %v2372, 1
    %v2421 = vmax.f32 %v2357, %v2389
    %v2422 = vmax.f32 %v2358, %v2390
    %v2423 = vmax.f32 %v2359, %v2391
    %v2424 = vmax.f32 %v2360, %v2392
    %v2425 = vmax.f32 %v2361, %v2393
    %v2426 = vmax.f32 %v2362, %v2394
    %v2427 = vmax.f32 %v2363, %v2395
    %v2428 = vmax.f32 %v2364, %v2396
    %v2429 = vmax.f32 %v2365, %v2397
    %v2430 = vmax.f32 %v2366, %v2398
    %v2431 = vmax.f32 %v2367, %v2399
    %v2432 = vmax.f32 %v2368, %v2400
    %v2433 = vmax.f32 %v2369, %v2401
    %v2434 = vmax.f32 %v2370, %v2402
    %v2435 = vmax.f32 %v2371, %v2403
    %v2436 = vmax.f32 %v2372, %v2404
    %vm2437 = vcmask 516096
    %2438 = vst.msk [vmem:[#allocation3] sm:$0x1] %vm2437, 0.0
    %2439 = vst.msk [vmem:[#allocation3 + $0x10] sm:$0x1] %vm2437, 0.0
    %2440 = vst.msk [vmem:[#allocation3 + $0x9] sm:$0x1] %vm2437, 0.0
    %2441 = vst.msk [vmem:[#allocation3 + $0x19] sm:$0x1] %vm2437, 0.0
    %v2458 = vrot.slane %v2422, 7
    %vm2459 = vcmask 1041409
    %v2460 = vsel %vm2459, %v2458, %v2421
    %v2461 = vrot.slane %v2423, 6
    %vm2462 = vcmask 1042434
    %v2463 = vsel %vm2462, %v2461, %v2460
    %v2464 = vrot.slane %v2424, 5
    %vm2465 = vcmask 1043459
    %v2466 = vsel %vm2465, %v2464, %v2463
    %v2467 = vrot.slane %v2425, 4
    %vm2468 = vcmask 1044484
    %v2469 = vsel %vm2468, %v2467, %v2466
    %v2470 = vrot.slane %v2426, 3
    %vm2471 = vcmask 1045509
    %v2472 = vsel %vm2471, %v2470, %v2469
    %v2473 = vrot.slane %v2427, 2
    %vm2474 = vcmask 1046534
    %v2475 = vsel %vm2474, %v2473, %v2472
    %v2476 = vrot.slane %v2428, 1
    %vm2477 = vcmask 1047559
    %v2478 = vsel %vm2477, %v2476, %v2475
    %v2479 = vrot.slane %v2430, 7
    %v2480 = vsel %vm2459, %v2479, %v2429
    %v2481 = vrot.slane %v2431, 6
    %v2482 = vsel %vm2462, %v2481, %v2480
    %v2483 = vrot.slane %v2432, 5
    %v2484 = vsel %vm2465, %v2483, %v2482
    %v2485 = vrot.slane %v2433, 4
    %v2486 = vsel %vm2468, %v2485, %v2484
    %v2487 = vrot.slane %v2434, 3
    %v2488 = vsel %vm2471, %v2487, %v2486
    %v2489 = vrot.slane %v2435, 2
    %v2490 = vsel %vm2474, %v2489, %v2488
    %v2491 = vrot.slane %v2436, 1
    %v2492 = vsel %vm2477, %v2491, %v2490
    %vm2495 = vcmask 523264
    %2496 = vst.msk [vmem:[#allocation3 + $0x1] sm:$0xff] %vm2495, %v2478
    %2497 = vst.msk [vmem:[#allocation3 + $0x11] sm:$0xff] %vm2495, %v2492
    %v2498 = vld [vmem:[#allocation3] sm:$0xff]
    %v2499 = vld [vmem:[#allocation3 + $0x10] sm:$0xff]
    %v2500 = vld [vmem:[#allocation11] sm:$0xff]
    %v2501 = vld [vmem:[#allocation11 + $0x8] sm:$0xff]
    %v2502 = vld [vmem:[#allocation11 + $0x10] sm:$0xff]
    %v2503 = vld [vmem:[#allocation11 + $0x18] sm:$0xff]
    %v2504 = vld [vmem:[#allocation11 + $0x20] sm:$0xff]
    %v2505 = vld [vmem:[#allocation11 + $0x28] sm:$0xff]
    %v2506 = vld [vmem:[#allocation11 + $0x30] sm:$0xff]
    %v2507 = vld [vmem:[#allocation11 + $0x38] sm:$0xff]
    %v2508 = vld [vmem:[#allocation3 + $0x1] sm:$0xff]
    %v2509 = vld [vmem:[#allocation3 + $0x11] sm:$0xff]
    %s2510 = scalar_lea.vmem [#allocation11], 64
    %v2511 = vld [vmem:[%s2510] sm:$0xff]
    %v2512 = vld [vmem:[%s2510 + $0x8] sm:$0xff]
    %v2513 = vld [vmem:[%s2510 + $0x10] sm:$0xff]
    %v2514 = vld [vmem:[%s2510 + $0x18] sm:$0xff]
    %v2515 = vld [vmem:[%s2510 + $0x20] sm:$0xff]
    %v2516 = vld [vmem:[%s2510 + $0x28] sm:$0xff]
    %v2517 = vld [vmem:[%s2510 + $0x30] sm:$0xff]
    %v2518 = vld [vmem:[%s2510 + $0x38] sm:$0xff]
    %v2520 = vsel %vm2495, %v2508, 0
    %v2523 = vsel %vm2495, %v2509, 0
    %2525 = vmatpush.msra.mxu0 0.0
    %2526 = vmatpush.msra.mxu0 0.0
    %2527 = vmatpush.msra.mxu0 0.0
    %2528 = vmatpush.msra.mxu0 0.0
    %2529 = vmatpush.msra.mxu0 0.0
    %2530 = vmatpush.msra.mxu0 0.0
    %2531 = vmatpush.msra.mxu0 0.0
    %2532 = vmatpush.msra.mxu0 0.0
    %2533 = vmatpush.msra.mxu0 %v2518
    %2534 = vmatpush.msra.mxu0 %v2517
    %2535 = vmatpush.msra.mxu0 %v2516
    %2536 = vmatpush.msra.mxu0 %v2515
    %2537 = vmatpush.msra.mxu0 %v2514
    %2538 = vmatpush.msra.mxu0 %v2513
    %2539 = vmatpush.msra.mxu0 %v2512
    %2540 = vmatpush.msra.mxu0 %v2511
    %2541 = vmatmul.f32.gmra.mxu0 %v2520
    %v2542 = vpop.f32.mrf.mxu0
    %v2543 = vadd.f32 0.0, %v2542
    %2544 = vmatmul.f32.gmra.mxu0 %v2523
    %v2545 = vpop.f32.mrf.mxu0
    %v2546 = vadd.f32 0.0, %v2545
    %2547 = vdwg.mxu0
    %v2549 = vsel %vm2495, %v2498, 0
    %v2552 = vsel %vm2495, %v2499, 0
    %2554 = vmatpush.msra.mxu0 0.0
    %2555 = vmatpush.msra.mxu0 0.0
    %2556 = vmatpush.msra.mxu0 0.0
    %2557 = vmatpush.msra.mxu0 0.0
    %2558 = vmatpush.msra.mxu0 0.0
    %2559 = vmatpush.msra.mxu0 0.0
    %2560 = vmatpush.msra.mxu0 0.0
    %2561 = vmatpush.msra.mxu0 0.0
    %2562 = vmatpush.msra.mxu0 %v2507
    %2563 = vmatpush.msra.mxu0 %v2506
    %2564 = vmatpush.msra.mxu0 %v2505
    %2565 = vmatpush.msra.mxu0 %v2504
    %2566 = vmatpush.msra.mxu0 %v2503
    %2567 = vmatpush.msra.mxu0 %v2502
    %2568 = vmatpush.msra.mxu0 %v2501
    %2569 = vmatpush.msra.mxu0 %v2500
    %2570 = vmatmul.f32.gmra.mxu0 %v2549
    %v2571 = vpop.f32.mrf.mxu0
    %v2572 = vadd.f32 %v2543, %v2571
    %2573 = vmatmul.f32.gmra.mxu0 %v2552
    %v2574 = vpop.f32.mrf.mxu0
    %v2575 = vadd.f32 %v2546, %v2574
    %2576 = vdwg.mxu0
    %v2577 = vld [vmem:[#allocation3 + $0x2] sm:$0xff]
    %v2578 = vld [vmem:[#allocation3 + $0x12] sm:$0xff]
    %s2579 = scalar_lea.vmem [#allocation11], 128
    %v2580 = vld [vmem:[%s2579] sm:$0xff]
    %v2581 = vld [vmem:[%s2579 + $0x8] sm:$0xff]
    %v2582 = vld [vmem:[%s2579 + $0x10] sm:$0xff]
    %v2583 = vld [vmem:[%s2579 + $0x18] sm:$0xff]
    %v2584 = vld [vmem:[%s2579 + $0x20] sm:$0xff]
    %v2585 = vld [vmem:[%s2579 + $0x28] sm:$0xff]
    %v2586 = vld [vmem:[%s2579 + $0x30] sm:$0xff]
    %v2587 = vld [vmem:[%s2579 + $0x38] sm:$0xff]
    %v2589 = vsel %vm2495, %v2577, 0
    %v2592 = vsel %vm2495, %v2578, 0
    %2594 = vmatpush.msra.mxu0 0.0
    %2595 = vmatpush.msra.mxu0 0.0
    %2596 = vmatpush.msra.mxu0 0.0
    %2597 = vmatpush.msra.mxu0 0.0
    %2598 = vmatpush.msra.mxu0 0.0
    %2599 = vmatpush.msra.mxu0 0.0
    %2600 = vmatpush.msra.mxu0 0.0
    %2601 = vmatpush.msra.mxu0 0.0
    %2602 = vmatpush.msra.mxu0 %v2587
    %2603 = vmatpush.msra.mxu0 %v2586
    %2604 = vmatpush.msra.mxu0 %v2585
    %2605 = vmatpush.msra.mxu0 %v2584
    %2606 = vmatpush.msra.mxu0 %v2583
    %2607 = vmatpush.msra.mxu0 %v2582
    %2608 = vmatpush.msra.mxu0 %v2581
    %2609 = vmatpush.msra.mxu0 %v2580
    %2610 = vmatmul.f32.gmra.mxu0 %v2589
    %v2611 = vpop.f32.mrf.mxu0
    %v2612 = vadd.f32 0.0, %v2611
    %2613 = vmatmul.f32.gmra.mxu0 %v2592
    %v2614 = vpop.f32.mrf.mxu0
    %v2615 = vadd.f32 0.0, %v2614
    %2616 = vdwg.mxu0
    %v2617 = vadd.f32 %v2572, %v2612
    %v2618 = vadd.f32 %v2575, %v2615
    %v2619 = vperm.slane %v102, 1
    %v2620 = vadd.f32 %v2617, %v2619
    %v2621 = vadd.f32 %v2618, %v2619
    %v2622 = vmax.f32 %v2620, 0.0
    %v2623 = vmax.f32 %v2621, 0.0
    %2626 = vrot.lane.b32.xlu0 %v2622, 112
    %v2627 = vpop.permute.xlu0 %2626
    %2628 = vrot.lane.b32.xlu0 %v2623, 112
    %v2629 = vpop.permute.xlu0 %2628
    %2632 = vrot.lane.b32.xlu0 %v2622, 96
    %v2633 = vpop.permute.xlu0 %2632
    %2634 = vrot.lane.b32.xlu0 %v2623, 96
    %v2635 = vpop.permute.xlu0 %2634
    %2638 = vrot.lane.b32.xlu0 %v2622, 80
    %v2639 = vpop.permute.xlu0 %2638
    %2640 = vrot.lane.b32.xlu0 %v2623, 80
    %v2641 = vpop.permute.xlu0 %2640
    %v2644 = vrot.slane %v2633, 4
    %v2645 = vsel %vm366, %v2644, %v2622
    %v2646 = vrot.slane %v2622, 4
    %v2647 = vsel %vm366, %v2633, %v2646
    %v2649 = vunpack.c.l.s4 1983009808
    %v2650 = vunpack.c.0.s8 %v2649
    %v2651 = vperm.slane %v2645, %v2650
    %v2653 = vunpack.c.l.s4 1983009808
    %v2654 = vunpack.c.0.s8 %v2653
    %v2655 = vperm.slane %v2647, %v2654
    %v2656 = vrot.slane %v2639, 4
    %v2657 = vsel %vm366, %v2656, %v2627
    %v2658 = vrot.slane %v2627, 4
    %v2659 = vsel %vm366, %v2639, %v2658
    %v2661 = vunpack.c.l.s4 1983009808
    %v2662 = vunpack.c.0.s8 %v2661
    %v2663 = vperm.slane %v2657, %v2662
    %v2665 = vunpack.c.l.s4 1983009808
    %v2666 = vunpack.c.0.s8 %v2665
    %v2667 = vperm.slane %v2659, %v2666
    %v2668 = vrot.slane %v2663, 4
    %v2669 = vsel %vm366, %v2668, %v2651
    %v2670 = vrot.slane %v2651, 4
    %v2671 = vsel %vm366, %v2663, %v2670
    %v2673 = vunpack.c.l.s4 1934713408
    %v2674 = vunpack.c.0.s8 %v2673
    %v2675 = vperm.slane %v2669, %v2674
    %v2677 = vunpack.c.l.s4 1934713408
    %v2678 = vunpack.c.0.s8 %v2677
    %v2679 = vperm.slane %v2671, %v2678
    %v2680 = vrot.slane %v2667, 4
    %v2681 = vsel %vm366, %v2680, %v2655
    %v2682 = vrot.slane %v2655, 4
    %v2683 = vsel %vm366, %v2667, %v2682
    %v2685 = vunpack.c.l.s4 1934713408
    %v2686 = vunpack.c.0.s8 %v2685
    %v2687 = vperm.slane %v2681, %v2686
    %v2689 = vunpack.c.l.s4 1934713408
    %v2690 = vunpack.c.0.s8 %v2689
    %v2691 = vperm.slane %v2683, %v2690
    %v2692 = vrot.slane %v2675, 4
    %v2693 = vsel %vm366, 0.0, %v2692
    %v2694 = vrot.slane %v2679, 4
    %v2695 = vsel %vm366, 0.0, %v2694
    %v2696 = vrot.slane %v2687, 4
    %v2697 = vsel %vm366, 0.0, %v2696
    %v2698 = vrot.slane %v2691, 4
    %v2699 = vsel %vm366, 0.0, %v2698
    %v2700 = vrot.slane %v2635, 4
    %v2701 = vsel %vm366, %v2700, %v2623
    %v2702 = vrot.slane %v2623, 4
    %v2703 = vsel %vm366, %v2635, %v2702
    %v2705 = vunpack.c.l.s4 1983009808
    %v2706 = vunpack.c.0.s8 %v2705
    %v2707 = vperm.slane %v2701, %v2706
    %v2709 = vunpack.c.l.s4 1983009808
    %v2710 = vunpack.c.0.s8 %v2709
    %v2711 = vperm.slane %v2703, %v2710
    %v2712 = vrot.slane %v2641, 4
    %v2713 = vsel %vm366, %v2712, %v2629
    %v2714 = vrot.slane %v2629, 4
    %v2715 = vsel %vm366, %v2641, %v2714
    %v2717 = vunpack.c.l.s4 1983009808
    %v2718 = vunpack.c.0.s8 %v2717
    %v2719 = vperm.slane %v2713, %v2718
    %v2721 = vunpack.c.l.s4 1983009808
    %v2722 = vunpack.c.0.s8 %v2721
    %v2723 = vperm.slane %v2715, %v2722
    %v2724 = vrot.slane %v2719, 4
    %v2725 = vsel %vm366, %v2724, %v2707
    %v2726 = vrot.slane %v2707, 4
    %v2727 = vsel %vm366, %v2719, %v2726
    %v2729 = vunpack.c.l.s4 1934713408
    %v2730 = vunpack.c.0.s8 %v2729
    %v2731 = vperm.slane %v2725, %v2730
    %v2733 = vunpack.c.l.s4 1934713408
    %v2734 = vunpack.c.0.s8 %v2733
    %v2735 = vperm.slane %v2727, %v2734
    %v2736 = vrot.slane %v2723, 4
    %v2737 = vsel %vm366, %v2736, %v2711
    %v2738 = vrot.slane %v2711, 4
    %v2739 = vsel %vm366, %v2723, %v2738
    %v2741 = vunpack.c.l.s4 1934713408
    %v2742 = vunpack.c.0.s8 %v2741
    %v2743 = vperm.slane %v2737, %v2742
    %v2745 = vunpack.c.l.s4 1934713408
    %v2746 = vunpack.c.0.s8 %v2745
    %v2747 = vperm.slane %v2739, %v2746
    %v2748 = vrot.slane %v2731, 4
    %v2749 = vsel %vm366, 0.0, %v2748
    %v2750 = vrot.slane %v2735, 4
    %v2751 = vsel %vm366, 0.0, %v2750
    %v2752 = vrot.slane %v2743, 4
    %v2753 = vsel %vm366, 0.0, %v2752
    %v2754 = vrot.slane %v2747, 4
    %v2755 = vsel %vm366, 0.0, %v2754
    %2772 = vrot.lane.b32.xlu0 %v2675, 120
    %v2773 = vpop.permute.xlu0 %2772
    %2774 = vrot.lane.b32.xlu0 %v2693, 120
    %v2775 = vpop.permute.xlu0 %2774
    %2776 = vrot.lane.b32.xlu0 %v2679, 120
    %v2777 = vpop.permute.xlu0 %2776
    %2778 = vrot.lane.b32.xlu0 %v2695, 120
    %v2779 = vpop.permute.xlu0 %2778
    %2780 = vrot.lane.b32.xlu0 %v2687, 120
    %v2781 = vpop.permute.xlu0 %2780
    %2782 = vrot.lane.b32.xlu0 %v2697, 120
    %v2783 = vpop.permute.xlu0 %2782
    %2784 = vrot.lane.b32.xlu0 %v2691, 120
    %v2785 = vpop.permute.xlu0 %2784
    %2786 = vrot.lane.b32.xlu0 %v2699, 120
    %v2787 = vpop.permute.xlu0 %2786
    %2788 = vrot.lane.b32.xlu0 %v2731, 120
    %v2789 = vpop.permute.xlu0 %2788
    %2790 = vrot.lane.b32.xlu0 %v2749, 120
    %v2791 = vpop.permute.xlu0 %2790
    %2792 = vrot.lane.b32.xlu0 %v2735, 120
    %v2793 = vpop.permute.xlu0 %2792
    %2794 = vrot.lane.b32.xlu0 %v2751, 120
    %v2795 = vpop.permute.xlu0 %2794
    %2796 = vrot.lane.b32.xlu0 %v2743, 120
    %v2797 = vpop.permute.xlu0 %2796
    %2798 = vrot.lane.b32.xlu0 %v2753, 120
    %v2799 = vpop.permute.xlu0 %2798
    %2800 = vrot.lane.b32.xlu0 %v2747, 120
    %v2801 = vpop.permute.xlu0 %2800
    %2802 = vrot.lane.b32.xlu0 %v2755, 120
    %v2803 = vpop.permute.xlu0 %2802
    %v2820 = vmax.f32 %v2675, %v2773
    %v2822 = vunpack.c.l.s4 1983009808
    %v2823 = vunpack.c.0.s8 %v2822
    %v2824 = vperm.slane %v2820, %v2823
    %v2825 = vmax.f32 %v2693, %v2775
    %v2827 = vunpack.c.l.s4 1983009808
    %v2828 = vunpack.c.0.s8 %v2827
    %v2829 = vperm.slane %v2825, %v2828
    %v2830 = vrot.slane %v2829, 4
    %v2831 = vsel %vm366, %v2830, %v2824
    %v2832 = vrot.slane %v2824, 4
    %v2833 = vsel %vm366, %v2829, %v2832
    %v2835 = vunpack.c.l.s4 1934713408
    %v2836 = vunpack.c.0.s8 %v2835
    %v2837 = vperm.slane %v2831, %v2836
    %v2839 = vunpack.c.l.s4 1934713408
    %v2840 = vunpack.c.0.s8 %v2839
    %v2841 = vperm.slane %v2833, %v2840
    %v2842 = vrot.slane %v2837, 4
    %v2843 = vsel %vm366, 0.0, %v2842
    %v2844 = vrot.slane %v2841, 4
    %v2845 = vsel %vm366, 0.0, %v2844
    %v2846 = vmax.f32 %v2679, %v2777
    %v2848 = vunpack.c.l.s4 1983009808
    %v2849 = vunpack.c.0.s8 %v2848
    %v2850 = vperm.slane %v2846, %v2849
    %v2851 = vmax.f32 %v2695, %v2779
    %v2853 = vunpack.c.l.s4 1983009808
    %v2854 = vunpack.c.0.s8 %v2853
    %v2855 = vperm.slane %v2851, %v2854
    %v2856 = vrot.slane %v2855, 4
    %v2857 = vsel %vm366, %v2856, %v2850
    %v2858 = vrot.slane %v2850, 4
    %v2859 = vsel %vm366, %v2855, %v2858
    %v2861 = vunpack.c.l.s4 1934713408
    %v2862 = vunpack.c.0.s8 %v2861
    %v2863 = vperm.slane %v2857, %v2862
    %v2865 = vunpack.c.l.s4 1934713408
    %v2866 = vunpack.c.0.s8 %v2865
    %v2867 = vperm.slane %v2859, %v2866
    %v2868 = vrot.slane %v2863, 4
    %v2869 = vsel %vm366, 0.0, %v2868
    %v2870 = vrot.slane %v2867, 4
    %v2871 = vsel %vm366, 0.0, %v2870
    %v2872 = vmax.f32 %v2687, %v2781
    %v2874 = vunpack.c.l.s4 1983009808
    %v2875 = vunpack.c.0.s8 %v2874
    %v2876 = vperm.slane %v2872, %v2875
    %v2877 = vmax.f32 %v2697, %v2783
    %v2879 = vunpack.c.l.s4 1983009808
    %v2880 = vunpack.c.0.s8 %v2879
    %v2881 = vperm.slane %v2877, %v2880
    %v2882 = vrot.slane %v2881, 4
    %v2883 = vsel %vm366, %v2882, %v2876
    %v2884 = vrot.slane %v2876, 4
    %v2885 = vsel %vm366, %v2881, %v2884
    %v2887 = vunpack.c.l.s4 1934713408
    %v2888 = vunpack.c.0.s8 %v2887
    %v2889 = vperm.slane %v2883, %v2888
    %v2891 = vunpack.c.l.s4 1934713408
    %v2892 = vunpack.c.0.s8 %v2891
    %v2893 = vperm.slane %v2885, %v2892
    %v2894 = vrot.slane %v2889, 4
    %v2895 = vsel %vm366, 0.0, %v2894
    %v2896 = vrot.slane %v2893, 4
    %v2897 = vsel %vm366, 0.0, %v2896
    %v2898 = vmax.f32 %v2691, %v2785
    %v2900 = vunpack.c.l.s4 1983009808
    %v2901 = vunpack.c.0.s8 %v2900
    %v2902 = vperm.slane %v2898, %v2901
    %v2903 = vmax.f32 %v2699, %v2787
    %v2905 = vunpack.c.l.s4 1983009808
    %v2906 = vunpack.c.0.s8 %v2905
    %v2907 = vperm.slane %v2903, %v2906
    %v2908 = vrot.slane %v2907, 4
    %v2909 = vsel %vm366, %v2908, %v2902
    %v2910 = vrot.slane %v2902, 4
    %v2911 = vsel %vm366, %v2907, %v2910
    %v2913 = vunpack.c.l.s4 1934713408
    %v2914 = vunpack.c.0.s8 %v2913
    %v2915 = vperm.slane %v2909, %v2914
    %v2917 = vunpack.c.l.s4 1934713408
    %v2918 = vunpack.c.0.s8 %v2917
    %v2919 = vperm.slane %v2911, %v2918
    %v2920 = vrot.slane %v2915, 4
    %v2921 = vsel %vm366, 0.0, %v2920
    %v2922 = vrot.slane %v2919, 4
    %v2923 = vsel %vm366, 0.0, %v2922
    %v2924 = vmax.f32 %v2731, %v2789
    %v2926 = vunpack.c.l.s4 1983009808
    %v2927 = vunpack.c.0.s8 %v2926
    %v2928 = vperm.slane %v2924, %v2927
    %v2929 = vmax.f32 %v2749, %v2791
    %v2931 = vunpack.c.l.s4 1983009808
    %v2932 = vunpack.c.0.s8 %v2931
    %v2933 = vperm.slane %v2929, %v2932
    %v2934 = vrot.slane %v2933, 4
    %v2935 = vsel %vm366, %v2934, %v2928
    %v2936 = vrot.slane %v2928, 4
    %v2937 = vsel %vm366, %v2933, %v2936
    %v2939 = vunpack.c.l.s4 1934713408
    %v2940 = vunpack.c.0.s8 %v2939
    %v2941 = vperm.slane %v2935, %v2940
    %v2943 = vunpack.c.l.s4 1934713408
    %v2944 = vunpack.c.0.s8 %v2943
    %v2945 = vperm.slane %v2937, %v2944
    %v2946 = vrot.slane %v2941, 4
    %v2947 = vsel %vm366, 0.0, %v2946
    %v2948 = vrot.slane %v2945, 4
    %v2949 = vsel %vm366, 0.0, %v2948
    %v2950 = vmax.f32 %v2735, %v2793
    %v2952 = vunpack.c.l.s4 1983009808
    %v2953 = vunpack.c.0.s8 %v2952
    %v2954 = vperm.slane %v2950, %v2953
    %v2955 = vmax.f32 %v2751, %v2795
    %v2957 = vunpack.c.l.s4 1983009808
    %v2958 = vunpack.c.0.s8 %v2957
    %v2959 = vperm.slane %v2955, %v2958
    %v2960 = vrot.slane %v2959, 4
    %v2961 = vsel %vm366, %v2960, %v2954
    %v2962 = vrot.slane %v2954, 4
    %v2963 = vsel %vm366, %v2959, %v2962
    %v2965 = vunpack.c.l.s4 1934713408
    %v2966 = vunpack.c.0.s8 %v2965
    %v2967 = vperm.slane %v2961, %v2966
    %v2969 = vunpack.c.l.s4 1934713408
    %v2970 = vunpack.c.0.s8 %v2969
    %v2971 = vperm.slane %v2963, %v2970
    %v2972 = vrot.slane %v2967, 4
    %v2973 = vsel %vm366, 0.0, %v2972
    %v2974 = vrot.slane %v2971, 4
    %v2975 = vsel %vm366, 0.0, %v2974
    %v2976 = vmax.f32 %v2743, %v2797
    %v2978 = vunpack.c.l.s4 1983009808
    %v2979 = vunpack.c.0.s8 %v2978
    %v2980 = vperm.slane %v2976, %v2979
    %v2981 = vmax.f32 %v2753, %v2799
    %v2983 = vunpack.c.l.s4 1983009808
    %v2984 = vunpack.c.0.s8 %v2983
    %v2985 = vperm.slane %v2981, %v2984
    %v2986 = vrot.slane %v2985, 4
    %v2987 = vsel %vm366, %v2986, %v2980
    %v2988 = vrot.slane %v2980, 4
    %v2989 = vsel %vm366, %v2985, %v2988
    %v2991 = vunpack.c.l.s4 1934713408
    %v2992 = vunpack.c.0.s8 %v2991
    %v2993 = vperm.slane %v2987, %v2992
    %v2995 = vunpack.c.l.s4 1934713408
    %v2996 = vunpack.c.0.s8 %v2995
    %v2997 = vperm.slane %v2989, %v2996
    %v2998 = vrot.slane %v2993, 4
    %v2999 = vsel %vm366, 0.0, %v2998
    %v3000 = vrot.slane %v2997, 4
    %v3001 = vsel %vm366, 0.0, %v3000
    %v3002 = vmax.f32 %v2747, %v2801
    %v3004 = vunpack.c.l.s4 1983009808
    %v3005 = vunpack.c.0.s8 %v3004
    %v3006 = vperm.slane %v3002, %v3005
    %v3007 = vmax.f32 %v2755, %v2803
    %v3009 = vunpack.c.l.s4 1983009808
    %v3010 = vunpack.c.0.s8 %v3009
    %v3011 = vperm.slane %v3007, %v3010
    %v3012 = vrot.slane %v3011, 4
    %v3013 = vsel %vm366, %v3012, %v3006
    %v3014 = vrot.slane %v3006, 4
    %v3015 = vsel %vm366, %v3011, %v3014
    %v3017 = vunpack.c.l.s4 1934713408
    %v3018 = vunpack.c.0.s8 %v3017
    %v3019 = vperm.slane %v3013, %v3018
    %v3021 = vunpack.c.l.s4 1934713408
    %v3022 = vunpack.c.0.s8 %v3021
    %v3023 = vperm.slane %v3015, %v3022
    %v3024 = vrot.slane %v3019, 4
    %v3025 = vsel %vm366, 0.0, %v3024
    %v3026 = vrot.slane %v3023, 4
    %v3027 = vsel %vm366, 0.0, %v3026
    %3036 = vrot.lane.b32.xlu0 %v2843, 8
    %v3037 = vpop.permute.xlu0 %3036
    %3038 = vrot.lane.b32.xlu0 %v2869, 8
    %v3039 = vpop.permute.xlu0 %3038
    %3040 = vrot.lane.b32.xlu0 %v2895, 8
    %v3041 = vpop.permute.xlu0 %3040
    %3042 = vrot.lane.b32.xlu0 %v2921, 8
    %v3043 = vpop.permute.xlu0 %3042
    %3044 = vrot.lane.b32.xlu0 %v2947, 8
    %v3045 = vpop.permute.xlu0 %3044
    %3046 = vrot.lane.b32.xlu0 %v2973, 8
    %v3047 = vpop.permute.xlu0 %3046
    %3048 = vrot.lane.b32.xlu0 %v2999, 8
    %v3049 = vpop.permute.xlu0 %3048
    %3050 = vrot.lane.b32.xlu0 %v3025, 8
    %v3051 = vpop.permute.xlu0 %3050
    %3068 = vrot.lane.b32.xlu0 %v2841, 16
    %v3069 = vpop.permute.xlu0 %3068
    %3070 = vrot.lane.b32.xlu0 %v2867, 16
    %v3071 = vpop.permute.xlu0 %3070
    %3072 = vrot.lane.b32.xlu0 %v2893, 16
    %v3073 = vpop.permute.xlu0 %3072
    %3074 = vrot.lane.b32.xlu0 %v2919, 16
    %v3075 = vpop.permute.xlu0 %3074
    %3076 = vrot.lane.b32.xlu0 %v2945, 16
    %v3077 = vpop.permute.xlu0 %3076
    %3078 = vrot.lane.b32.xlu0 %v2971, 16
    %v3079 = vpop.permute.xlu0 %3078
    %3080 = vrot.lane.b32.xlu0 %v2997, 16
    %v3081 = vpop.permute.xlu0 %3080
    %3082 = vrot.lane.b32.xlu0 %v3023, 16
    %v3083 = vpop.permute.xlu0 %3082
    %3100 = vrot.lane.b32.xlu0 %v2845, 24
    %v3101 = vpop.permute.xlu0 %3100
    %3102 = vrot.lane.b32.xlu0 %v2871, 24
    %v3103 = vpop.permute.xlu0 %3102
    %3104 = vrot.lane.b32.xlu0 %v2897, 24
    %v3105 = vpop.permute.xlu0 %3104
    %3106 = vrot.lane.b32.xlu0 %v2923, 24
    %v3107 = vpop.permute.xlu0 %3106
    %3108 = vrot.lane.b32.xlu0 %v2949, 24
    %v3109 = vpop.permute.xlu0 %3108
    %3110 = vrot.lane.b32.xlu0 %v2975, 24
    %v3111 = vpop.permute.xlu0 %3110
    %3112 = vrot.lane.b32.xlu0 %v3001, 24
    %v3113 = vpop.permute.xlu0 %3112
    %3114 = vrot.lane.b32.xlu0 %v3027, 24
    %v3115 = vpop.permute.xlu0 %3114
    %v3124 = vsel %vm2254, %v2837, %v3037
    %v3125 = vsel %vm2254, %v2863, %v3039
    %v3126 = vsel %vm2254, %v2889, %v3041
    %v3127 = vsel %vm2254, %v2915, %v3043
    %v3128 = vsel %vm2254, %v2941, %v3045
    %v3129 = vsel %vm2254, %v2967, %v3047
    %v3130 = vsel %vm2254, %v2993, %v3049
    %v3131 = vsel %vm2254, %v3019, %v3051
    %v3132 = vsel %vm2271, %v3124, %v3069
    %v3133 = vsel %vm2271, %v3125, %v3071
    %v3134 = vsel %vm2271, %v3126, %v3073
    %v3135 = vsel %vm2271, %v3127, %v3075
    %v3136 = vsel %vm2271, %v3128, %v3077
    %v3137 = vsel %vm2271, %v3129, %v3079
    %v3138 = vsel %vm2271, %v3130, %v3081
    %v3139 = vsel %vm2271, %v3131, %v3083
    %v3140 = vsel %vm2288, %v3132, %v3101
    %v3141 = vsel %vm2288, %v3133, %v3103
    %v3142 = vsel %vm2288, %v3134, %v3105
    %v3143 = vsel %vm2288, %v3135, %v3107
    %v3144 = vsel %vm2288, %v3136, %v3109
    %v3145 = vsel %vm2288, %v3137, %v3111
    %v3146 = vsel %vm2288, %v3138, %v3113
    %v3147 = vsel %vm2288, %v3139, %v3115
    %v3156 = vrot.slane %v3140, 1
    %v3157 = vrot.slane %v3141, 1
    %v3158 = vrot.slane %v3142, 1
    %v3159 = vrot.slane %v3143, 1
    %v3160 = vrot.slane %v3144, 1
    %v3161 = vrot.slane %v3145, 1
    %v3162 = vrot.slane %v3146, 1
    %v3163 = vrot.slane %v3147, 1
    %v3172 = vmax.f32 %v3140, %v3156
    %v3173 = vmax.f32 %v3141, %v3157
    %v3174 = vmax.f32 %v3142, %v3158
    %v3175 = vmax.f32 %v3143, %v3159
    %v3176 = vmax.f32 %v3144, %v3160
    %v3177 = vmax.f32 %v3145, %v3161
    %v3178 = vmax.f32 %v3146, %v3162
    %v3179 = vmax.f32 %v3147, %v3163
    %vm3180 = vcmask 253952
    %3181 = vst.msk [vmem:[#allocation4] sm:$0x1] %vm3180, 0.0
    %3182 = vst.msk [vmem:[#allocation4 + $0x8] sm:$0x1] %vm3180, 0.0
    %3183 = vst.msk [vmem:[#allocation4 + $0x5] sm:$0x1] %vm3180, 0.0
    %3184 = vst.msk [vmem:[#allocation4 + $0xd] sm:$0x1] %vm3180, 0.0
    %v3193 = vrot.slane %v3173, 7
    %v3194 = vsel %vm2459, %v3193, %v3172
    %v3195 = vrot.slane %v3174, 6
    %v3196 = vsel %vm2462, %v3195, %v3194
    %v3197 = vrot.slane %v3175, 5
    %v3198 = vsel %vm2465, %v3197, %v3196
    %v3199 = vrot.slane %v3177, 7
    %v3200 = vsel %vm2459, %v3199, %v3176
    %v3201 = vrot.slane %v3178, 6
    %v3202 = vsel %vm2462, %v3201, %v3200
    %v3203 = vrot.slane %v3179, 5
    %v3204 = vsel %vm2465, %v3203, %v3202
    %vm3207 = vcmask 257024
    %3208 = vst.msk [vmem:[#allocation4 + $0x1] sm:$0xf] %vm3207, %v3198
    %3209 = vst.msk [vmem:[#allocation4 + $0x9] sm:$0xf] %vm3207, %v3204
    %v3210 = vld [vmem:[#allocation4] sm:$0xf]
    %v3211 = vld [vmem:[#allocation4 + $0x8] sm:$0xf]
    %v3212 = vld [vmem:[#allocation12] sm:$0xff]
    %v3213 = vld [vmem:[#allocation12 + $0x8] sm:$0xff]
    %v3214 = vld [vmem:[#allocation12 + $0x10] sm:$0xff]
    %v3215 = vld [vmem:[#allocation12 + $0x18] sm:$0xff]
    %v3216 = vld [vmem:[#allocation4 + $0x1] sm:$0xf]
    %v3217 = vld [vmem:[#allocation4 + $0x9] sm:$0xf]
    %s3218 = scalar_lea.vmem [#allocation12], 32
    %v3219 = vld [vmem:[%s3218] sm:$0xff]
    %v3220 = vld [vmem:[%s3218 + $0x8] sm:$0xff]
    %v3221 = vld [vmem:[%s3218 + $0x10] sm:$0xff]
    %v3222 = vld [vmem:[%s3218 + $0x18] sm:$0xff]
    %3225 = vst [vmem:[#allocation1] ss:$2 sm:$0xff] %v3216
    %s3226 = scalar_lea.vmem [#allocation1], 1
    %3227 = vst [vmem:[%s3226] ss:$2 sm:$0xff] %v3217
    %v3228 = vld.sshfl [vmem:[#allocation1] sm:$0xff pattern:$0x75316420]
    %v3229 = vsel %vm2305, %v3228, 0
    %3231 = vmatpush.msra.mxu0 0.0
    %3232 = vmatpush.msra.mxu0 0.0
    %3233 = vmatpush.msra.mxu0 0.0
    %3234 = vmatpush.msra.mxu0 0.0
    %3235 = vmatpush.msra.mxu0 0.0
    %3236 = vmatpush.msra.mxu0 0.0
    %3237 = vmatpush.msra.mxu0 0.0
    %3238 = vmatpush.msra.mxu0 0.0
    %3239 = vmatpush.msra.mxu0 0.0
    %3240 = vmatpush.msra.mxu0 0.0
    %3241 = vmatpush.msra.mxu0 0.0
    %3242 = vmatpush.msra.mxu0 0.0
    %3243 = vmatpush.msra.mxu0 %v3222
    %3244 = vmatpush.msra.mxu0 %v3221
    %3245 = vmatpush.msra.mxu0 %v3220
    %3246 = vmatpush.msra.mxu0 %v3219
    %3247 = vmatmul.f32.gmra.mxu0 %v3229
    %v3248 = vpop.f32.mrf.mxu0
    %v3249 = vadd.f32 0.0, %v3248
    %3250 = vdwg.mxu0
    %3253 = vst [vmem:[#allocation1] ss:$2 sm:$0xff] %v3210
    %s3254 = scalar_lea.vmem [#allocation1], 1
    %3255 = vst [vmem:[%s3254] ss:$2 sm:$0xff] %v3211
    %v3256 = vld.sshfl [vmem:[#allocation1] sm:$0xff pattern:$0x75316420]
    %v3257 = vsel %vm2305, %v3256, 0
    %3259 = vmatpush.msra.mxu0 0.0
    %3260 = vmatpush.msra.mxu0 0.0
    %3261 = vmatpush.msra.mxu0 0.0
    %3262 = vmatpush.msra.mxu0 0.0
    %3263 = vmatpush.msra.mxu0 0.0
    %3264 = vmatpush.msra.mxu0 0.0
    %3265 = vmatpush.msra.mxu0 0.0
    %3266 = vmatpush.msra.mxu0 0.0
    %3267 = vmatpush.msra.mxu0 0.0
    %3268 = vmatpush.msra.mxu0 0.0
    %3269 = vmatpush.msra.mxu0 0.0
    %3270 = vmatpush.msra.mxu0 0.0
    %3271 = vmatpush.msra.mxu0 %v3215
    %3272 = vmatpush.msra.mxu0 %v3214
    %3273 = vmatpush.msra.mxu0 %v3213
    %3274 = vmatpush.msra.mxu0 %v3212
    %3275 = vmatmul.f32.gmra.mxu0 %v3257
    %v3276 = vpop.f32.mrf.mxu0
    %v3277 = vadd.f32 %v3249, %v3276
    %3278 = vdwg.mxu0
    %v3279 = vld [vmem:[#allocation4 + $0x2] sm:$0xf]
    %v3280 = vld [vmem:[#allocation4 + $0xa] sm:$0xf]
    %s3281 = scalar_lea.vmem [#allocation12], 64
    %v3282 = vld [vmem:[%s3281] sm:$0xff]
    %v3283 = vld [vmem:[%s3281 + $0x8] sm:$0xff]
    %v3284 = vld [vmem:[%s3281 + $0x10] sm:$0xff]
    %v3285 = vld [vmem:[%s3281 + $0x18] sm:$0xff]
    %3288 = vst [vmem:[#allocation1] ss:$2 sm:$0xff] %v3279
    %s3289 = scalar_lea.vmem [#allocation1], 1
    %3290 = vst [vmem:[%s3289] ss:$2 sm:$0xff] %v3280
    %v3291 = vld.sshfl [vmem:[#allocation1] sm:$0xff pattern:$0x75316420]
    %v3292 = vsel %vm2305, %v3291, 0
    %3294 = vmatpush.msra.mxu0 0.0
    %3295 = vmatpush.msra.mxu0 0.0
    %3296 = vmatpush.msra.mxu0 0.0
    %3297 = vmatpush.msra.mxu0 0.0
    %3298 = vmatpush.msra.mxu0 0.0
    %3299 = vmatpush.msra.mxu0 0.0
    %3300 = vmatpush.msra.mxu0 0.0
    %3301 = vmatpush.msra.mxu0 0.0
    %3302 = vmatpush.msra.mxu0 0.0
    %3303 = vmatpush.msra.mxu0 0.0
    %3304 = vmatpush.msra.mxu0 0.0
    %3305 = vmatpush.msra.mxu0 0.0
    %3306 = vmatpush.msra.mxu0 %v3285
    %3307 = vmatpush.msra.mxu0 %v3284
    %3308 = vmatpush.msra.mxu0 %v3283
    %3309 = vmatpush.msra.mxu0 %v3282
    %3310 = vmatmul.f32.gmra.mxu0 %v3292
    %v3311 = vpop.f32.mrf.mxu0
    %v3312 = vadd.f32 0.0, %v3311
    %3313 = vdwg.mxu0
    %v3314 = vadd.f32 %v3277, %v3312
    %v3315 = vperm.slane %v102, 2
    %v3316 = vadd.f32 %v3314, %v3315
    %v3317 = vmax.f32 %v3316, 0.0
    %3319 = vrot.lane.b32.xlu0 %v3317, 112
    %v3320 = vpop.permute.xlu0 %3319
    %v3322 = vrot.slane %v3317, 4
    %v3323 = vsel %vm366, 0.0, %v3322
    %v3325 = vunpack.c.l.s4 1983009808
    %v3326 = vunpack.c.0.s8 %v3325
    %v3327 = vperm.slane %v3317, %v3326
    %v3329 = vunpack.c.l.s4 1983009808
    %v3330 = vunpack.c.0.s8 %v3329
    %v3331 = vperm.slane %v3323, %v3330
    %v3332 = vrot.slane %v3320, 4
    %v3333 = vsel %vm366, 0.0, %v3332
    %v3335 = vunpack.c.l.s4 1983009808
    %v3336 = vunpack.c.0.s8 %v3335
    %v3337 = vperm.slane %v3320, %v3336
    %v3339 = vunpack.c.l.s4 1983009808
    %v3340 = vunpack.c.0.s8 %v3339
    %v3341 = vperm.slane %v3333, %v3340
    %v3342 = vrot.slane %v3337, 4
    %v3343 = vsel %vm366, %v3342, %v3327
    %v3344 = vrot.slane %v3327, 4
    %v3345 = vsel %vm366, %v3337, %v3344
    %v3347 = vunpack.c.l.s4 1934713408
    %v3348 = vunpack.c.0.s8 %v3347
    %v3349 = vperm.slane %v3343, %v3348
    %v3351 = vunpack.c.l.s4 1934713408
    %v3352 = vunpack.c.0.s8 %v3351
    %v3353 = vperm.slane %v3345, %v3352
    %v3354 = vrot.slane %v3341, 4
    %v3355 = vsel %vm366, %v3354, %v3331
    %v3356 = vrot.slane %v3331, 4
    %v3357 = vsel %vm366, %v3341, %v3356
    %v3359 = vunpack.c.l.s4 1934713408
    %v3360 = vunpack.c.0.s8 %v3359
    %v3361 = vperm.slane %v3355, %v3360
    %v3363 = vunpack.c.l.s4 1934713408
    %v3364 = vunpack.c.0.s8 %v3363
    %v3365 = vperm.slane %v3357, %v3364
    %v3366 = vrot.slane %v3349, 4
    %v3367 = vsel %vm366, 0.0, %v3366
    %v3368 = vrot.slane %v3353, 4
    %v3369 = vsel %vm366, 0.0, %v3368
    %v3370 = vrot.slane %v3361, 4
    %v3371 = vsel %vm366, 0.0, %v3370
    %v3372 = vrot.slane %v3365, 4
    %v3373 = vsel %vm366, 0.0, %v3372
    %3382 = vrot.lane.b32.xlu0 %v3349, 120
    %v3383 = vpop.permute.xlu0 %3382
    %3384 = vrot.lane.b32.xlu0 %v3367, 120
    %v3385 = vpop.permute.xlu0 %3384
    %3386 = vrot.lane.b32.xlu0 %v3353, 120
    %v3387 = vpop.permute.xlu0 %3386
    %3388 = vrot.lane.b32.xlu0 %v3369, 120
    %v3389 = vpop.permute.xlu0 %3388
    %3390 = vrot.lane.b32.xlu0 %v3361, 120
    %v3391 = vpop.permute.xlu0 %3390
    %3392 = vrot.lane.b32.xlu0 %v3371, 120
    %v3393 = vpop.permute.xlu0 %3392
    %3394 = vrot.lane.b32.xlu0 %v3365, 120
    %v3395 = vpop.permute.xlu0 %3394
    %3396 = vrot.lane.b32.xlu0 %v3373, 120
    %v3397 = vpop.permute.xlu0 %3396
    %v3406 = vmax.f32 %v3349, %v3383
    %v3407 = vmax.f32 %v3367, %v3385
    %v3408 = vrot.slane %v3407, 4
    %v3409 = vsel %vm366, %v3408, %v3406
    %v3411 = vunpack.c.l.s4 1934713408
    %v3412 = vunpack.c.0.s8 %v3411
    %v3413 = vperm.slane %v3409, %v3412
    %v3414 = vrot.slane %v3413, 4
    %v3415 = vsel %vm366, 0.0, %v3414
    %v3416 = vmax.f32 %v3353, %v3387
    %v3417 = vmax.f32 %v3369, %v3389
    %v3418 = vrot.slane %v3417, 4
    %v3419 = vsel %vm366, %v3418, %v3416
    %v3421 = vunpack.c.l.s4 1934713408
    %v3422 = vunpack.c.0.s8 %v3421
    %v3423 = vperm.slane %v3419, %v3422
    %v3424 = vrot.slane %v3423, 4
    %v3425 = vsel %vm366, 0.0, %v3424
    %v3426 = vmax.f32 %v3361, %v3391
    %v3427 = vmax.f32 %v3371, %v3393
    %v3428 = vrot.slane %v3427, 4
    %v3429 = vsel %vm366, %v3428, %v3426
    %v3431 = vunpack.c.l.s4 1934713408
    %v3432 = vunpack.c.0.s8 %v3431
    %v3433 = vperm.slane %v3429, %v3432
    %v3434 = vrot.slane %v3433, 4
    %v3435 = vsel %vm366, 0.0, %v3434
    %v3436 = vmax.f32 %v3365, %v3395
    %v3437 = vmax.f32 %v3373, %v3397
    %v3438 = vrot.slane %v3437, 4
    %v3439 = vsel %vm366, %v3438, %v3436
    %v3441 = vunpack.c.l.s4 1934713408
    %v3442 = vunpack.c.0.s8 %v3441
    %v3443 = vperm.slane %v3439, %v3442
    %v3444 = vrot.slane %v3443, 4
    %v3445 = vsel %vm366, 0.0, %v3444
    %3450 = vrot.lane.b32.xlu0 %v3415, 8
    %v3451 = vpop.permute.xlu0 %3450
    %3452 = vrot.lane.b32.xlu0 %v3425, 8
    %v3453 = vpop.permute.xlu0 %3452
    %3454 = vrot.lane.b32.xlu0 %v3435, 8
    %v3455 = vpop.permute.xlu0 %3454
    %3456 = vrot.lane.b32.xlu0 %v3445, 8
    %v3457 = vpop.permute.xlu0 %3456
    %v3462 = vsel %vm2254, %v3413, %v3451
    %v3463 = vsel %vm2254, %v3423, %v3453
    %v3464 = vsel %vm2254, %v3433, %v3455
    %v3465 = vsel %vm2254, %v3443, %v3457
    %v3470 = vrot.slane %v3462, 1
    %v3471 = vrot.slane %v3463, 1
    %v3472 = vrot.slane %v3464, 1
    %v3473 = vrot.slane %v3465, 1
    %v3478 = vmax.f32 %v3462, %v3470
    %v3479 = vmax.f32 %v3463, %v3471
    %v3480 = vmax.f32 %v3464, %v3472
    %v3481 = vmax.f32 %v3465, %v3473
    %vm3482 = vcmask 122880
    %3483 = vst.msk [vmem:[#allocation5] sm:$0x1] %vm3482, 0.0
    %3484 = vst.msk [vmem:[#allocation5 + $0x4] sm:$0x1] %vm3482, 0.0
    %3485 = vst.msk [vmem:[#allocation5 + $0x3] sm:$0x1] %vm3482, 0.0
    %3486 = vst.msk [vmem:[#allocation5 + $0x7] sm:$0x1] %vm3482, 0.0
    %v3491 = vrot.slane %v3479, 7
    %v3492 = vsel %vm2459, %v3491, %v3478
    %v3493 = vrot.slane %v3481, 7
    %v3494 = vsel %vm2459, %v3493, %v3480
    %vm3497 = vcmask 123904
    %3498 = vst.msk [vmem:[#allocation5 + $0x1] sm:$0x3] %vm3497, %v3492
    %3499 = vst.msk [vmem:[#allocation5 + $0x5] sm:$0x3] %vm3497, %v3494
    %v3500 = vld [vmem:[#allocation5] sm:$0x3]
    %v3501 = vld [vmem:[#allocation5 + $0x4] sm:$0x3]
    %v3502 = vld [vmem:[#allocation14] sm:$0xff]
    %v3503 = vld [vmem:[#allocation14 + $0x8] sm:$0xff]
    %v3504 = vld [vmem:[#allocation5 + $0x1] sm:$0x3]
    %v3505 = vld [vmem:[#allocation5 + $0x5] sm:$0x3]
    %s3506 = scalar_lea.vmem [#allocation14], 16
    %v3507 = vld [vmem:[%s3506] sm:$0xff]
    %v3508 = vld [vmem:[%s3506 + $0x8] sm:$0xff]
    %3511 = vst [vmem:[#allocation1] ss:$4 sm:$0xff] %v3504
    %s3512 = scalar_lea.vmem [#allocation1], 1
    %3513 = vst [vmem:[%s3512] ss:$4 sm:$0xff] %v3505
    %v3514 = vld.sshfl [vmem:[#allocation1] sm:$0xff pattern:$0x73625140]
    %v3515 = vsel %vm2271, %v3514, 0
    %3517 = vmatpush.msra.mxu0 0.0
    %3518 = vmatpush.msra.mxu0 0.0
    %3519 = vmatpush.msra.mxu0 0.0
    %3520 = vmatpush.msra.mxu0 0.0
    %3521 = vmatpush.msra.mxu0 0.0
    %3522 = vmatpush.msra.mxu0 0.0
    %3523 = vmatpush.msra.mxu0 0.0
    %3524 = vmatpush.msra.mxu0 0.0
    %3525 = vmatpush.msra.mxu0 0.0
    %3526 = vmatpush.msra.mxu0 0.0
    %3527 = vmatpush.msra.mxu0 0.0
    %3528 = vmatpush.msra.mxu0 0.0
    %3529 = vmatpush.msra.mxu0 0.0
    %3530 = vmatpush.msra.mxu0 0.0
    %3531 = vmatpush.msra.mxu0 %v3508
    %3532 = vmatpush.msra.mxu0 %v3507
    %3533 = vmatmul.f32.gmra.mxu0 %v3515
    %v3534 = vpop.f32.mrf.mxu0
    %v3535 = vadd.f32 0.0, %v3534
    %3536 = vdwg.mxu0
    %3539 = vst [vmem:[#allocation1] ss:$4 sm:$0xff] %v3500
    %s3540 = scalar_lea.vmem [#allocation1], 1
    %3541 = vst [vmem:[%s3540] ss:$4 sm:$0xff] %v3501
    %v3542 = vld.sshfl [vmem:[#allocation1] sm:$0xff pattern:$0x73625140]
    %v3543 = vsel %vm2271, %v3542, 0
    %3545 = vmatpush.msra.mxu0 0.0
    %3546 = vmatpush.msra.mxu0 0.0
    %3547 = vmatpush.msra.mxu0 0.0
    %3548 = vmatpush.msra.mxu0 0.0
    %3549 = vmatpush.msra.mxu0 0.0
    %3550 = vmatpush.msra.mxu0 0.0
    %3551 = vmatpush.msra.mxu0 0.0
    %3552 = vmatpush.msra.mxu0 0.0
    %3553 = vmatpush.msra.mxu0 0.0
    %3554 = vmatpush.msra.mxu0 0.0
    %3555 = vmatpush.msra.mxu0 0.0
    %3556 = vmatpush.msra.mxu0 0.0
    %3557 = vmatpush.msra.mxu0 0.0
    %3558 = vmatpush.msra.mxu0 0.0
    %3559 = vmatpush.msra.mxu0 %v3503
    %3560 = vmatpush.msra.mxu0 %v3502
    %3561 = vmatmul.f32.gmra.mxu0 %v3543
    %v3562 = vpop.f32.mrf.mxu0
    %v3563 = vadd.f32 %v3535, %v3562
    %3564 = vdwg.mxu0
    %v3565 = vld [vmem:[#allocation5 + $0x2] sm:$0x3]
    %v3566 = vld [vmem:[#allocation5 + $0x6] sm:$0x3]
    %s3567 = scalar_lea.vmem [#allocation14], 32
    %v3568 = vld [vmem:[%s3567] sm:$0xff]
    %v3569 = vld [vmem:[%s3567 + $0x8] sm:$0xff]
    %3572 = vst [vmem:[#allocation1] ss:$4 sm:$0xff] %v3565
    %s3573 = scalar_lea.vmem [#allocation1], 1
    %3574 = vst [vmem:[%s3573] ss:$4 sm:$0xff] %v3566
    %v3575 = vld.sshfl [vmem:[#allocation1] sm:$0xff pattern:$0x73625140]
    %v3576 = vsel %vm2271, %v3575, 0
    %3578 = vmatpush.msra.mxu0 0.0
    %3579 = vmatpush.msra.mxu0 0.0
    %3580 = vmatpush.msra.mxu0 0.0
    %3581 = vmatpush.msra.mxu0 0.0
    %3582 = vmatpush.msra.mxu0 0.0
    %3583 = vmatpush.msra.mxu0 0.0
    %3584 = vmatpush.msra.mxu0 0.0
    %3585 = vmatpush.msra.mxu0 0.0
    %3586 = vmatpush.msra.mxu0 0.0
    %3587 = vmatpush.msra.mxu0 0.0
    %3588 = vmatpush.msra.mxu0 0.0
    %3589 = vmatpush.msra.mxu0 0.0
    %3590 = vmatpush.msra.mxu0 0.0
    %3591 = vmatpush.msra.mxu0 0.0
    %3592 = vmatpush.msra.mxu0 %v3569
    %3593 = vmatpush.msra.mxu0 %v3568
    %3594 = vmatmul.f32.gmra.mxu0 %v3576
    %v3595 = vpop.f32.mrf.mxu0
    %v3596 = vadd.f32 0.0, %v3595
    %3597 = vdwg.mxu0
    %v3598 = vadd.f32 %v3563, %v3596
    %v3599 = vperm.slane %v102, 3
    %v3600 = vadd.f32 %v3598, %v3599
    %v3601 = vmax.f32 %v3600, 0.0
    %v3603 = vrot.slane %v3601, 1
    %v3604 = vrot.slane %v3601, 2
    %v3605 = vrot.slane %v3601, 3
    %3609 = vrot.lane.b32.xlu0 %v3601, 120
    %v3610 = vpop.permute.xlu0 %3609
    %3611 = vrot.lane.b32.xlu0 %v3603, 120
    %v3612 = vpop.permute.xlu0 %3611
    %3613 = vrot.lane.b32.xlu0 %v3604, 120
    %v3614 = vpop.permute.xlu0 %3613
    %3615 = vrot.lane.b32.xlu0 %v3605, 120
    %v3616 = vpop.permute.xlu0 %3615
    %v3621 = vmax.f32 %v3601, %v3610
    %v3622 = vmax.f32 %v3603, %v3612
    %v3623 = vmax.f32 %v3604, %v3614
    %v3624 = vmax.f32 %v3605, %v3616
    %v3625 = vmax.f32 %v3621, %v3622
    %v3626 = vmax.f32 %v3623, %v3624
    %vm3627 = vcmask 57344
    %3628 = vst.msk [vmem:[#allocation15] sm:$0x1] %vm3627, %v3625
    %3629 = vst.msk [vmem:[#allocation15 + $0x1] sm:$0x1] %vm3627, %v3626
    // Predicated region
    $region46: #{tpu_custom_call.1} parent=1 // pred_check
      _
    $region47: #{tpu_custom_call.1} parent=1 // pred_check_branch
      %3631 = sbr.rel (0) target = $region49
    $region48: #{tpu_custom_call.1} parent=1 // pred_region
      %3633 = vsyncadd [#allocation8], 0
      %s3634 = sshll.u32 [#allocation15], 4
      %s3635 = int_to_ptr.vmem [resolvable:$true] %s3634
      %s3636 = sshll.u32 %s6, 4
      %s3637 = int_to_ptr.hbm [resolvable:$true] %s3636
      %3642 = dma.vmem_to_hbm [thread:$0]  %s3635, 32, %s3637, [#allocation8], 16, 16, 1
    $region49: #{tpu_custom_call.1} parent=1 // pred_fallthru
      _
    // Predicated region
    $region50: #{tpu_custom_call.1} parent=1 // pred_check
      _
    $region51: #{tpu_custom_call.1} parent=1 // pred_check_branch
      %3644 = sbr.rel (0) target = $region53
    $region52: #{tpu_custom_call.1} parent=1 // pred_region
      %3646 = dma.done [#allocation8], 32
    $region53: #{tpu_custom_call.1} parent=1 // pred_fallthru
      _
    %3647 = vsyncpa [#allocation7], 1
    %3648 = vsyncpa [#allocation10], 1
    %3649 = vsyncpa [#allocation13], 1
    %3650 = vsyncpa [#allocation8], 1

</llo_original>
